<compile_context>
chip_gen: v7x
topology: tpu7x:2x2x1
jax: 0.10.0
libtpu: 0.0.40
codegen_flags: <defaults>
</compile_context>

<pallas_src>
import numpy as np

import jax
import jax.numpy as jnp
from jax import lax
from jax.experimental import pallas as pl
from jax.experimental.pallas import tpu as pltpu


_LANES = 128          # padded feature width for every stage
_BATCH_BLOCK = 8      # images per grid step (grid stays >= 2 for v7x's two TCs)
_KH = 5               # LeNet 5x5 kernels


# ---------------------------------------------------------------------------
# Fused kernel: conv1 -> relu -> pool -> conv2 -> relu -> pool -> fc1/fc2/fc3
# ---------------------------------------------------------------------------
def _lenet_kernel(x_ref, cw1_ref, cb1_ref, sel1_ref,
                  cw2_ref, cb2_ref, sel2_ref,
                  fw1_ref, fb1_ref, fw2_ref, fb2_ref, fw3_ref, fb3_ref,
                  o_ref, h1_ref, h2_ref):
    """One block of B images, entirely resident in VMEM.

    x_ref   : (B*32, 96)        bf16  input slab, rows = (image, h), cols = (w, cin)
    cw1_ref : (5, 96, 256)      bf16  banded conv1 weights; lanes = [even|odd] width
                                      phase, each phase 84 real cols padded to 128
    cb1_ref : (1, 128)          f32   conv1 bias tiled over (w, cout), zero-padded
    sel1_ref: (2, B*14, B*32-4) bf16  0/1 selection (height-pool even/odd rows +
                                      drop image-boundary rows); out rows = (b, h)
    cw2_ref : (5, 128, 256)     bf16  banded conv2 weights (80 real cols / phase)
    cb2_ref : (1, 128)          f32
    sel2_ref: (2, 5*B, B*14-4)  bf16  out rows ordered (h, b) so fc1 takes
                                      contiguous (B, 128) slices per h
    fw1_ref : (5, 128, 128)     bf16  fc1 as one 128x128 block per conv2 row h
    fb1/2/3 : (1, 128)          f32
    fw2/fw3 : (128, 128)        bf16
    o_ref   : (B, 128)          f32   logits (cols 10..127 are padding)
    h1_ref  : (B*14, 128)       bf16  VMEM scratch: pooled conv1 slab
    h2_ref  : (5*B, 128)        bf16  VMEM scratch: pooled conv2 slab
    """
    batch = o_ref.shape[0]

    def conv_relu_pool(src_ref, w_ref, sel_ref, bias_ref, dst_ref):
        kh = w_ref.shape[0]
        rows = src_ref.shape[0] - (kh - 1)
        # KH banded matmuls over the whole batched slab: large M, N = 256.
        acc = jnp.dot(src_ref[pl.ds(0, rows), :], w_ref[0],
                      preferred_element_type=jnp.float32)
        for i in range(1, kh):
            acc = acc + jnp.dot(src_ref[pl.ds(i, rows), :], w_ref[i],
                                preferred_element_type=jnp.float32)
        # Width max-pool: even phase = lanes [0,128), odd phase = lanes [128,256).
        z = jnp.maximum(acc[:, :_LANES], acc[:, _LANES:]).astype(jnp.bfloat16)
        # Height max-pool + drop rows whose conv window crossed an image boundary:
        # two exact 0/1 selection matmuls (bf16 MXU path, f32 accumulate).
        pooled = jnp.maximum(
            jnp.dot(sel_ref[0], z, preferred_element_type=jnp.float32),
            jnp.dot(sel_ref[1], z, preferred_element_type=jnp.float32))
        # Per-channel bias + ReLU commute with max-pool -> hoisting is exact.
        dst_ref[...] = jnp.maximum(pooled + bias_ref[...], 0.0).astype(dst_ref.dtype)

    conv_relu_pool(x_ref, cw1_ref, sel1_ref, cb1_ref, h1_ref)    # -> (B*14, 128)
    conv_relu_pool(h1_ref, cw2_ref, sel2_ref, cb2_ref, h2_ref)   # -> (5*B, 128)

    # fc1: contract directly over the (h, 128) conv2 layout -- no flatten needed.
    acc = jnp.dot(h2_ref[pl.ds(0, batch), :], fw1_ref[0],
                  preferred_element_type=jnp.float32)
    for h in range(1, fw1_ref.shape[0]):
        acc = acc + jnp.dot(h2_ref[pl.ds(h * batch, batch), :], fw1_ref[h],
                            preferred_element_type=jnp.float32)
    a = jnp.maximum(acc + fb1_ref[...], 0.0).astype(jnp.bfloat16)
    a = jnp.maximum(jnp.dot(a, fw2_ref[...], preferred_element_type=jnp.float32)
                    + fb2_ref[...], 0.0).astype(jnp.bfloat16)
    o_ref[...] = (jnp.dot(a, fw3_ref[...], preferred_element_type=jnp.float32)
                  + fb3_ref[...])


# ---------------------------------------------------------------------------
# Parameters + one-time host-side preprocessing
# ---------------------------------------------------------------------------
def init_params(key):
    ks = jax.random.split(key, 10)

    def u(k, shape, fan_in):
        bound = 1.0 / (fan_in ** 0.5)
        return jax.random.uniform(k, shape, jnp.float32, -bound, bound)

    return {
        "conv1_w": u(ks[0], (6, 3, 5, 5), 3 * 25),
        "conv1_b": u(ks[1], (6,), 3 * 25),
        "conv2_w": u(ks[2], (16, 6, 5, 5), 6 * 25),
        "conv2_b": u(ks[3], (16,), 6 * 25),
        "fc1_w": u(ks[4], (120, 16 * 5 * 5), 16 * 5 * 5),
        "fc1_b": u(ks[5], (120,), 16 * 5 * 5),
        "fc2_w": u(ks[6], (84, 120), 120),
        "fc2_b": u(ks[7], (84,), 120),
        "fc3_w": u(ks[8], (10, 84), 84),
        "fc3_b": u(ks[9], (10,), 84),
    }


def _banded_conv_weight(w, w_in, k_pad):
    """Torch (Cout,Cin,KH,KW) -> (KH, k_pad, 256) merged even/odd banded weights.

    Input slab cols: (w, cin) at wq*cin + ci.  Output lanes: phase*128 + wp*cout + co,
    phase 0 -> even output columns (wo = 2*wp), phase 1 -> odd (wo = 2*wp + 1).
    """
    cout, cin, kh, kw = w.shape
    wh = (w_in - kw + 1) // 2
    band = np.zeros((kh, k_pad, 2 * _LANES), np.float32)
    for parity in (0, 1):
        for i in range(kh):
            for wp in range(wh):
                wo = 2 * wp + parity
                for j in range(kw):
                    wq = wo + j
                    band[i, wq * cin:(wq + 1) * cin,
                         parity * _LANES + wp * cout:
                         parity * _LANES + (wp + 1) * cout] = w[:, :, i, j].T
    return band


def _conv_bias_row(b, wh):
    row = np.zeros((1, _LANES), np.float32)
    row[0, :wh * b.shape[0]] = np.tile(b, wh)
    return row


def _pool_select(batch, h_in, kh, order):
    """0/1 matrices: height 2x max-pool + extraction of valid (in-image) conv rows.

    Conv acc row r = conv output at slab rows r..r+kh-1; valid rows for image b are
    r = b*h_in + ho, ho in [0, h_in-kh].  Output row ordering:
      'b_major': row = b*h_half + hp   (feeds the next conv slab)
      'h_major': row = hp*batch + b    (feeds fc1's per-h contiguous slices)
    """
    h_half = (h_in - kh + 1) // 2
    k = batch * h_in - (kh - 1)
    sel = np.zeros((2, batch * h_half, k), np.float32)
    for b in range(batch):
        for hp in range(h_half):
            row = b * h_half + hp if order == "b_major" else hp * batch + b
            sel[0, row, b * h_in + 2 * hp] = 1.0
            sel[1, row, b * h_in + 2 * hp + 1] = 1.0
    return sel


def prepare_params(params, batch_block=_BATCH_BLOCK):
    """Host-side, one-time: banded/merged conv weights, tiled biases, selection
    matrices, and fc weights re-blocked for the (h, 128) conv2 layout."""
    p = {k: np.asarray(v) for k, v in params.items()}
    prep = {
        "cw1": jnp.asarray(_banded_conv_weight(p["conv1_w"], 32, 96), jnp.bfloat16),
        "cb1": jnp.asarray(_conv_bias_row(p["conv1_b"], 14), jnp.float32),
        "sel1": jnp.asarray(_pool_select(batch_block, 32, _KH, "b_major"), jnp.bfloat16),
        "cw2": jnp.asarray(_banded_conv_weight(p["conv2_w"], 14, _LANES), jnp.bfloat16),
        "cb2": jnp.asarray(_conv_bias_row(p["conv2_b"], 5), jnp.float32),
        "sel2": jnp.asarray(_pool_select(batch_block, 14, _KH, "h_major"), jnp.bfloat16),
    }
    # fc1: torch flattens NCHW as idx = c*25 + h*5 + w; our conv2 slab row h has
    # lanes (w, c) at wp*16 + co -> one 128x128 block per h.
    fw1 = np.zeros((5, _LANES, _LANES), np.float32)
    for h in range(5):
        for wp in range(5):
            for co in range(16):
                fw1[h, wp * 16 + co, :120] = p["fc1_w"][:, co * 25 + h * 5 + wp]
    fw2 = np.zeros((_LANES, _LANES), np.float32)
    fw2[:120, :84] = p["fc2_w"].T
    fw3 = np.zeros((_LANES, _LANES), np.float32)
    fw3[:84, :10] = p["fc3_w"].T
    prep["fw1"] = jnp.asarray(fw1, jnp.bfloat16)
    prep["fw2"] = jnp.asarray(fw2, jnp.bfloat16)
    prep["fw3"] = jnp.asarray(fw3, jnp.bfloat16)
    for name, b in (("fb1", p["fc1_b"]), ("fb2", p["fc2_b"]), ("fb3", p["fc3_b"])):
        row = np.zeros((1, _LANES), np.float32)
        row[0, :b.shape[0]] = b
        prep[name] = jnp.asarray(row, jnp.float32)
    return prep


# ---------------------------------------------------------------------------
# Forward pass (single fused Pallas call) and pure-JAX reference
# ---------------------------------------------------------------------------
@jax.jit
def cnn_forward(prep, x):
    """Matches CNN.forward(). x: (N, 3, 32, 32) f32 NCHW -> (N, 10) f32 logits."""
    n, c, h, w = x.shape
    b = _BATCH_BLOCK
    # NCHW -> (rows=(image, h), cols=(w, cin)) bf16 slab; same jit as the kernel so
    # XLA fuses the transpose + cast into one relayout before the pallas_call.
    xr = jnp.transpose(x, (0, 2, 3, 1)).astype(jnp.bfloat16).reshape(n, h, w * c)
    n_pad = ((n + b - 1) // b) * b
    if n_pad != n:
        xr = jnp.pad(xr, ((0, n_pad - n), (0, 0), (0, 0)))
    x_slab = xr.reshape(n_pad * h, w * c)

    def resident(a):
        return pl.BlockSpec(a.shape, lambda i: (0,) * a.ndim)

    out = pl.pallas_call(
        _lenet_kernel,
        out_shape=jax.ShapeDtypeStruct((n_pad, _LANES), jnp.float32),
        grid=(n_pad // b,),
        in_specs=[
            pl.BlockSpec((b * h, w * c), lambda i: (i, 0)),   # B images per step
            resident(prep["cw1"]), resident(prep["cb1"]), resident(prep["sel1"]),
            resident(prep["cw2"]), resident(prep["cb2"]), resident(prep["sel2"]),
            resident(prep["fw1"]), resident(prep["fb1"]),
            resident(prep["fw2"]), resident(prep["fb2"]),
            resident(prep["fw3"]), resident(prep["fb3"]),
        ],
        out_specs=pl.BlockSpec((b, _LANES), lambda i: (i, 0)),
        scratch_shapes=[pltpu.VMEM((b * 14, _LANES), jnp.bfloat16),
                        pltpu.VMEM((5 * b, _LANES), jnp.bfloat16)],
        compiler_params=pltpu.CompilerParams(
            dimension_semantics=("parallel",)),
    )(x_slab, prep["cw1"], prep["cb1"], prep["sel1"],
      prep["cw2"], prep["cb2"], prep["sel2"],
      prep["fw1"], prep["fb1"], prep["fw2"], prep["fb2"],
      prep["fw3"], prep["fb3"])
    return out[:n, :10]


def cnn_reference(params, x):
    """Pure-JAX f32 reference for correctness."""
    hi = lax.Precision.HIGHEST

    def conv(x, w, b):
        y = lax.conv_general_dilated(
            x, w, (1, 1), "VALID",
            dimension_numbers=("NCHW", "OIHW", "NCHW"), precision=hi)
        return y + b.reshape(1, -1, 1, 1)

    def pool(x):
        return lax.reduce_window(x, -jnp.inf, lax.max,
                                 (1, 1, 2, 2), (1, 1, 2, 2), "VALID")

    x = pool(jax.nn.relu(conv(x, params["conv1_w"], params["conv1_b"])))
    x = pool(jax.nn.relu(conv(x, params["conv2_w"], params["conv2_b"])))
    x = x.reshape(x.shape[0], -1)
    x = jax.nn.relu(jnp.dot(x, params["fc1_w"].T, precision=hi) + params["fc1_b"])
    x = jax.nn.relu(jnp.dot(x, params["fc2_w"].T, precision=hi) + params["fc2_b"])
    return jnp.dot(x, params["fc3_w"].T, precision=hi) + params["fc3_b"]


if __name__ == "__main__":
    key = jax.random.PRNGKey(0)
    pkey, xkey = jax.random.split(key)
    params = init_params(pkey)
    prep = prepare_params(params)

    # CIFAR-shaped input (the 16*5*5 flatten in forward() requires 3x32x32).
    # N=16 -> 2 grid steps of 8 images (keeps both v7x TensorCores busy).
    x = jax.random.normal(xkey, (16, 3, 32, 32), dtype=jnp.float32)

    out = jax.block_until_ready(cnn_forward(prep, x))
    assert out.shape == (16, 10), out.shape

    ref = jax.block_until_ready(cnn_reference(params, x))
    max_err = float(jnp.max(jnp.abs(out - ref)))
    # bf16 weights/activations at the MXU (f32 accumulation) -> loose-ish tolerance.
    assert max_err < 5e-2, f"max abs error vs reference: {max_err}"

    print("KERNEL_OK")
</pallas_src>

<mosaic_0001>
module attributes {stable_mosaic.version = 11 : i64} {
  func.func @_lenet_kernel(%arg0: i32, %arg1: memref<256x96xbf16, #tpu.memory_space<vmem>>, %arg2: memref<5x96x256xbf16, #tpu.memory_space<vmem>>, %arg3: memref<1x128xf32, #tpu.memory_space<vmem>>, %arg4: memref<2x112x252xbf16, #tpu.memory_space<vmem>>, %arg5: memref<5x128x256xbf16, #tpu.memory_space<vmem>>, %arg6: memref<1x128xf32, #tpu.memory_space<vmem>>, %arg7: memref<2x40x108xbf16, #tpu.memory_space<vmem>>, %arg8: memref<5x128x128xbf16, #tpu.memory_space<vmem>>, %arg9: memref<1x128xf32, #tpu.memory_space<vmem>>, %arg10: memref<128x128xbf16, #tpu.memory_space<vmem>>, %arg11: memref<1x128xf32, #tpu.memory_space<vmem>>, %arg12: memref<128x128xbf16, #tpu.memory_space<vmem>>, %arg13: memref<1x128xf32, #tpu.memory_space<vmem>>, %arg14: memref<8x128xf32, #tpu.memory_space<vmem>>, %arg15: memref<112x128xbf16, #tpu.memory_space<vmem>>, %arg16: memref<40x128xbf16, #tpu.memory_space<vmem>>) attributes {dimension_semantics = [#tpu.dimension_semantics<parallel>], iteration_bounds = array<i64: 2>, scalar_prefetch = 0 : i64, scratch_operands = 2 : i64, tpu.core_type = #tpu.core_type<tc>, window_params = [{transform_indices = @transform_0, window_bounds = array<i64: 256, 96>}, {pipeline_mode = #tpu.pipeline_mode<synchronous>, transform_indices = @transform_1, window_bounds = array<i64: 5, 96, 256>}, {pipeline_mode = #tpu.pipeline_mode<synchronous>, transform_indices = @transform_2, window_bounds = array<i64: 1, 128>}, {pipeline_mode = #tpu.pipeline_mode<synchronous>, transform_indices = @transform_3, window_bounds = array<i64: 2, 112, 252>}, {pipeline_mode = #tpu.pipeline_mode<synchronous>, transform_indices = @transform_4, window_bounds = array<i64: 5, 128, 256>}, {pipeline_mode = #tpu.pipeline_mode<synchronous>, transform_indices = @transform_5, window_bounds = array<i64: 1, 128>}, {pipeline_mode = #tpu.pipeline_mode<synchronous>, transform_indices = @transform_6, window_bounds = array<i64: 2, 40, 108>}, {pipeline_mode = #tpu.pipeline_mode<synchronous>, transform_indices = @transform_7, window_bounds = array<i64: 5, 128, 128>}, {pipeline_mode = #tpu.pipeline_mode<synchronous>, transform_indices = @transform_8, window_bounds = array<i64: 1, 128>}, {pipeline_mode = #tpu.pipeline_mode<synchronous>, transform_indices = @transform_9, window_bounds = array<i64: 128, 128>}, {pipeline_mode = #tpu.pipeline_mode<synchronous>, transform_indices = @transform_10, window_bounds = array<i64: 1, 128>}, {pipeline_mode = #tpu.pipeline_mode<synchronous>, transform_indices = @transform_11, window_bounds = array<i64: 128, 128>}, {pipeline_mode = #tpu.pipeline_mode<synchronous>, transform_indices = @transform_12, window_bounds = array<i64: 1, 128>}, {transform_indices = @transform_13, window_bounds = array<i64: 8, 128>}]} {
    %c0 = arith.constant 0 : index
    %c0_0 = arith.constant 0 : index
    %0 = vector.load %arg1[%c0, %c0_0] : memref<256x96xbf16, #tpu.memory_space<vmem>>, vector<252x96xbf16>
    %c0_1 = arith.constant 0 : index
    %c0_2 = arith.constant 0 : index
    %c0_3 = arith.constant 0 : index
    %1 = vector.load %arg2[%c0_1, %c0_2, %c0_3] : memref<5x96x256xbf16, #tpu.memory_space<vmem>>, vector<1x96x256xbf16>
    %2 = vector.shape_cast %1 : vector<1x96x256xbf16> to vector<96x256xbf16>
    %cst = arith.constant dense<0.000000e+00> : vector<252x256xf32>
    %3 = tpu.matmul %0, %2, %cst {dimension_numbers = #tpu.dot_dimension_numbers<[1], [0], [0], [1], [0, 0, 1, 1], [], []>} : vector<252x96xbf16>, vector<96x256xbf16>, vector<252x256xf32> -> vector<252x256xf32>
    %c1 = arith.constant 1 : index
    %c0_4 = arith.constant 0 : index
    %4 = vector.load %arg1[%c1, %c0_4] : memref<256x96xbf16, #tpu.memory_space<vmem>>, vector<252x96xbf16>
    %c1_5 = arith.constant 1 : index
    %c0_6 = arith.constant 0 : index
    %c0_7 = arith.constant 0 : index
    %5 = vector.load %arg2[%c1_5, %c0_6, %c0_7] : memref<5x96x256xbf16, #tpu.memory_space<vmem>>, vector<1x96x256xbf16>
    %6 = vector.shape_cast %5 : vector<1x96x256xbf16> to vector<96x256xbf16>
    %cst_8 = arith.constant dense<0.000000e+00> : vector<252x256xf32>
    %7 = tpu.matmul %4, %6, %cst_8 {dimension_numbers = #tpu.dot_dimension_numbers<[1], [0], [0], [1], [0, 0, 1, 1], [], []>} : vector<252x96xbf16>, vector<96x256xbf16>, vector<252x256xf32> -> vector<252x256xf32>
    %8 = arith.addf %3, %7 : vector<252x256xf32>
    %c2 = arith.constant 2 : index
    %c0_9 = arith.constant 0 : index
    %9 = vector.load %arg1[%c2, %c0_9] : memref<256x96xbf16, #tpu.memory_space<vmem>>, vector<252x96xbf16>
    %c2_10 = arith.constant 2 : index
    %c0_11 = arith.constant 0 : index
    %c0_12 = arith.constant 0 : index
    %10 = vector.load %arg2[%c2_10, %c0_11, %c0_12] : memref<5x96x256xbf16, #tpu.memory_space<vmem>>, vector<1x96x256xbf16>
    %11 = vector.shape_cast %10 : vector<1x96x256xbf16> to vector<96x256xbf16>
    %cst_13 = arith.constant dense<0.000000e+00> : vector<252x256xf32>
    %12 = tpu.matmul %9, %11, %cst_13 {dimension_numbers = #tpu.dot_dimension_numbers<[1], [0], [0], [1], [0, 0, 1, 1], [], []>} : vector<252x96xbf16>, vector<96x256xbf16>, vector<252x256xf32> -> vector<252x256xf32>
    %13 = arith.addf %8, %12 : vector<252x256xf32>
    %c3 = arith.constant 3 : index
    %c0_14 = arith.constant 0 : index
    %14 = vector.load %arg1[%c3, %c0_14] : memref<256x96xbf16, #tpu.memory_space<vmem>>, vector<252x96xbf16>
    %c3_15 = arith.constant 3 : index
    %c0_16 = arith.constant 0 : index
    %c0_17 = arith.constant 0 : index
    %15 = vector.load %arg2[%c3_15, %c0_16, %c0_17] : memref<5x96x256xbf16, #tpu.memory_space<vmem>>, vector<1x96x256xbf16>
    %16 = vector.shape_cast %15 : vector<1x96x256xbf16> to vector<96x256xbf16>
    %cst_18 = arith.constant dense<0.000000e+00> : vector<252x256xf32>
    %17 = tpu.matmul %14, %16, %cst_18 {dimension_numbers = #tpu.dot_dimension_numbers<[1], [0], [0], [1], [0, 0, 1, 1], [], []>} : vector<252x96xbf16>, vector<96x256xbf16>, vector<252x256xf32> -> vector<252x256xf32>
    %18 = arith.addf %13, %17 : vector<252x256xf32>
    %c4 = arith.constant 4 : index
    %c0_19 = arith.constant 0 : index
    %19 = vector.load %arg1[%c4, %c0_19] : memref<256x96xbf16, #tpu.memory_space<vmem>>, vector<252x96xbf16>
    %c4_20 = arith.constant 4 : index
    %c0_21 = arith.constant 0 : index
    %c0_22 = arith.constant 0 : index
    %20 = vector.load %arg2[%c4_20, %c0_21, %c0_22] : memref<5x96x256xbf16, #tpu.memory_space<vmem>>, vector<1x96x256xbf16>
    %21 = vector.shape_cast %20 : vector<1x96x256xbf16> to vector<96x256xbf16>
    %cst_23 = arith.constant dense<0.000000e+00> : vector<252x256xf32>
    %22 = tpu.matmul %19, %21, %cst_23 {dimension_numbers = #tpu.dot_dimension_numbers<[1], [0], [0], [1], [0, 0, 1, 1], [], []>} : vector<252x96xbf16>, vector<96x256xbf16>, vector<252x256xf32> -> vector<252x256xf32>
    %23 = arith.addf %18, %22 : vector<252x256xf32>
    %24 = vector.extract_strided_slice %23 {offsets = [0, 0], sizes = [252, 128], strides = [1, 1]} : vector<252x256xf32> to vector<252x128xf32>
    %25 = vector.extract_strided_slice %23 {offsets = [0, 128], sizes = [252, 128], strides = [1, 1]} : vector<252x256xf32> to vector<252x128xf32>
    %26 = arith.maximumf %24, %25 : vector<252x128xf32>
    %27 = arith.truncf %26 : vector<252x128xf32> to vector<252x128xbf16>
    %c0_24 = arith.constant 0 : index
    %c0_25 = arith.constant 0 : index
    %c0_26 = arith.constant 0 : index
    %28 = vector.load %arg4[%c0_24, %c0_25, %c0_26] : memref<2x112x252xbf16, #tpu.memory_space<vmem>>, vector<1x112x252xbf16>
    %29 = vector.shape_cast %28 : vector<1x112x252xbf16> to vector<112x252xbf16>
    %cst_27 = arith.constant dense<0.000000e+00> : vector<112x128xf32>
    %30 = tpu.matmul %29, %27, %cst_27 {dimension_numbers = #tpu.dot_dimension_numbers<[1], [0], [0], [1], [0, 0, 1, 1], [], []>} : vector<112x252xbf16>, vector<252x128xbf16>, vector<112x128xf32> -> vector<112x128xf32>
    %c1_28 = arith.constant 1 : index
    %c0_29 = arith.constant 0 : index
    %c0_30 = arith.constant 0 : index
    %31 = vector.load %arg4[%c1_28, %c0_29, %c0_30] : memref<2x112x252xbf16, #tpu.memory_space<vmem>>, vector<1x112x252xbf16>
    %32 = vector.shape_cast %31 : vector<1x112x252xbf16> to vector<112x252xbf16>
    %cst_31 = arith.constant dense<0.000000e+00> : vector<112x128xf32>
    %33 = tpu.matmul %32, %27, %cst_31 {dimension_numbers = #tpu.dot_dimension_numbers<[1], [0], [0], [1], [0, 0, 1, 1], [], []>} : vector<112x252xbf16>, vector<252x128xbf16>, vector<112x128xf32> -> vector<112x128xf32>
    %34 = arith.maximumf %30, %33 : vector<112x128xf32>
    %c0_32 = arith.constant 0 : index
    %c0_33 = arith.constant 0 : index
    %35 = vector.load %arg3[%c0_32, %c0_33] : memref<1x128xf32, #tpu.memory_space<vmem>>, vector<1x128xf32>
    %36 = vector.broadcast %35 : vector<1x128xf32> to vector<112x128xf32>
    %37 = arith.addf %34, %36 : vector<112x128xf32>
    %cst_34 = arith.constant 0.000000e+00 : f32
    %38 = vector.broadcast %cst_34 : f32 to vector<112x128xf32>
    %39 = arith.maximumf %37, %38 : vector<112x128xf32>
    %40 = arith.truncf %39 : vector<112x128xf32> to vector<112x128xbf16>
    %c0_35 = arith.constant 0 : index
    %c0_36 = arith.constant 0 : index
    %41 = vector.load %arg15[%c0_35, %c0_36] : memref<112x128xbf16, #tpu.memory_space<vmem>>, vector<112x128xbf16>
    tpu.vector_store %arg15[%c0_35, %c0_36], %40 {strides = array<i32>} : memref<112x128xbf16, #tpu.memory_space<vmem>>, vector<112x128xbf16>,
    %c0_37 = arith.constant 0 : index
    %c0_38 = arith.constant 0 : index
    %42 = vector.load %arg15[%c0_37, %c0_38] : memref<112x128xbf16, #tpu.memory_space<vmem>>, vector<108x128xbf16>
    %c0_39 = arith.constant 0 : index
    %c0_40 = arith.constant 0 : index
    %c0_41 = arith.constant 0 : index
    %43 = vector.load %arg5[%c0_39, %c0_40, %c0_41] : memref<5x128x256xbf16, #tpu.memory_space<vmem>>, vector<1x128x256xbf16>
    %44 = vector.shape_cast %43 : vector<1x128x256xbf16> to vector<128x256xbf16>
    %cst_42 = arith.constant dense<0.000000e+00> : vector<108x256xf32>
    %45 = tpu.matmul %42, %44, %cst_42 {dimension_numbers = #tpu.dot_dimension_numbers<[1], [0], [0], [1], [0, 0, 1, 1], [], []>} : vector<108x128xbf16>, vector<128x256xbf16>, vector<108x256xf32> -> vector<108x256xf32>
    %c1_43 = arith.constant 1 : index
    %c0_44 = arith.constant 0 : index
    %46 = vector.load %arg15[%c1_43, %c0_44] : memref<112x128xbf16, #tpu.memory_space<vmem>>, vector<108x128xbf16>
    %c1_45 = arith.constant 1 : index
    %c0_46 = arith.constant 0 : index
    %c0_47 = arith.constant 0 : index
    %47 = vector.load %arg5[%c1_45, %c0_46, %c0_47] : memref<5x128x256xbf16, #tpu.memory_space<vmem>>, vector<1x128x256xbf16>
    %48 = vector.shape_cast %47 : vector<1x128x256xbf16> to vector<128x256xbf16>
    %cst_48 = arith.constant dense<0.000000e+00> : vector<108x256xf32>
    %49 = tpu.matmul %46, %48, %cst_48 {dimension_numbers = #tpu.dot_dimension_numbers<[1], [0], [0], [1], [0, 0, 1, 1], [], []>} : vector<108x128xbf16>, vector<128x256xbf16>, vector<108x256xf32> -> vector<108x256xf32>
    %50 = arith.addf %45, %49 : vector<108x256xf32>
    %c2_49 = arith.constant 2 : index
    %c0_50 = arith.constant 0 : index
    %51 = vector.load %arg15[%c2_49, %c0_50] : memref<112x128xbf16, #tpu.memory_space<vmem>>, vector<108x128xbf16>
    %c2_51 = arith.constant 2 : index
    %c0_52 = arith.constant 0 : index
    %c0_53 = arith.constant 0 : index
    %52 = vector.load %arg5[%c2_51, %c0_52, %c0_53] : memref<5x128x256xbf16, #tpu.memory_space<vmem>>, vector<1x128x256xbf16>
    %53 = vector.shape_cast %52 : vector<1x128x256xbf16> to vector<128x256xbf16>
    %cst_54 = arith.constant dense<0.000000e+00> : vector<108x256xf32>
    %54 = tpu.matmul %51, %53, %cst_54 {dimension_numbers = #tpu.dot_dimension_numbers<[1], [0], [0], [1], [0, 0, 1, 1], [], []>} : vector<108x128xbf16>, vector<128x256xbf16>, vector<108x256xf32> -> vector<108x256xf32>
    %55 = arith.addf %50, %54 : vector<108x256xf32>
    %c3_55 = arith.constant 3 : index
    %c0_56 = arith.constant 0 : index
    %56 = vector.load %arg15[%c3_55, %c0_56] : memref<112x128xbf16, #tpu.memory_space<vmem>>, vector<108x128xbf16>
    %c3_57 = arith.constant 3 : index
    %c0_58 = arith.constant 0 : index
    %c0_59 = arith.constant 0 : index
    %57 = vector.load %arg5[%c3_57, %c0_58, %c0_59] : memref<5x128x256xbf16, #tpu.memory_space<vmem>>, vector<1x128x256xbf16>
    %58 = vector.shape_cast %57 : vector<1x128x256xbf16> to vector<128x256xbf16>
    %cst_60 = arith.constant dense<0.000000e+00> : vector<108x256xf32>
    %59 = tpu.matmul %56, %58, %cst_60 {dimension_numbers = #tpu.dot_dimension_numbers<[1], [0], [0], [1], [0, 0, 1, 1], [], []>} : vector<108x128xbf16>, vector<128x256xbf16>, vector<108x256xf32> -> vector<108x256xf32>
    %60 = arith.addf %55, %59 : vector<108x256xf32>
    %c4_61 = arith.constant 4 : index
    %c0_62 = arith.constant 0 : index
    %61 = vector.load %arg15[%c4_61, %c0_62] : memref<112x128xbf16, #tpu.memory_space<vmem>>, vector<108x128xbf16>
    %c4_63 = arith.constant 4 : index
    %c0_64 = arith.constant 0 : index
    %c0_65 = arith.constant 0 : index
    %62 = vector.load %arg5[%c4_63, %c0_64, %c0_65] : memref<5x128x256xbf16, #tpu.memory_space<vmem>>, vector<1x128x256xbf16>
    %63 = vector.shape_cast %62 : vector<1x128x256xbf16> to vector<128x256xbf16>
    %cst_66 = arith.constant dense<0.000000e+00> : vector<108x256xf32>
    %64 = tpu.matmul %61, %63, %cst_66 {dimension_numbers = #tpu.dot_dimension_numbers<[1], [0], [0], [1], [0, 0, 1, 1], [], []>} : vector<108x128xbf16>, vector<128x256xbf16>, vector<108x256xf32> -> vector<108x256xf32>
    %65 = arith.addf %60, %64 : vector<108x256xf32>
    %66 = vector.extract_strided_slice %65 {offsets = [0, 0], sizes = [108, 128], strides = [1, 1]} : vector<108x256xf32> to vector<108x128xf32>
    %67 = vector.extract_strided_slice %65 {offsets = [0, 128], sizes = [108, 128], strides = [1, 1]} : vector<108x256xf32> to vector<108x128xf32>
    %68 = arith.maximumf %66, %67 : vector<108x128xf32>
    %69 = arith.truncf %68 : vector<108x128xf32> to vector<108x128xbf16>
    %c0_67 = arith.constant 0 : index
    %c0_68 = arith.constant 0 : index
    %c0_69 = arith.constant 0 : index
    %70 = vector.load %arg7[%c0_67, %c0_68, %c0_69] : memref<2x40x108xbf16, #tpu.memory_space<vmem>>, vector<1x40x108xbf16>
    %71 = vector.shape_cast %70 : vector<1x40x108xbf16> to vector<40x108xbf16>
    %cst_70 = arith.constant dense<0.000000e+00> : vector<40x128xf32>
    %72 = tpu.matmul %71, %69, %cst_70 {dimension_numbers = #tpu.dot_dimension_numbers<[1], [0], [0], [1], [0, 0, 1, 1], [], []>} : vector<40x108xbf16>, vector<108x128xbf16>, vector<40x128xf32> -> vector<40x128xf32>
    %c1_71 = arith.constant 1 : index
    %c0_72 = arith.constant 0 : index
    %c0_73 = arith.constant 0 : index
    %73 = vector.load %arg7[%c1_71, %c0_72, %c0_73] : memref<2x40x108xbf16, #tpu.memory_space<vmem>>, vector<1x40x108xbf16>
    %74 = vector.shape_cast %73 : vector<1x40x108xbf16> to vector<40x108xbf16>
    %cst_74 = arith.constant dense<0.000000e+00> : vector<40x128xf32>
    %75 = tpu.matmul %74, %69, %cst_74 {dimension_numbers = #tpu.dot_dimension_numbers<[1], [0], [0], [1], [0, 0, 1, 1], [], []>} : vector<40x108xbf16>, vector<108x128xbf16>, vector<40x128xf32> -> vector<40x128xf32>
    %76 = arith.maximumf %72, %75 : vector<40x128xf32>
    %c0_75 = arith.constant 0 : index
    %c0_76 = arith.constant 0 : index
    %77 = vector.load %arg6[%c0_75, %c0_76] : memref<1x128xf32, #tpu.memory_space<vmem>>, vector<1x128xf32>
    %78 = vector.broadcast %77 : vector<1x128xf32> to vector<40x128xf32>
    %79 = arith.addf %76, %78 : vector<40x128xf32>
    %cst_77 = arith.constant 0.000000e+00 : f32
    %80 = vector.broadcast %cst_77 : f32 to vector<40x128xf32>
    %81 = arith.maximumf %79, %80 : vector<40x128xf32>
    %82 = arith.truncf %81 : vector<40x128xf32> to vector<40x128xbf16>
    %c0_78 = arith.constant 0 : index
    %c0_79 = arith.constant 0 : index
    %83 = vector.load %arg16[%c0_78, %c0_79] : memref<40x128xbf16, #tpu.memory_space<vmem>>, vector<40x128xbf16>
    tpu.vector_store %arg16[%c0_78, %c0_79], %82 {strides = array<i32>} : memref<40x128xbf16, #tpu.memory_space<vmem>>, vector<40x128xbf16>,
    %c0_80 = arith.constant 0 : index
    %c0_81 = arith.constant 0 : index
    %84 = vector.load %arg16[%c0_80, %c0_81] : memref<40x128xbf16, #tpu.memory_space<vmem>>, vector<8x128xbf16>
    %c0_82 = arith.constant 0 : index
    %c0_83 = arith.constant 0 : index
    %c0_84 = arith.constant 0 : index
    %85 = vector.load %arg8[%c0_82, %c0_83, %c0_84] : memref<5x128x128xbf16, #tpu.memory_space<vmem>>, vector<1x128x128xbf16>
    %86 = vector.shape_cast %85 : vector<1x128x128xbf16> to vector<128x128xbf16>
    %cst_85 = arith.constant dense<0.000000e+00> : vector<8x128xf32>
    %87 = tpu.matmul %84, %86, %cst_85 {dimension_numbers = #tpu.dot_dimension_numbers<[1], [0], [0], [1], [0, 0, 1, 1], [], []>} : vector<8x128xbf16>, vector<128x128xbf16>, vector<8x128xf32> -> vector<8x128xf32>
    %c8 = arith.constant 8 : index
    %c0_86 = arith.constant 0 : index
    %88 = vector.load %arg16[%c8, %c0_86] : memref<40x128xbf16, #tpu.memory_space<vmem>>, vector<8x128xbf16>
    %c1_87 = arith.constant 1 : index
    %c0_88 = arith.constant 0 : index
    %c0_89 = arith.constant 0 : index
    %89 = vector.load %arg8[%c1_87, %c0_88, %c0_89] : memref<5x128x128xbf16, #tpu.memory_space<vmem>>, vector<1x128x128xbf16>
    %90 = vector.shape_cast %89 : vector<1x128x128xbf16> to vector<128x128xbf16>
    %cst_90 = arith.constant dense<0.000000e+00> : vector<8x128xf32>
    %91 = tpu.matmul %88, %90, %cst_90 {dimension_numbers = #tpu.dot_dimension_numbers<[1], [0], [0], [1], [0, 0, 1, 1], [], []>} : vector<8x128xbf16>, vector<128x128xbf16>, vector<8x128xf32> -> vector<8x128xf32>
    %92 = arith.addf %87, %91 : vector<8x128xf32>
    %c16 = arith.constant 16 : index
    %c0_91 = arith.constant 0 : index
    %93 = vector.load %arg16[%c16, %c0_91] : memref<40x128xbf16, #tpu.memory_space<vmem>>, vector<8x128xbf16>
    %c2_92 = arith.constant 2 : index
    %c0_93 = arith.constant 0 : index
    %c0_94 = arith.constant 0 : index
    %94 = vector.load %arg8[%c2_92, %c0_93, %c0_94] : memref<5x128x128xbf16, #tpu.memory_space<vmem>>, vector<1x128x128xbf16>
    %95 = vector.shape_cast %94 : vector<1x128x128xbf16> to vector<128x128xbf16>
    %cst_95 = arith.constant dense<0.000000e+00> : vector<8x128xf32>
    %96 = tpu.matmul %93, %95, %cst_95 {dimension_numbers = #tpu.dot_dimension_numbers<[1], [0], [0], [1], [0, 0, 1, 1], [], []>} : vector<8x128xbf16>, vector<128x128xbf16>, vector<8x128xf32> -> vector<8x128xf32>
    %97 = arith.addf %92, %96 : vector<8x128xf32>
    %c24 = arith.constant 24 : index
    %c0_96 = arith.constant 0 : index
    %98 = vector.load %arg16[%c24, %c0_96] : memref<40x128xbf16, #tpu.memory_space<vmem>>, vector<8x128xbf16>
    %c3_97 = arith.constant 3 : index
    %c0_98 = arith.constant 0 : index
    %c0_99 = arith.constant 0 : index
    %99 = vector.load %arg8[%c3_97, %c0_98, %c0_99] : memref<5x128x128xbf16, #tpu.memory_space<vmem>>, vector<1x128x128xbf16>
    %100 = vector.shape_cast %99 : vector<1x128x128xbf16> to vector<128x128xbf16>
    %cst_100 = arith.constant dense<0.000000e+00> : vector<8x128xf32>
    %101 = tpu.matmul %98, %100, %cst_100 {dimension_numbers = #tpu.dot_dimension_numbers<[1], [0], [0], [1], [0, 0, 1, 1], [], []>} : vector<8x128xbf16>, vector<128x128xbf16>, vector<8x128xf32> -> vector<8x128xf32>
    %102 = arith.addf %97, %101 : vector<8x128xf32>
    %c32 = arith.constant 32 : index
    %c0_101 = arith.constant 0 : index
    %103 = vector.load %arg16[%c32, %c0_101] : memref<40x128xbf16, #tpu.memory_space<vmem>>, vector<8x128xbf16>
    %c4_102 = arith.constant 4 : index
    %c0_103 = arith.constant 0 : index
    %c0_104 = arith.constant 0 : index
    %104 = vector.load %arg8[%c4_102, %c0_103, %c0_104] : memref<5x128x128xbf16, #tpu.memory_space<vmem>>, vector<1x128x128xbf16>
    %105 = vector.shape_cast %104 : vector<1x128x128xbf16> to vector<128x128xbf16>
    %cst_105 = arith.constant dense<0.000000e+00> : vector<8x128xf32>
    %106 = tpu.matmul %103, %105, %cst_105 {dimension_numbers = #tpu.dot_dimension_numbers<[1], [0], [0], [1], [0, 0, 1, 1], [], []>} : vector<8x128xbf16>, vector<128x128xbf16>, vector<8x128xf32> -> vector<8x128xf32>
    %107 = arith.addf %102, %106 : vector<8x128xf32>
    %c0_106 = arith.constant 0 : index
    %c0_107 = arith.constant 0 : index
    %108 = vector.load %arg9[%c0_106, %c0_107] : memref<1x128xf32, #tpu.memory_space<vmem>>, vector<1x128xf32>
    %109 = vector.broadcast %108 : vector<1x128xf32> to vector<8x128xf32>
    %110 = arith.addf %107, %109 : vector<8x128xf32>
    %cst_108 = arith.constant 0.000000e+00 : f32
    %111 = vector.broadcast %cst_108 : f32 to vector<8x128xf32>
    %112 = arith.maximumf %110, %111 : vector<8x128xf32>
    %113 = arith.truncf %112 : vector<8x128xf32> to vector<8x128xbf16>
    %c0_109 = arith.constant 0 : index
    %c0_110 = arith.constant 0 : index
    %114 = vector.load %arg10[%c0_109, %c0_110] : memref<128x128xbf16, #tpu.memory_space<vmem>>, vector<128x128xbf16>
    %cst_111 = arith.constant dense<0.000000e+00> : vector<8x128xf32>
    %115 = tpu.matmul %113, %114, %cst_111 {dimension_numbers = #tpu.dot_dimension_numbers<[1], [0], [0], [1], [0, 0, 1, 1], [], []>} : vector<8x128xbf16>, vector<128x128xbf16>, vector<8x128xf32> -> vector<8x128xf32>
    %c0_112 = arith.constant 0 : index
    %c0_113 = arith.constant 0 : index
    %116 = vector.load %arg11[%c0_112, %c0_113] : memref<1x128xf32, #tpu.memory_space<vmem>>, vector<1x128xf32>
    %117 = vector.broadcast %116 : vector<1x128xf32> to vector<8x128xf32>
    %118 = arith.addf %115, %117 : vector<8x128xf32>
    %cst_114 = arith.constant 0.000000e+00 : f32
    %119 = vector.broadcast %cst_114 : f32 to vector<8x128xf32>
    %120 = arith.maximumf %118, %119 : vector<8x128xf32>
    %121 = arith.truncf %120 : vector<8x128xf32> to vector<8x128xbf16>
    %c0_115 = arith.constant 0 : index
    %c0_116 = arith.constant 0 : index
    %122 = vector.load %arg12[%c0_115, %c0_116] : memref<128x128xbf16, #tpu.memory_space<vmem>>, vector<128x128xbf16>
    %cst_117 = arith.constant dense<0.000000e+00> : vector<8x128xf32>
    %123 = tpu.matmul %121, %122, %cst_117 {dimension_numbers = #tpu.dot_dimension_numbers<[1], [0], [0], [1], [0, 0, 1, 1], [], []>} : vector<8x128xbf16>, vector<128x128xbf16>, vector<8x128xf32> -> vector<8x128xf32>
    %c0_118 = arith.constant 0 : index
    %c0_119 = arith.constant 0 : index
    %124 = vector.load %arg13[%c0_118, %c0_119] : memref<1x128xf32, #tpu.memory_space<vmem>>, vector<1x128xf32>
    %125 = vector.broadcast %124 : vector<1x128xf32> to vector<8x128xf32>
    %126 = arith.addf %123, %125 : vector<8x128xf32>
    %c0_120 = arith.constant 0 : index
    %c0_121 = arith.constant 0 : index
    %127 = vector.load %arg14[%c0_120, %c0_121] : memref<8x128xf32, #tpu.memory_space<vmem>>, vector<8x128xf32>
    tpu.vector_store %arg14[%c0_120, %c0_121], %126 {strides = array<i32>} : memref<8x128xf32, #tpu.memory_space<vmem>>, vector<8x128xf32>,
    return
  }
  func.func @transform_0(%arg0: i32) -> (i32, i32) {
    %c0_i32 = arith.constant 0 : i32
    %c0_i32_0 = arith.constant 0 : i32
    return %arg0, %c0_i32 : i32, i32
  }
  func.func @transform_1(%arg0: i32) -> (i32, i32, i32) {
    %c0_i32 = arith.constant 0 : i32
    %c0_i32_0 = arith.constant 0 : i32
    %c0_i32_1 = arith.constant 0 : i32
    %c0_i32_2 = arith.constant 0 : i32
    return %c0_i32, %c0_i32_0, %c0_i32_1 : i32, i32, i32
  }
  func.func @transform_2(%arg0: i32) -> (i32, i32) {
    %c0_i32 = arith.constant 0 : i32
    %c0_i32_0 = arith.constant 0 : i32
    %c0_i32_1 = arith.constant 0 : i32
    return %c0_i32, %c0_i32_0 : i32, i32
  }
  func.func @transform_3(%arg0: i32) -> (i32, i32, i32) {
    %c0_i32 = arith.constant 0 : i32
    %c0_i32_0 = arith.constant 0 : i32
    %c0_i32_1 = arith.constant 0 : i32
    %c0_i32_2 = arith.constant 0 : i32
    return %c0_i32, %c0_i32_0, %c0_i32_1 : i32, i32, i32
  }
  func.func @transform_4(%arg0: i32) -> (i32, i32, i32) {
    %c0_i32 = arith.constant 0 : i32
    %c0_i32_0 = arith.constant 0 : i32
    %c0_i32_1 = arith.constant 0 : i32
    %c0_i32_2 = arith.constant 0 : i32
    return %c0_i32, %c0_i32_0, %c0_i32_1 : i32, i32, i32
  }
  func.func @transform_5(%arg0: i32) -> (i32, i32) {
    %c0_i32 = arith.constant 0 : i32
    %c0_i32_0 = arith.constant 0 : i32
    %c0_i32_1 = arith.constant 0 : i32
    return %c0_i32, %c0_i32_0 : i32, i32
  }
  func.func @transform_6(%arg0: i32) -> (i32, i32, i32) {
    %c0_i32 = arith.constant 0 : i32
    %c0_i32_0 = arith.constant 0 : i32
    %c0_i32_1 = arith.constant 0 : i32
    %c0_i32_2 = arith.constant 0 : i32
    return %c0_i32, %c0_i32_0, %c0_i32_1 : i32, i32, i32
  }
  func.func @transform_7(%arg0: i32) -> (i32, i32, i32) {
    %c0_i32 = arith.constant 0 : i32
    %c0_i32_0 = arith.constant 0 : i32
    %c0_i32_1 = arith.constant 0 : i32
    %c0_i32_2 = arith.constant 0 : i32
    return %c0_i32, %c0_i32_0, %c0_i32_1 : i32, i32, i32
  }
  func.func @transform_8(%arg0: i32) -> (i32, i32) {
    %c0_i32 = arith.constant 0 : i32
    %c0_i32_0 = arith.constant 0 : i32
    %c0_i32_1 = arith.constant 0 : i32
    return %c0_i32, %c0_i32_0 : i32, i32
  }
  func.func @transform_9(%arg0: i32) -> (i32, i32) {
    %c0_i32 = arith.constant 0 : i32
    %c0_i32_0 = arith.constant 0 : i32
    %c0_i32_1 = arith.constant 0 : i32
    return %c0_i32, %c0_i32_0 : i32, i32
  }
  func.func @transform_10(%arg0: i32) -> (i32, i32) {
    %c0_i32 = arith.constant 0 : i32
    %c0_i32_0 = arith.constant 0 : i32
    %c0_i32_1 = arith.constant 0 : i32
    return %c0_i32, %c0_i32_0 : i32, i32
  }
  func.func @transform_11(%arg0: i32) -> (i32, i32) {
    %c0_i32 = arith.constant 0 : i32
    %c0_i32_0 = arith.constant 0 : i32
    %c0_i32_1 = arith.constant 0 : i32
    return %c0_i32, %c0_i32_0 : i32, i32
  }
  func.func @transform_12(%arg0: i32) -> (i32, i32) {
    %c0_i32 = arith.constant 0 : i32
    %c0_i32_0 = arith.constant 0 : i32
    %c0_i32_1 = arith.constant 0 : i32
    return %c0_i32, %c0_i32_0 : i32, i32
  }
  func.func @transform_13(%arg0: i32) -> (i32, i32) {
    %c0_i32 = arith.constant 0 : i32
    %c0_i32_0 = arith.constant 0 : i32
    return %arg0, %c0_i32 : i32, i32
  }
}

</mosaic_0001>

<llo_original>
// kernel: cnn_forward.1
$region0: #{cnn_forward.1}
  #allocation0 [shape = 'u32[]', space=smem, size = 0x4, offset = 0x4, fixed_abs, tag = 'smem constant byte address 0x4 - core index']
  #allocation1 [shape = 'u32[144,128]{1,0:T(1,128)}', space=vmem, size = 0x12000, scoped, tag = 'internal scratch']
  #allocation2 [shape = 'bf16[112,128]{1,0:T(16,128)(2,1)}', space=vmem, size = 0x7000, scoped, tag = 'scratch operand']
  #allocation3 [shape = 'bf16[40,128]{1,0:T(8,128)(2,1)}', space=vmem, size = 0x2800, scoped, tag = 'scratch operand']
  %s0 = inlined_call_operand.vmem [shape: bf16[512,96], index: 0, kind: input, shape index: {}]
  %s1 = inlined_call_operand.vmem [shape: bf16[5,96,256], index: 1, kind: input, shape index: {}]
  %s2 = inlined_call_operand.vmem [shape: f32[1,128], index: 2, kind: input, shape index: {}]
  %s3 = inlined_call_operand.vmem [shape: bf16[2,112,252], index: 3, kind: input, shape index: {}]
  %s4 = inlined_call_operand.vmem [shape: bf16[5,128,256], index: 4, kind: input, shape index: {}]
  %s5 = inlined_call_operand.vmem [shape: f32[1,128], index: 5, kind: input, shape index: {}]
  %s6 = inlined_call_operand.vmem [shape: bf16[2,40,108], index: 6, kind: input, shape index: {}]
  %s7 = inlined_call_operand.vmem [shape: bf16[5,128,128], index: 7, kind: input, shape index: {}]
  %s8 = inlined_call_operand.vmem [shape: f32[1,128], index: 8, kind: input, shape index: {}]
  %s9 = inlined_call_operand.vmem [shape: bf16[128,128], index: 9, kind: input, shape index: {}]
  %s10 = inlined_call_operand.vmem [shape: f32[1,128], index: 10, kind: input, shape index: {}]
  %s11 = inlined_call_operand.vmem [shape: bf16[128,128], index: 11, kind: input, shape index: {}]
  %s12 = inlined_call_operand.vmem [shape: f32[1,128], index: 12, kind: input, shape index: {}]
  %s13 = inlined_call_operand.hbm [shape: f32[16,128], index: 13, kind: output, shape index: {}]
  %s14 = sld [smem:[#allocation0]]
  $region85: #{cnn_forward.1} parent=0
    _
  %s16 = ssub.s32 1, %s14
  %s17 = scalar_select 0, %s16, %s14
  $region1: #{cnn_forward.1} parent=0
    #allocation4 [shape = 'u8[8192]{0}', space=vmem, size = 0x2000, scoped, tag = 'output window, operand 0']
    #allocation5 [shape = 's32[2]{0}', space=sflag, size = 0x8, scoped, tag = 'scoped memory for cnn_forward.1']
    %18 = vsyncpa [#allocation5], 0
    %s19 = scalar_lea.sflag [#allocation5], 1
    %20 = vsyncpa %s19, 0
    loop: start=0, step=1, limit=4
    $region2: #{cnn_forward.1} parent=1 // loop_pre_header
      _
    $region3: #{cnn_forward.1} parent=1 // loop_header
      %s22 = sphi 0, %s26
      %p23 = scmp.ge.s32.totalorder %s22, 4
      %s32 = sphi 0, %s34
      %s35 = sphi 0, %s32
      %s36 = sphi 0, %s35
      %s52 = sphi 0, %s36
      %s56 = sphi 0, %s56
      %s58 = sphi 0, %s56
      %s59 = sphi 0, %s58
      %s73 = sphi 0, %s59
      %s77 = sphi 0, %s77
      %s79 = sphi 0, %s77
      %s80 = sphi 0, %s79
      %s94 = sphi 0, %s80
      %s98 = sphi 0, %s98
      %s100 = sphi 0, %s98
      %s101 = sphi 0, %s100
      %s115 = sphi 0, %s101
      %s119 = sphi 0, %s119
      %s121 = sphi 0, %s119
      %s122 = sphi 0, %s121
      %s136 = sphi 0, %s122
      %s140 = sphi 0, %s140
      %s142 = sphi 0, %s140
      %s143 = sphi 0, %s142
      %s157 = sphi 0, %s143
      %s161 = sphi 0, %s161
      %s163 = sphi 0, %s161
      %s164 = sphi 0, %s163
      %s178 = sphi 0, %s164
      %s182 = sphi 0, %s182
      %s184 = sphi 0, %s182
      %s185 = sphi 0, %s184
      %s199 = sphi 0, %s185
      %s203 = sphi 0, %s203
      %s205 = sphi 0, %s203
      %s206 = sphi 0, %s205
      %s220 = sphi 0, %s206
      %s224 = sphi 0, %s224
      %s226 = sphi 0, %s224
      %s227 = sphi 0, %s226
      %s241 = sphi 0, %s227
      %s245 = sphi 0, %s245
      %s247 = sphi 0, %s245
      %s248 = sphi 0, %s247
      %s262 = sphi 0, %s248
      %s266 = sphi 0, %s266
      %s268 = sphi 0, %s266
      %s269 = sphi 0, %s268
      %s283 = sphi 0, %s269
      %s287 = sphi 0, %s287
      %s289 = sphi 0, %s287
      %s290 = sphi 0, %s289
      %s304 = sphi 0, %s290
      %s310 = sphi 0, %s312
      %s313 = sphi 0, %s310
      %s314 = sphi 0, %s313
      %s330 = sphi 0, %s314
    $region4: #{cnn_forward.1} parent=1 // loop_header_branch
      %25 = sbr.rel (%p23) target = $region8
    $region5: #{cnn_forward.1} parent=1 // loop_body
      %s27 = ssub.s32 %s22, 1
      %s28 = ssub.s32 %s22, 2
      %s29 = sadd.s32 %s22, 1
      %s30 = ssub.s32 %s22, %s29
      %p31 = scmp.eq.s32.totalorder %s30, 0
      %s33 = sadd.s32 %s32, 1
      %s34 = scalar_select %p31, %s32, %s33
      %p37 = pneg %p31
      %p38 = scmp.eq.s32.totalorder %s22, 1
      %p39 = por %p37, %p38
      %p40 = scmp.ne.s32.totalorder %s32, %s35
      %p41 = scmp.eq.s32.totalorder %s22, 0
      %p42 = por %p40, %p41
      %p43 = scmp.ne.s32.totalorder %s32, %s35
      %p44 = scmp.eq.s32.totalorder %s27, 1
      %p45 = por %p43, %p44
      %p46 = scmp.ne.s32.totalorder %s35, %s36
      %p47 = scmp.eq.s32.totalorder %s27, 0
      %p48 = por %p46, %p47
      %p49 = scmp.ne.s32.totalorder %s35, %s36
      %p50 = scmp.eq.s32.totalorder %s28, 1
      %p51 = por %p49, %p50
      %p53 = scmp.ne.s32.totalorder %s36, %s52
      %p54 = scmp.eq.s32.totalorder %s28, 0
      %p55 = por %p53, %p54
      %s57 = sadd.s32 %s56, 1
      %p60 = scmp.eq.s32.totalorder %s22, 1
      %p61 = scmp.ne.s32.totalorder %s56, %s58
      %p62 = scmp.eq.s32.totalorder %s22, 0
      %p63 = por %p61, %p62
      %p64 = scmp.ne.s32.totalorder %s56, %s58
      %p65 = scmp.eq.s32.totalorder %s27, 1
      %p66 = por %p64, %p65
      %p67 = scmp.ne.s32.totalorder %s58, %s59
      %p68 = scmp.eq.s32.totalorder %s27, 0
      %p69 = por %p67, %p68
      %p70 = scmp.ne.s32.totalorder %s58, %s59
      %p71 = scmp.eq.s32.totalorder %s28, 1
      %p72 = por %p70, %p71
      %p74 = scmp.ne.s32.totalorder %s59, %s73
      %p75 = scmp.eq.s32.totalorder %s28, 0
      %p76 = por %p74, %p75
      %s78 = sadd.s32 %s77, 1
      %p81 = scmp.eq.s32.totalorder %s22, 1
      %p82 = scmp.ne.s32.totalorder %s77, %s79
      %p83 = scmp.eq.s32.totalorder %s22, 0
      %p84 = por %p82, %p83
      %p85 = scmp.ne.s32.totalorder %s77, %s79
      %p86 = scmp.eq.s32.totalorder %s27, 1
      %p87 = por %p85, %p86
      %p88 = scmp.ne.s32.totalorder %s79, %s80
      %p89 = scmp.eq.s32.totalorder %s27, 0
      %p90 = por %p88, %p89
      %p91 = scmp.ne.s32.totalorder %s79, %s80
      %p92 = scmp.eq.s32.totalorder %s28, 1
      %p93 = por %p91, %p92
      %p95 = scmp.ne.s32.totalorder %s80, %s94
      %p96 = scmp.eq.s32.totalorder %s28, 0
      %p97 = por %p95, %p96
      %s99 = sadd.s32 %s98, 1
      %p102 = scmp.eq.s32.totalorder %s22, 1
      %p103 = scmp.ne.s32.totalorder %s98, %s100
      %p104 = scmp.eq.s32.totalorder %s22, 0
      %p105 = por %p103, %p104
      %p106 = scmp.ne.s32.totalorder %s98, %s100
      %p107 = scmp.eq.s32.totalorder %s27, 1
      %p108 = por %p106, %p107
      %p109 = scmp.ne.s32.totalorder %s100, %s101
      %p110 = scmp.eq.s32.totalorder %s27, 0
      %p111 = por %p109, %p110
      %p112 = scmp.ne.s32.totalorder %s100, %s101
      %p113 = scmp.eq.s32.totalorder %s28, 1
      %p114 = por %p112, %p113
      %p116 = scmp.ne.s32.totalorder %s101, %s115
      %p117 = scmp.eq.s32.totalorder %s28, 0
      %p118 = por %p116, %p117
      %s120 = sadd.s32 %s119, 1
      %p123 = scmp.eq.s32.totalorder %s22, 1
      %p124 = scmp.ne.s32.totalorder %s119, %s121
      %p125 = scmp.eq.s32.totalorder %s22, 0
      %p126 = por %p124, %p125
      %p127 = scmp.ne.s32.totalorder %s119, %s121
      %p128 = scmp.eq.s32.totalorder %s27, 1
      %p129 = por %p127, %p128
      %p130 = scmp.ne.s32.totalorder %s121, %s122
      %p131 = scmp.eq.s32.totalorder %s27, 0
      %p132 = por %p130, %p131
      %p133 = scmp.ne.s32.totalorder %s121, %s122
      %p134 = scmp.eq.s32.totalorder %s28, 1
      %p135 = por %p133, %p134
      %p137 = scmp.ne.s32.totalorder %s122, %s136
      %p138 = scmp.eq.s32.totalorder %s28, 0
      %p139 = por %p137, %p138
      %s141 = sadd.s32 %s140, 1
      %p144 = scmp.eq.s32.totalorder %s22, 1
      %p145 = scmp.ne.s32.totalorder %s140, %s142
      %p146 = scmp.eq.s32.totalorder %s22, 0
      %p147 = por %p145, %p146
      %p148 = scmp.ne.s32.totalorder %s140, %s142
      %p149 = scmp.eq.s32.totalorder %s27, 1
      %p150 = por %p148, %p149
      %p151 = scmp.ne.s32.totalorder %s142, %s143
      %p152 = scmp.eq.s32.totalorder %s27, 0
      %p153 = por %p151, %p152
      %p154 = scmp.ne.s32.totalorder %s142, %s143
      %p155 = scmp.eq.s32.totalorder %s28, 1
      %p156 = por %p154, %p155
      %p158 = scmp.ne.s32.totalorder %s143, %s157
      %p159 = scmp.eq.s32.totalorder %s28, 0
      %p160 = por %p158, %p159
      %s162 = sadd.s32 %s161, 1
      %p165 = scmp.eq.s32.totalorder %s22, 1
      %p166 = scmp.ne.s32.totalorder %s161, %s163
      %p167 = scmp.eq.s32.totalorder %s22, 0
      %p168 = por %p166, %p167
      %p169 = scmp.ne.s32.totalorder %s161, %s163
      %p170 = scmp.eq.s32.totalorder %s27, 1
      %p171 = por %p169, %p170
      %p172 = scmp.ne.s32.totalorder %s163, %s164
      %p173 = scmp.eq.s32.totalorder %s27, 0
      %p174 = por %p172, %p173
      %p175 = scmp.ne.s32.totalorder %s163, %s164
      %p176 = scmp.eq.s32.totalorder %s28, 1
      %p177 = por %p175, %p176
      %p179 = scmp.ne.s32.totalorder %s164, %s178
      %p180 = scmp.eq.s32.totalorder %s28, 0
      %p181 = por %p179, %p180
      %s183 = sadd.s32 %s182, 1
      %p186 = scmp.eq.s32.totalorder %s22, 1
      %p187 = scmp.ne.s32.totalorder %s182, %s184
      %p188 = scmp.eq.s32.totalorder %s22, 0
      %p189 = por %p187, %p188
      %p190 = scmp.ne.s32.totalorder %s182, %s184
      %p191 = scmp.eq.s32.totalorder %s27, 1
      %p192 = por %p190, %p191
      %p193 = scmp.ne.s32.totalorder %s184, %s185
      %p194 = scmp.eq.s32.totalorder %s27, 0
      %p195 = por %p193, %p194
      %p196 = scmp.ne.s32.totalorder %s184, %s185
      %p197 = scmp.eq.s32.totalorder %s28, 1
      %p198 = por %p196, %p197
      %p200 = scmp.ne.s32.totalorder %s185, %s199
      %p201 = scmp.eq.s32.totalorder %s28, 0
      %p202 = por %p200, %p201
      %s204 = sadd.s32 %s203, 1
      %p207 = scmp.eq.s32.totalorder %s22, 1
      %p208 = scmp.ne.s32.totalorder %s203, %s205
      %p209 = scmp.eq.s32.totalorder %s22, 0
      %p210 = por %p208, %p209
      %p211 = scmp.ne.s32.totalorder %s203, %s205
      %p212 = scmp.eq.s32.totalorder %s27, 1
      %p213 = por %p211, %p212
      %p214 = scmp.ne.s32.totalorder %s205, %s206
      %p215 = scmp.eq.s32.totalorder %s27, 0
      %p216 = por %p214, %p215
      %p217 = scmp.ne.s32.totalorder %s205, %s206
      %p218 = scmp.eq.s32.totalorder %s28, 1
      %p219 = por %p217, %p218
      %p221 = scmp.ne.s32.totalorder %s206, %s220
      %p222 = scmp.eq.s32.totalorder %s28, 0
      %p223 = por %p221, %p222
      %s225 = sadd.s32 %s224, 1
      %p228 = scmp.eq.s32.totalorder %s22, 1
      %p229 = scmp.ne.s32.totalorder %s224, %s226
      %p230 = scmp.eq.s32.totalorder %s22, 0
      %p231 = por %p229, %p230
      %p232 = scmp.ne.s32.totalorder %s224, %s226
      %p233 = scmp.eq.s32.totalorder %s27, 1
      %p234 = por %p232, %p233
      %p235 = scmp.ne.s32.totalorder %s226, %s227
      %p236 = scmp.eq.s32.totalorder %s27, 0
      %p237 = por %p235, %p236
      %p238 = scmp.ne.s32.totalorder %s226, %s227
      %p239 = scmp.eq.s32.totalorder %s28, 1
      %p240 = por %p238, %p239
      %p242 = scmp.ne.s32.totalorder %s227, %s241
      %p243 = scmp.eq.s32.totalorder %s28, 0
      %p244 = por %p242, %p243
      %s246 = sadd.s32 %s245, 1
      %p249 = scmp.eq.s32.totalorder %s22, 1
      %p250 = scmp.ne.s32.totalorder %s245, %s247
      %p251 = scmp.eq.s32.totalorder %s22, 0
      %p252 = por %p250, %p251
      %p253 = scmp.ne.s32.totalorder %s245, %s247
      %p254 = scmp.eq.s32.totalorder %s27, 1
      %p255 = por %p253, %p254
      %p256 = scmp.ne.s32.totalorder %s247, %s248
      %p257 = scmp.eq.s32.totalorder %s27, 0
      %p258 = por %p256, %p257
      %p259 = scmp.ne.s32.totalorder %s247, %s248
      %p260 = scmp.eq.s32.totalorder %s28, 1
      %p261 = por %p259, %p260
      %p263 = scmp.ne.s32.totalorder %s248, %s262
      %p264 = scmp.eq.s32.totalorder %s28, 0
      %p265 = por %p263, %p264
      %s267 = sadd.s32 %s266, 1
      %p270 = scmp.eq.s32.totalorder %s22, 1
      %p271 = scmp.ne.s32.totalorder %s266, %s268
      %p272 = scmp.eq.s32.totalorder %s22, 0
      %p273 = por %p271, %p272
      %p274 = scmp.ne.s32.totalorder %s266, %s268
      %p275 = scmp.eq.s32.totalorder %s27, 1
      %p276 = por %p274, %p275
      %p277 = scmp.ne.s32.totalorder %s268, %s269
      %p278 = scmp.eq.s32.totalorder %s27, 0
      %p279 = por %p277, %p278
      %p280 = scmp.ne.s32.totalorder %s268, %s269
      %p281 = scmp.eq.s32.totalorder %s28, 1
      %p282 = por %p280, %p281
      %p284 = scmp.ne.s32.totalorder %s269, %s283
      %p285 = scmp.eq.s32.totalorder %s28, 0
      %p286 = por %p284, %p285
      %s288 = sadd.s32 %s287, 1
      %p291 = scmp.eq.s32.totalorder %s22, 1
      %p292 = scmp.ne.s32.totalorder %s287, %s289
      %p293 = scmp.eq.s32.totalorder %s22, 0
      %p294 = por %p292, %p293
      %p295 = scmp.ne.s32.totalorder %s287, %s289
      %p296 = scmp.eq.s32.totalorder %s27, 1
      %p297 = por %p295, %p296
      %p298 = scmp.ne.s32.totalorder %s289, %s290
      %p299 = scmp.eq.s32.totalorder %s27, 0
      %p300 = por %p298, %p299
      %p301 = scmp.ne.s32.totalorder %s289, %s290
      %p302 = scmp.eq.s32.totalorder %s28, 1
      %p303 = por %p301, %p302
      %p305 = scmp.ne.s32.totalorder %s290, %s304
      %p306 = scmp.eq.s32.totalorder %s28, 0
      %p307 = por %p305, %p306
      %s308 = ssub.s32 %s22, %s29
      %p309 = scmp.eq.s32.totalorder %s308, 0
      %s311 = sadd.s32 %s310, 1
      %s312 = scalar_select %p309, %s310, %s311
      %p315 = pneg %p309
      %p316 = scmp.eq.s32.totalorder %s22, 1
      %p317 = por %p315, %p316
      %p318 = scmp.ne.s32.totalorder %s310, %s313
      %p319 = scmp.eq.s32.totalorder %s22, 0
      %p320 = por %p318, %p319
      %p321 = scmp.ne.s32.totalorder %s310, %s313
      %p322 = scmp.eq.s32.totalorder %s27, 1
      %p323 = por %p321, %p322
      %p324 = scmp.ne.s32.totalorder %s313, %s314
      %p325 = scmp.eq.s32.totalorder %s27, 0
      %p326 = por %p324, %p325
      %p327 = scmp.ne.s32.totalorder %s313, %s314
      %p328 = scmp.eq.s32.totalorder %s28, 1
      %p329 = por %p327, %p328
      %p331 = scmp.ne.s32.totalorder %s314, %s330
      %p332 = scmp.eq.s32.totalorder %s28, 0
      %p333 = por %p331, %p332
      %p334 = scmp.le.s32.totalorder 1, %s22
      %p335 = scmp.lt.s32.totalorder %s22, 3
      %p336 = pnand %p334, %p335
      %p337 = pneg %p336
      // Predicated region
      $region9: #{cnn_forward.1} parent=5 // pred_check
        _
      $region10: #{cnn_forward.1} parent=5 // pred_check_branch
        %339 = sbr.rel (%p336) target = $region12
      $region11: #{cnn_forward.1} parent=5 // pred_region
        %s340 = ssub.s32 %s22, 1
        // Predicated region
        $region13: #{cnn_forward.1} parent=11 // pred_check
          %p341 = pneg %p69
        $region14: #{cnn_forward.1} parent=11 // pred_check_branch
          %343 = sbr.rel (%p341) target = $region16
        $region15: #{cnn_forward.1} parent=11 // pred_region
          _
        $region16: #{cnn_forward.1} parent=11 // pred_fallthru
          _
        // Predicated region
        $region17: #{cnn_forward.1} parent=11 // pred_check
          %p344 = pneg %p90
        $region18: #{cnn_forward.1} parent=11 // pred_check_branch
          %346 = sbr.rel (%p344) target = $region20
        $region19: #{cnn_forward.1} parent=11 // pred_region
          _
        $region20: #{cnn_forward.1} parent=11 // pred_fallthru
          _
        // Predicated region
        $region21: #{cnn_forward.1} parent=11 // pred_check
          %p347 = pneg %p111
        $region22: #{cnn_forward.1} parent=11 // pred_check_branch
          %349 = sbr.rel (%p347) target = $region24
        $region23: #{cnn_forward.1} parent=11 // pred_region
          _
        $region24: #{cnn_forward.1} parent=11 // pred_fallthru
          _
        // Predicated region
        $region25: #{cnn_forward.1} parent=11 // pred_check
          %p350 = pneg %p132
        $region26: #{cnn_forward.1} parent=11 // pred_check_branch
          %352 = sbr.rel (%p350) target = $region28
        $region27: #{cnn_forward.1} parent=11 // pred_region
          _
        $region28: #{cnn_forward.1} parent=11 // pred_fallthru
          _
        // Predicated region
        $region29: #{cnn_forward.1} parent=11 // pred_check
          %p353 = pneg %p153
        $region30: #{cnn_forward.1} parent=11 // pred_check_branch
          %355 = sbr.rel (%p353) target = $region32
        $region31: #{cnn_forward.1} parent=11 // pred_region
          _
        $region32: #{cnn_forward.1} parent=11 // pred_fallthru
          _
        // Predicated region
        $region33: #{cnn_forward.1} parent=11 // pred_check
          %p356 = pneg %p174
        $region34: #{cnn_forward.1} parent=11 // pred_check_branch
          %358 = sbr.rel (%p356) target = $region36
        $region35: #{cnn_forward.1} parent=11 // pred_region
          _
        $region36: #{cnn_forward.1} parent=11 // pred_fallthru
          _
        // Predicated region
        $region37: #{cnn_forward.1} parent=11 // pred_check
          %p359 = pneg %p195
        $region38: #{cnn_forward.1} parent=11 // pred_check_branch
          %361 = sbr.rel (%p359) target = $region40
        $region39: #{cnn_forward.1} parent=11 // pred_region
          _
        $region40: #{cnn_forward.1} parent=11 // pred_fallthru
          _
        // Predicated region
        $region41: #{cnn_forward.1} parent=11 // pred_check
          %p362 = pneg %p216
        $region42: #{cnn_forward.1} parent=11 // pred_check_branch
          %364 = sbr.rel (%p362) target = $region44
        $region43: #{cnn_forward.1} parent=11 // pred_region
          _
        $region44: #{cnn_forward.1} parent=11 // pred_fallthru
          _
        // Predicated region
        $region45: #{cnn_forward.1} parent=11 // pred_check
          %p365 = pneg %p237
        $region46: #{cnn_forward.1} parent=11 // pred_check_branch
          %367 = sbr.rel (%p365) target = $region48
        $region47: #{cnn_forward.1} parent=11 // pred_region
          _
        $region48: #{cnn_forward.1} parent=11 // pred_fallthru
          _
        // Predicated region
        $region49: #{cnn_forward.1} parent=11 // pred_check
          %p368 = pneg %p258
        $region50: #{cnn_forward.1} parent=11 // pred_check_branch
          %370 = sbr.rel (%p368) target = $region52
        $region51: #{cnn_forward.1} parent=11 // pred_region
          _
        $region52: #{cnn_forward.1} parent=11 // pred_fallthru
          _
        // Predicated region
        $region53: #{cnn_forward.1} parent=11 // pred_check
          %p371 = pneg %p279
        $region54: #{cnn_forward.1} parent=11 // pred_check_branch
          %373 = sbr.rel (%p371) target = $region56
        $region55: #{cnn_forward.1} parent=11 // pred_region
          _
        $region56: #{cnn_forward.1} parent=11 // pred_fallthru
          _
        // Predicated region
        $region57: #{cnn_forward.1} parent=11 // pred_check
          %p374 = pneg %p300
        $region58: #{cnn_forward.1} parent=11 // pred_check_branch
          %376 = sbr.rel (%p374) target = $region60
        $region59: #{cnn_forward.1} parent=11 // pred_region
          _
        $region60: #{cnn_forward.1} parent=11 // pred_fallthru
          _
      $region12: #{cnn_forward.1} parent=5 // pred_fallthru
        _
      %p377 = scmp.lt.s32.totalorder %s22, 2
      // Predicated region
      $region61: #{cnn_forward.1} parent=5 // pred_check
        %p378 = pneg %p377
      $region62: #{cnn_forward.1} parent=5 // pred_check_branch
        %380 = sbr.rel (%p378) target = $region64
      $region63: #{cnn_forward.1} parent=5 // pred_region
        // Predicated region
        $region65: #{cnn_forward.1} parent=63 // pred_check
          %p381 = pneg %p42
        $region66: #{cnn_forward.1} parent=63 // pred_check_branch
          %383 = sbr.rel (%p381) target = $region68
        $region67: #{cnn_forward.1} parent=63 // pred_region
          %s384 = smul.u32 32, %s22
          %p385 = scmp.lt.s32.totalorder %s384, 63
          %s386 = scalar_select %p385, %s384, 63
          %s387 = smul.addr %s386, 4
          %s388 = scalar_lea.vmem %s0, %s387
          %s389 = smul.u32 32, %s22
        $region68: #{cnn_forward.1} parent=63 // pred_fallthru
          _
      $region64: #{cnn_forward.1} parent=5 // pred_fallthru
        _
      %p390 = scmp.le.s32.totalorder 1, %s22
      %p391 = scmp.lt.s32.totalorder %s22, 3
      %p392 = pnand %p390, %p391
      %p393 = pneg %p392
      // Predicated region
      $region69: #{cnn_forward.1} parent=5 // pred_check
        _
      $region70: #{cnn_forward.1} parent=5 // pred_check_branch
        %395 = sbr.rel (%p392) target = $region72
      $region71: #{cnn_forward.1} parent=5 // pred_region
        %s396 = ssub.s32 %s22, 1
        %s397 = smul.u32 32, %s27
        %p398 = scmp.lt.s32.totalorder %s397, 63
        %s399 = scalar_select %p398, %s397, 63
        %s400 = smul.addr %s399, 4
        %s401 = scalar_lea.vmem %s0, %s400
        %p402 = pneg %p48
        %p403 = pneg %p45
        %p404 = pneg %p69
        %p405 = pneg %p66
        %p406 = pneg %p90
        %p407 = pneg %p87
        %p408 = pneg %p111
        %p409 = pneg %p108
        %p410 = pneg %p132
        %p411 = pneg %p129
        %p412 = pneg %p153
        %p413 = pneg %p150
        %p414 = pneg %p174
        %p415 = pneg %p171
        %p416 = pneg %p195
        %p417 = pneg %p192
        %p418 = pneg %p216
        %p419 = pneg %p213
        %p420 = pneg %p237
        %p421 = pneg %p234
        %p422 = pneg %p258
        %p423 = pneg %p255
        %p424 = pneg %p279
        %p425 = pneg %p276
        %p426 = pneg %p300
        %p427 = pneg %p297
        %p428 = pneg %p326
        %p429 = pneg %p323
        %s430 = sand.u32 %s313, 1
        %s431 = scalar_lea.sflag [#allocation5], %s430
        %s432 = sand.u32 %s313, 1
        %s433 = smul.addr %s432, 8
        %s434 = scalar_lea.vmem [#allocation4], %s433
        %s435 = smul.u32 32, %s27
        %p436 = scmp.lt.s32.totalorder %s435, 63
        %s437 = scalar_select %p436, %s435, 63
        %s438 = smul.addr %s437, 4
        %s439 = scalar_lea.vmem %s0, %s438
        %s440 = smul.u32 32, %s27
        %v442 = vld [vmem:[%s439] sm:$0xf]
        %v443 = vld [vmem:[%s439 + $0x4] sm:$0xf]
        %v444 = vld [vmem:[%s439 + $0x8] sm:$0xf]
        %v445 = vld [vmem:[%s439 + $0xc] sm:$0xf]
        %v446 = vld [vmem:[%s439 + $0x10] sm:$0xf]
        %v447 = vld [vmem:[%s439 + $0x14] sm:$0xf]
        %v448 = vld [vmem:[%s439 + $0x18] sm:$0xf]
        %v449 = vld [vmem:[%s439 + $0x1c] sm:$0xf]
        %v450 = vld [vmem:[%s439 + $0x20] sm:$0xf]
        %v451 = vld [vmem:[%s439 + $0x24] sm:$0xf]
        %v452 = vld [vmem:[%s439 + $0x28] sm:$0xf]
        %v453 = vld [vmem:[%s439 + $0x2c] sm:$0xf]
        %v454 = vld [vmem:[%s439 + $0x30] sm:$0xf]
        %v455 = vld [vmem:[%s439 + $0x34] sm:$0xf]
        %v456 = vld [vmem:[%s439 + $0x38] sm:$0xf]
        %v457 = vld [vmem:[%s439 + $0x3c] sm:$0xf]
        %v458 = vld [vmem:[%s439 + $0x40] sm:$0xf]
        %v459 = vld [vmem:[%s439 + $0x44] sm:$0xf]
        %v460 = vld [vmem:[%s439 + $0x48] sm:$0xf]
        %v461 = vld [vmem:[%s439 + $0x4c] sm:$0xf]
        %v462 = vld [vmem:[%s439 + $0x50] sm:$0xf]
        %v463 = vld [vmem:[%s439 + $0x54] sm:$0xf]
        %v464 = vld [vmem:[%s439 + $0x58] sm:$0xf]
        %v465 = vld [vmem:[%s439 + $0x5c] sm:$0xf]
        %v466 = vld [vmem:[%s439 + $0x60] sm:$0xf]
        %v467 = vld [vmem:[%s439 + $0x64] sm:$0xf]
        %v468 = vld [vmem:[%s439 + $0x68] sm:$0xf]
        %v469 = vld [vmem:[%s439 + $0x6c] sm:$0xf]
        %v470 = vld [vmem:[%s439 + $0x70] sm:$0xf]
        %v471 = vld [vmem:[%s439 + $0x74] sm:$0xf]
        %v472 = vld [vmem:[%s439 + $0x78] sm:$0xf]
        %v473 = vld [vmem:[%s439 + $0x7c] sm:$0x3]
        %v474 = vld [vmem:[%s1] sm:$0xff]
        %v475 = vld [vmem:[%s1 + $0x8] sm:$0xff]
        %v476 = vld [vmem:[%s1 + $0x10] sm:$0xff]
        %v477 = vld [vmem:[%s1 + $0x18] sm:$0xff]
        %v478 = vld [vmem:[%s1 + $0x20] sm:$0xff]
        %v479 = vld [vmem:[%s1 + $0x28] sm:$0xff]
        %v480 = vld [vmem:[%s1 + $0x30] sm:$0xff]
        %v481 = vld [vmem:[%s1 + $0x38] sm:$0xff]
        %v482 = vld [vmem:[%s1 + $0x40] sm:$0xff]
        %v483 = vld [vmem:[%s1 + $0x48] sm:$0xff]
        %v484 = vld [vmem:[%s1 + $0x50] sm:$0xff]
        %v485 = vld [vmem:[%s1 + $0x58] sm:$0xff]
        %v486 = vld [vmem:[%s439 + $0x7c] sm:$0x7]
        %s487 = scalar_lea.vmem %s1, 96
        %v488 = vld [vmem:[%s487] sm:$0xff]
        %v489 = vld [vmem:[%s487 + $0x8] sm:$0xff]
        %v490 = vld [vmem:[%s487 + $0x10] sm:$0xff]
        %v491 = vld [vmem:[%s487 + $0x18] sm:$0xff]
        %v492 = vld [vmem:[%s487 + $0x20] sm:$0xff]
        %v493 = vld [vmem:[%s487 + $0x28] sm:$0xff]
        %v494 = vld [vmem:[%s487 + $0x30] sm:$0xff]
        %v495 = vld [vmem:[%s487 + $0x38] sm:$0xff]
        %v496 = vld [vmem:[%s487 + $0x40] sm:$0xff]
        %v497 = vld [vmem:[%s487 + $0x48] sm:$0xff]
        %v498 = vld [vmem:[%s487 + $0x50] sm:$0xff]
        %v499 = vld [vmem:[%s487 + $0x58] sm:$0xff]
        %v532 = vunpack.c.l.b16 %v442
        %v533 = vunpack.c.l.b16 %v443
        %v534 = vunpack.c.l.b16 %v444
        %v535 = vunpack.c.l.b16 %v445
        %v536 = vunpack.c.l.b16 %v446
        %v537 = vunpack.c.l.b16 %v447
        %v538 = vunpack.c.l.b16 %v448
        %v539 = vunpack.c.l.b16 %v449
        %v540 = vunpack.c.l.b16 %v450
        %v541 = vunpack.c.l.b16 %v451
        %v542 = vunpack.c.l.b16 %v452
        %v543 = vunpack.c.l.b16 %v453
        %v544 = vunpack.c.l.b16 %v454
        %v545 = vunpack.c.l.b16 %v455
        %v546 = vunpack.c.l.b16 %v456
        %v547 = vunpack.c.l.b16 %v457
        %v548 = vunpack.c.l.b16 %v458
        %v549 = vunpack.c.l.b16 %v459
        %v550 = vunpack.c.l.b16 %v460
        %v551 = vunpack.c.l.b16 %v461
        %v552 = vunpack.c.l.b16 %v462
        %v553 = vunpack.c.l.b16 %v463
        %v554 = vunpack.c.l.b16 %v464
        %v555 = vunpack.c.l.b16 %v465
        %v556 = vunpack.c.l.b16 %v466
        %v557 = vunpack.c.l.b16 %v467
        %v558 = vunpack.c.l.b16 %v468
        %v559 = vunpack.c.l.b16 %v469
        %v560 = vunpack.c.l.b16 %v470
        %v561 = vunpack.c.l.b16 %v471
        %v562 = vunpack.c.l.b16 %v472
        %v563 = vunpack.c.l.b16 %v486
        %v564 = vpack.c.b16 %v533, %v532
        %v565 = vpack.c.b16 %v535, %v534
        %v566 = vpack.c.b16 %v537, %v536
        %v567 = vpack.c.b16 %v539, %v538
        %v568 = vpack.c.b16 %v541, %v540
        %v569 = vpack.c.b16 %v543, %v542
        %v570 = vpack.c.b16 %v545, %v544
        %v571 = vpack.c.b16 %v547, %v546
        %v572 = vpack.c.b16 %v549, %v548
        %v573 = vpack.c.b16 %v551, %v550
        %v574 = vpack.c.b16 %v553, %v552
        %v575 = vpack.c.b16 %v555, %v554
        %v576 = vpack.c.b16 %v557, %v556
        %v577 = vpack.c.b16 %v559, %v558
        %v578 = vpack.c.b16 %v561, %v560
        %v579 = vpack.c.b16 %v563, %v562
        %vm580 = vsmask.f32 7424
        %v582 = vshrl.u32 %v564, 16
        %v584 = vshll.u32 %v564, 16
        %v586 = vrot.slane %v584, 1
        %v587 = vor.u32 %v582, %v586
        %v589 = vshll.u32 %v565, 16
        %v591 = vrot.slane %v589, 1
        %v592 = vsel %vm580, %v587, %v591
        %v593 = vshrl.u32 %v565, 16
        %v595 = vor.u32 %v593, %v591
        %v597 = vshll.u32 %v566, 16
        %v599 = vrot.slane %v597, 1
        %v600 = vsel %vm580, %v595, %v599
        %v601 = vshrl.u32 %v566, 16
        %v603 = vor.u32 %v601, %v599
        %v605 = vshll.u32 %v567, 16
        %v607 = vrot.slane %v605, 1
        %v608 = vsel %vm580, %v603, %v607
        %v609 = vshrl.u32 %v567, 16
        %v611 = vor.u32 %v609, %v607
        %v613 = vshll.u32 %v568, 16
        %v615 = vrot.slane %v613, 1
        %v616 = vsel %vm580, %v611, %v615
        %v617 = vshrl.u32 %v568, 16
        %v619 = vor.u32 %v617, %v615
        %v621 = vshll.u32 %v569, 16
        %v623 = vrot.slane %v621, 1
        %v624 = vsel %vm580, %v619, %v623
        %v625 = vshrl.u32 %v569, 16
        %v627 = vor.u32 %v625, %v623
        %v629 = vshll.u32 %v570, 16
        %v631 = vrot.slane %v629, 1
        %v632 = vsel %vm580, %v627, %v631
        %v633 = vshrl.u32 %v570, 16
        %v635 = vor.u32 %v633, %v631
        %v637 = vshll.u32 %v571, 16
        %v639 = vrot.slane %v637, 1
        %v640 = vsel %vm580, %v635, %v639
        %v641 = vshrl.u32 %v571, 16
        %v643 = vor.u32 %v641, %v639
        %v645 = vshll.u32 %v572, 16
        %v647 = vrot.slane %v645, 1
        %v648 = vsel %vm580, %v643, %v647
        %v649 = vshrl.u32 %v572, 16
        %v651 = vor.u32 %v649, %v647
        %v653 = vshll.u32 %v573, 16
        %v655 = vrot.slane %v653, 1
        %v656 = vsel %vm580, %v651, %v655
        %v657 = vshrl.u32 %v573, 16
        %v659 = vor.u32 %v657, %v655
        %v661 = vshll.u32 %v574, 16
        %v663 = vrot.slane %v661, 1
        %v664 = vsel %vm580, %v659, %v663
        %v665 = vshrl.u32 %v574, 16
        %v667 = vor.u32 %v665, %v663
        %v669 = vshll.u32 %v575, 16
        %v671 = vrot.slane %v669, 1
        %v672 = vsel %vm580, %v667, %v671
        %v673 = vshrl.u32 %v575, 16
        %v675 = vor.u32 %v673, %v671
        %v677 = vshll.u32 %v576, 16
        %v679 = vrot.slane %v677, 1
        %v680 = vsel %vm580, %v675, %v679
        %v681 = vshrl.u32 %v576, 16
        %v683 = vor.u32 %v681, %v679
        %v685 = vshll.u32 %v577, 16
        %v687 = vrot.slane %v685, 1
        %v688 = vsel %vm580, %v683, %v687
        %v689 = vshrl.u32 %v577, 16
        %v691 = vor.u32 %v689, %v687
        %v693 = vshll.u32 %v578, 16
        %v695 = vrot.slane %v693, 1
        %v696 = vsel %vm580, %v691, %v695
        %v697 = vshrl.u32 %v578, 16
        %v699 = vor.u32 %v697, %v695
        %v701 = vshll.u32 %v579, 16
        %v703 = vrot.slane %v701, 1
        %v704 = vsel %vm580, %v699, %v703
        %v705 = vshrl.u32 %v579, 16
        %v707 = vor.u32 %v705, %v703
        %v720 = vunpack.c.l.b16 %v488
        %v721 = vunpack.c.h.b16 %v488
        %v722 = vunpack.c.l.b16 %v489
        %v723 = vunpack.c.h.b16 %v489
        %v724 = vunpack.c.l.b16 %v490
        %v725 = vunpack.c.h.b16 %v490
        %v726 = vunpack.c.l.b16 %v491
        %v727 = vunpack.c.h.b16 %v491
        %v728 = vunpack.c.l.b16 %v492
        %v729 = vunpack.c.h.b16 %v492
        %v730 = vunpack.c.l.b16 %v493
        %v731 = vunpack.c.h.b16 %v493
        %v732 = vunpack.c.l.b16 %v494
        %v733 = vunpack.c.h.b16 %v494
        %v734 = vunpack.c.l.b16 %v495
        %v735 = vunpack.c.h.b16 %v495
        %v736 = vunpack.c.l.b16 %v496
        %v737 = vunpack.c.h.b16 %v496
        %v738 = vunpack.c.l.b16 %v497
        %v739 = vunpack.c.h.b16 %v497
        %v740 = vunpack.c.l.b16 %v498
        %v741 = vunpack.c.h.b16 %v498
        %v742 = vunpack.c.l.b16 %v499
        %v743 = vunpack.c.h.b16 %v499
        %v744 = vpack.c.b16 %v722, %v720
        %v745 = vpack.c.b16 %v723, %v721
        %v746 = vpack.c.b16 %v726, %v724
        %v747 = vpack.c.b16 %v727, %v725
        %v748 = vpack.c.b16 %v730, %v728
        %v749 = vpack.c.b16 %v731, %v729
        %v750 = vpack.c.b16 %v734, %v732
        %v751 = vpack.c.b16 %v735, %v733
        %v752 = vpack.c.b16 %v738, %v736
        %v753 = vpack.c.b16 %v739, %v737
        %v754 = vpack.c.b16 %v742, %v740
        %v755 = vpack.c.b16 %v743, %v741
        %vm768 = vcmask 785408
        %v770 = vsel %vm768, %v592, 0
        %v773 = vsel %vm768, %v600, 0
        %v776 = vsel %vm768, %v608, 0
        %v779 = vsel %vm768, %v616, 0
        %v782 = vsel %vm768, %v624, 0
        %v785 = vsel %vm768, %v632, 0
        %v788 = vsel %vm768, %v640, 0
        %v791 = vsel %vm768, %v648, 0
        %v794 = vsel %vm768, %v656, 0
        %v797 = vsel %vm768, %v664, 0
        %v800 = vsel %vm768, %v672, 0
        %v803 = vsel %vm768, %v680, 0
        %v806 = vsel %vm768, %v688, 0
        %v809 = vsel %vm768, %v696, 0
        %v812 = vsel %vm768, %v704, 0
        %v815 = vsel %vm768, %v707, 0
        %817 = vmatprep.subr.bf16.mxu0 %v745
        %818 = vmatpush1.bf16.msra.mxu0 %v744
        %819 = vmatprep.subr.bf16.mxu0 %v747
        %820 = vmatpush1.bf16.msra.mxu0 %v746
        %821 = vmatprep.subr.bf16.mxu0 %v749
        %822 = vmatpush1.bf16.msra.mxu0 %v748
        %823 = vmatprep.subr.bf16.mxu0 %v751
        %824 = vmatpush1.bf16.msra.mxu0 %v750
        %825 = vmatprep.subr.bf16.mxu0 %v753
        %826 = vmatpush1.bf16.msra.mxu0 %v752
        %827 = vmatprep.subr.bf16.mxu0 %v755
        %828 = vmatpush1.bf16.msra.mxu0 %v754
        %829 = vmatprep.subr.bf16.mxu0 0
        %830 = vmatpush1.bf16.msra.mxu0 0
        %831 = vmatprep.subr.bf16.mxu0 0
        %832 = vmatpush1.bf16.msra.mxu0 0
        %833 = vmatprep.subr.bf16.mxu0 0
        %834 = vmatpush1.bf16.msra.mxu0 0
        %835 = vmatprep.subr.bf16.mxu0 0
        %836 = vmatpush1.bf16.msra.mxu0 0
        %837 = vmatprep.subr.bf16.mxu0 0
        %838 = vmatpush1.bf16.msra.mxu0 0
        %839 = vmatprep.subr.bf16.mxu0 0
        %840 = vmatpush1.bf16.msra.mxu0 0
        %841 = vmatprep.subr.bf16.mxu0 0
        %842 = vmatpush1.bf16.msra.mxu0 0
        %843 = vmatprep.subr.bf16.mxu0 0
        %844 = vmatpush1.bf16.msra.mxu0 0
        %845 = vmatprep.subr.bf16.mxu0 0
        %846 = vmatpush1.bf16.msra.mxu0 0
        %847 = vmatprep.subr.bf16.mxu0 0
        %848 = vmatpush1.bf16.msra.mxu0 0
        %849 = vmatprep.mubr.bf16.mxu0 0
        %850 = vmatmul.mubr.bf16.gmra.mrb[0].mxu0 %v770
        %v851 = vpop.f32.mrb[0].mxu0
        %v852 = vadd.f32 0.0, %v851
        %v853 = vpop.f32.mrb[0].mxu0
        %v854 = vadd.f32 0.0, %v853
        %v855 = vpop.f32.mrb[0].mxu0
        %v856 = vadd.f32 0.0, %v855
        %v857 = vpop.f32.mrb[0].mxu0
        %v858 = vadd.f32 0.0, %v857
        %859 = vmatprep.mubr.bf16.mxu0 0
        %860 = vmatmul.mubr.bf16.gmra.mrb[0].mxu0 %v773
        %v861 = vpop.f32.mrb[0].mxu0
        %v862 = vadd.f32 0.0, %v861
        %v863 = vpop.f32.mrb[0].mxu0
        %v864 = vadd.f32 0.0, %v863
        %v865 = vpop.f32.mrb[0].mxu0
        %v866 = vadd.f32 0.0, %v865
        %v867 = vpop.f32.mrb[0].mxu0
        %v868 = vadd.f32 0.0, %v867
        %869 = vmatprep.mubr.bf16.mxu0 0
        %870 = vmatmul.mubr.bf16.gmra.mrb[0].mxu0 %v776
        %v871 = vpop.f32.mrb[0].mxu0
        %v872 = vadd.f32 0.0, %v871
        %v873 = vpop.f32.mrb[0].mxu0
        %v874 = vadd.f32 0.0, %v873
        %v875 = vpop.f32.mrb[0].mxu0
        %v876 = vadd.f32 0.0, %v875
        %v877 = vpop.f32.mrb[0].mxu0
        %v878 = vadd.f32 0.0, %v877
        %879 = vmatprep.mubr.bf16.mxu0 0
        %880 = vmatmul.mubr.bf16.gmra.mrb[0].mxu0 %v779
        %v881 = vpop.f32.mrb[0].mxu0
        %v882 = vadd.f32 0.0, %v881
        %v883 = vpop.f32.mrb[0].mxu0
        %v884 = vadd.f32 0.0, %v883
        %v885 = vpop.f32.mrb[0].mxu0
        %v886 = vadd.f32 0.0, %v885
        %v887 = vpop.f32.mrb[0].mxu0
        %v888 = vadd.f32 0.0, %v887
        %889 = vmatprep.mubr.bf16.mxu0 0
        %890 = vmatmul.mubr.bf16.gmra.mrb[0].mxu0 %v782
        %v891 = vpop.f32.mrb[0].mxu0
        %v892 = vadd.f32 0.0, %v891
        %v893 = vpop.f32.mrb[0].mxu0
        %v894 = vadd.f32 0.0, %v893
        %v895 = vpop.f32.mrb[0].mxu0
        %v896 = vadd.f32 0.0, %v895
        %v897 = vpop.f32.mrb[0].mxu0
        %v898 = vadd.f32 0.0, %v897
        %899 = vmatprep.mubr.bf16.mxu0 0
        %900 = vmatmul.mubr.bf16.gmra.mrb[0].mxu0 %v785
        %v901 = vpop.f32.mrb[0].mxu0
        %v902 = vadd.f32 0.0, %v901
        %v903 = vpop.f32.mrb[0].mxu0
        %v904 = vadd.f32 0.0, %v903
        %v905 = vpop.f32.mrb[0].mxu0
        %v906 = vadd.f32 0.0, %v905
        %v907 = vpop.f32.mrb[0].mxu0
        %v908 = vadd.f32 0.0, %v907
        %909 = vmatprep.mubr.bf16.mxu0 0
        %910 = vmatmul.mubr.bf16.gmra.mrb[0].mxu0 %v788
        %v911 = vpop.f32.mrb[0].mxu0
        %v912 = vadd.f32 0.0, %v911
        %v913 = vpop.f32.mrb[0].mxu0
        %v914 = vadd.f32 0.0, %v913
        %v915 = vpop.f32.mrb[0].mxu0
        %v916 = vadd.f32 0.0, %v915
        %v917 = vpop.f32.mrb[0].mxu0
        %v918 = vadd.f32 0.0, %v917
        %919 = vmatprep.mubr.bf16.mxu0 0
        %920 = vmatmul.mubr.bf16.gmra.mrb[0].mxu0 %v791
        %v921 = vpop.f32.mrb[0].mxu0
        %v922 = vadd.f32 0.0, %v921
        %v923 = vpop.f32.mrb[0].mxu0
        %v924 = vadd.f32 0.0, %v923
        %v925 = vpop.f32.mrb[0].mxu0
        %v926 = vadd.f32 0.0, %v925
        %v927 = vpop.f32.mrb[0].mxu0
        %v928 = vadd.f32 0.0, %v927
        %929 = vmatprep.mubr.bf16.mxu0 0
        %930 = vmatmul.mubr.bf16.gmra.mrb[0].mxu0 %v794
        %v931 = vpop.f32.mrb[0].mxu0
        %v932 = vadd.f32 0.0, %v931
        %v933 = vpop.f32.mrb[0].mxu0
        %v934 = vadd.f32 0.0, %v933
        %v935 = vpop.f32.mrb[0].mxu0
        %v936 = vadd.f32 0.0, %v935
        %v937 = vpop.f32.mrb[0].mxu0
        %v938 = vadd.f32 0.0, %v937
        %939 = vmatprep.mubr.bf16.mxu0 0
        %940 = vmatmul.mubr.bf16.gmra.mrb[0].mxu0 %v797
        %v941 = vpop.f32.mrb[0].mxu0
        %v942 = vadd.f32 0.0, %v941
        %v943 = vpop.f32.mrb[0].mxu0
        %v944 = vadd.f32 0.0, %v943
        %v945 = vpop.f32.mrb[0].mxu0
        %v946 = vadd.f32 0.0, %v945
        %v947 = vpop.f32.mrb[0].mxu0
        %v948 = vadd.f32 0.0, %v947
        %949 = vmatprep.mubr.bf16.mxu0 0
        %950 = vmatmul.mubr.bf16.gmra.mrb[0].mxu0 %v800
        %v951 = vpop.f32.mrb[0].mxu0
        %v952 = vadd.f32 0.0, %v951
        %v953 = vpop.f32.mrb[0].mxu0
        %v954 = vadd.f32 0.0, %v953
        %v955 = vpop.f32.mrb[0].mxu0
        %v956 = vadd.f32 0.0, %v955
        %v957 = vpop.f32.mrb[0].mxu0
        %v958 = vadd.f32 0.0, %v957
        %959 = vmatprep.mubr.bf16.mxu0 0
        %960 = vmatmul.mubr.bf16.gmra.mrb[0].mxu0 %v803
        %v961 = vpop.f32.mrb[0].mxu0
        %v962 = vadd.f32 0.0, %v961
        %v963 = vpop.f32.mrb[0].mxu0
        %v964 = vadd.f32 0.0, %v963
        %v965 = vpop.f32.mrb[0].mxu0
        %v966 = vadd.f32 0.0, %v965
        %v967 = vpop.f32.mrb[0].mxu0
        %v968 = vadd.f32 0.0, %v967
        %969 = vmatprep.mubr.bf16.mxu0 0
        %970 = vmatmul.mubr.bf16.gmra.mrb[0].mxu0 %v806
        %v971 = vpop.f32.mrb[0].mxu0
        %v972 = vadd.f32 0.0, %v971
        %v973 = vpop.f32.mrb[0].mxu0
        %v974 = vadd.f32 0.0, %v973
        %v975 = vpop.f32.mrb[0].mxu0
        %v976 = vadd.f32 0.0, %v975
        %v977 = vpop.f32.mrb[0].mxu0
        %v978 = vadd.f32 0.0, %v977
        %979 = vmatprep.mubr.bf16.mxu0 0
        %980 = vmatmul.mubr.bf16.gmra.mrb[0].mxu0 %v809
        %v981 = vpop.f32.mrb[0].mxu0
        %v982 = vadd.f32 0.0, %v981
        %v983 = vpop.f32.mrb[0].mxu0
        %v984 = vadd.f32 0.0, %v983
        %v985 = vpop.f32.mrb[0].mxu0
        %v986 = vadd.f32 0.0, %v985
        %v987 = vpop.f32.mrb[0].mxu0
        %v988 = vadd.f32 0.0, %v987
        %989 = vmatprep.mubr.bf16.mxu0 0
        %990 = vmatmul.mubr.bf16.gmra.mrb[0].mxu0 %v812
        %v991 = vpop.f32.mrb[0].mxu0
        %v992 = vadd.f32 0.0, %v991
        %v993 = vpop.f32.mrb[0].mxu0
        %v994 = vadd.f32 0.0, %v993
        %v995 = vpop.f32.mrb[0].mxu0
        %v996 = vadd.f32 0.0, %v995
        %v997 = vpop.f32.mrb[0].mxu0
        %v998 = vadd.f32 0.0, %v997
        %999 = vmatprep.mubr.bf16.mxu0 0
        %1000 = vmatmul.mubr.bf16.gmra.mrb[0].mxu0 %v815
        %v1001 = vpop.f32.mrb[0].mxu0
        %v1002 = vadd.f32 0.0, %v1001
        %v1003 = vpop.f32.mrb[0].mxu0
        %v1004 = vadd.f32 0.0, %v1003
        %v1005 = vpop.f32.mrb[0].mxu0
        %v1006 = vadd.f32 0.0, %v1005
        %v1007 = vpop.f32.mrb[0].mxu0
        %v1008 = vadd.f32 0.0, %v1007
        %1009 = vdwg.mxu0
        %v1011 = vunpack.c.l.b16 %v473
        %v1012 = vpack.c.b16 %v1011, %v562
        %v1025 = vunpack.c.l.b16 %v474
        %v1026 = vunpack.c.h.b16 %v474
        %v1027 = vunpack.c.l.b16 %v475
        %v1028 = vunpack.c.h.b16 %v475
        %v1029 = vunpack.c.l.b16 %v476
        %v1030 = vunpack.c.h.b16 %v476
        %v1031 = vunpack.c.l.b16 %v477
        %v1032 = vunpack.c.h.b16 %v477
        %v1033 = vunpack.c.l.b16 %v478
        %v1034 = vunpack.c.h.b16 %v478
        %v1035 = vunpack.c.l.b16 %v479
        %v1036 = vunpack.c.h.b16 %v479
        %v1037 = vunpack.c.l.b16 %v480
        %v1038 = vunpack.c.h.b16 %v480
        %v1039 = vunpack.c.l.b16 %v481
        %v1040 = vunpack.c.h.b16 %v481
        %v1041 = vunpack.c.l.b16 %v482
        %v1042 = vunpack.c.h.b16 %v482
        %v1043 = vunpack.c.l.b16 %v483
        %v1044 = vunpack.c.h.b16 %v483
        %v1045 = vunpack.c.l.b16 %v484
        %v1046 = vunpack.c.h.b16 %v484
        %v1047 = vunpack.c.l.b16 %v485
        %v1048 = vunpack.c.h.b16 %v485
        %v1049 = vpack.c.b16 %v1027, %v1025
        %v1050 = vpack.c.b16 %v1028, %v1026
        %v1051 = vpack.c.b16 %v1031, %v1029
        %v1052 = vpack.c.b16 %v1032, %v1030
        %v1053 = vpack.c.b16 %v1035, %v1033
        %v1054 = vpack.c.b16 %v1036, %v1034
        %v1055 = vpack.c.b16 %v1039, %v1037
        %v1056 = vpack.c.b16 %v1040, %v1038
        %v1057 = vpack.c.b16 %v1043, %v1041
        %v1058 = vpack.c.b16 %v1044, %v1042
        %v1059 = vpack.c.b16 %v1047, %v1045
        %v1060 = vpack.c.b16 %v1048, %v1046
        %v1073 = vsel %vm768, %v564, 0
        %v1075 = vsel %vm768, %v565, 0
        %v1077 = vsel %vm768, %v566, 0
        %v1079 = vsel %vm768, %v567, 0
        %v1081 = vsel %vm768, %v568, 0
        %v1083 = vsel %vm768, %v569, 0
        %v1085 = vsel %vm768, %v570, 0
        %v1087 = vsel %vm768, %v571, 0
        %v1089 = vsel %vm768, %v572, 0
        %v1091 = vsel %vm768, %v573, 0
        %v1093 = vsel %vm768, %v574, 0
        %v1095 = vsel %vm768, %v575, 0
        %v1097 = vsel %vm768, %v576, 0
        %v1099 = vsel %vm768, %v577, 0
        %v1101 = vsel %vm768, %v578, 0
        %v1104 = vsel %vm768, %v1012, 0
        %1106 = vmatprep.subr.bf16.mxu0 %v1050
        %1107 = vmatpush1.bf16.msra.mxu0 %v1049
        %1108 = vmatprep.subr.bf16.mxu0 %v1052
        %1109 = vmatpush1.bf16.msra.mxu0 %v1051
        %1110 = vmatprep.subr.bf16.mxu0 %v1054
        %1111 = vmatpush1.bf16.msra.mxu0 %v1053
        %1112 = vmatprep.subr.bf16.mxu0 %v1056
        %1113 = vmatpush1.bf16.msra.mxu0 %v1055
        %1114 = vmatprep.subr.bf16.mxu0 %v1058
        %1115 = vmatpush1.bf16.msra.mxu0 %v1057
        %1116 = vmatprep.subr.bf16.mxu0 %v1060
        %1117 = vmatpush1.bf16.msra.mxu0 %v1059
        %1118 = vmatprep.subr.bf16.mxu0 0
        %1119 = vmatpush1.bf16.msra.mxu0 0
        %1120 = vmatprep.subr.bf16.mxu0 0
        %1121 = vmatpush1.bf16.msra.mxu0 0
        %1122 = vmatprep.subr.bf16.mxu0 0
        %1123 = vmatpush1.bf16.msra.mxu0 0
        %1124 = vmatprep.subr.bf16.mxu0 0
        %1125 = vmatpush1.bf16.msra.mxu0 0
        %1126 = vmatprep.subr.bf16.mxu0 0
        %1127 = vmatpush1.bf16.msra.mxu0 0
        %1128 = vmatprep.subr.bf16.mxu0 0
        %1129 = vmatpush1.bf16.msra.mxu0 0
        %1130 = vmatprep.subr.bf16.mxu0 0
        %1131 = vmatpush1.bf16.msra.mxu0 0
        %1132 = vmatprep.subr.bf16.mxu0 0
        %1133 = vmatpush1.bf16.msra.mxu0 0
        %1134 = vmatprep.subr.bf16.mxu0 0
        %1135 = vmatpush1.bf16.msra.mxu0 0
        %1136 = vmatprep.subr.bf16.mxu0 0
        %1137 = vmatpush1.bf16.msra.mxu0 0
        %1138 = vmatprep.mubr.bf16.mxu0 0
        %1139 = vmatmul.mubr.bf16.gmra.mrb[0].mxu0 %v1073
        %v1140 = vpop.f32.mrb[0].mxu0
        %v1141 = vadd.f32 %v852, %v1140
        %v1142 = vpop.f32.mrb[0].mxu0
        %v1143 = vadd.f32 %v854, %v1142
        %v1144 = vpop.f32.mrb[0].mxu0
        %v1145 = vadd.f32 %v856, %v1144
        %v1146 = vpop.f32.mrb[0].mxu0
        %v1147 = vadd.f32 %v858, %v1146
        %1148 = vmatprep.mubr.bf16.mxu0 0
        %1149 = vmatmul.mubr.bf16.gmra.mrb[0].mxu0 %v1075
        %v1150 = vpop.f32.mrb[0].mxu0
        %v1151 = vadd.f32 %v862, %v1150
        %v1152 = vpop.f32.mrb[0].mxu0
        %v1153 = vadd.f32 %v864, %v1152
        %v1154 = vpop.f32.mrb[0].mxu0
        %v1155 = vadd.f32 %v866, %v1154
        %v1156 = vpop.f32.mrb[0].mxu0
        %v1157 = vadd.f32 %v868, %v1156
        %1158 = vmatprep.mubr.bf16.mxu0 0
        %1159 = vmatmul.mubr.bf16.gmra.mrb[0].mxu0 %v1077
        %v1160 = vpop.f32.mrb[0].mxu0
        %v1161 = vadd.f32 %v872, %v1160
        %v1162 = vpop.f32.mrb[0].mxu0
        %v1163 = vadd.f32 %v874, %v1162
        %v1164 = vpop.f32.mrb[0].mxu0
        %v1165 = vadd.f32 %v876, %v1164
        %v1166 = vpop.f32.mrb[0].mxu0
        %v1167 = vadd.f32 %v878, %v1166
        %1168 = vmatprep.mubr.bf16.mxu0 0
        %1169 = vmatmul.mubr.bf16.gmra.mrb[0].mxu0 %v1079
        %v1170 = vpop.f32.mrb[0].mxu0
        %v1171 = vadd.f32 %v882, %v1170
        %v1172 = vpop.f32.mrb[0].mxu0
        %v1173 = vadd.f32 %v884, %v1172
        %v1174 = vpop.f32.mrb[0].mxu0
        %v1175 = vadd.f32 %v886, %v1174
        %v1176 = vpop.f32.mrb[0].mxu0
        %v1177 = vadd.f32 %v888, %v1176
        %1178 = vmatprep.mubr.bf16.mxu0 0
        %1179 = vmatmul.mubr.bf16.gmra.mrb[0].mxu0 %v1081
        %v1180 = vpop.f32.mrb[0].mxu0
        %v1181 = vadd.f32 %v892, %v1180
        %v1182 = vpop.f32.mrb[0].mxu0
        %v1183 = vadd.f32 %v894, %v1182
        %v1184 = vpop.f32.mrb[0].mxu0
        %v1185 = vadd.f32 %v896, %v1184
        %v1186 = vpop.f32.mrb[0].mxu0
        %v1187 = vadd.f32 %v898, %v1186
        %1188 = vmatprep.mubr.bf16.mxu0 0
        %1189 = vmatmul.mubr.bf16.gmra.mrb[0].mxu0 %v1083
        %v1190 = vpop.f32.mrb[0].mxu0
        %v1191 = vadd.f32 %v902, %v1190
        %v1192 = vpop.f32.mrb[0].mxu0
        %v1193 = vadd.f32 %v904, %v1192
        %v1194 = vpop.f32.mrb[0].mxu0
        %v1195 = vadd.f32 %v906, %v1194
        %v1196 = vpop.f32.mrb[0].mxu0
        %v1197 = vadd.f32 %v908, %v1196
        %1198 = vmatprep.mubr.bf16.mxu0 0
        %1199 = vmatmul.mubr.bf16.gmra.mrb[0].mxu0 %v1085
        %v1200 = vpop.f32.mrb[0].mxu0
        %v1201 = vadd.f32 %v912, %v1200
        %v1202 = vpop.f32.mrb[0].mxu0
        %v1203 = vadd.f32 %v914, %v1202
        %v1204 = vpop.f32.mrb[0].mxu0
        %v1205 = vadd.f32 %v916, %v1204
        %v1206 = vpop.f32.mrb[0].mxu0
        %v1207 = vadd.f32 %v918, %v1206
        %1208 = vmatprep.mubr.bf16.mxu0 0
        %1209 = vmatmul.mubr.bf16.gmra.mrb[0].mxu0 %v1087
        %v1210 = vpop.f32.mrb[0].mxu0
        %v1211 = vadd.f32 %v922, %v1210
        %v1212 = vpop.f32.mrb[0].mxu0
        %v1213 = vadd.f32 %v924, %v1212
        %v1214 = vpop.f32.mrb[0].mxu0
        %v1215 = vadd.f32 %v926, %v1214
        %v1216 = vpop.f32.mrb[0].mxu0
        %v1217 = vadd.f32 %v928, %v1216
        %1218 = vmatprep.mubr.bf16.mxu0 0
        %1219 = vmatmul.mubr.bf16.gmra.mrb[0].mxu0 %v1089
        %v1220 = vpop.f32.mrb[0].mxu0
        %v1221 = vadd.f32 %v932, %v1220
        %v1222 = vpop.f32.mrb[0].mxu0
        %v1223 = vadd.f32 %v934, %v1222
        %v1224 = vpop.f32.mrb[0].mxu0
        %v1225 = vadd.f32 %v936, %v1224
        %v1226 = vpop.f32.mrb[0].mxu0
        %v1227 = vadd.f32 %v938, %v1226
        %1228 = vmatprep.mubr.bf16.mxu0 0
        %1229 = vmatmul.mubr.bf16.gmra.mrb[0].mxu0 %v1091
        %v1230 = vpop.f32.mrb[0].mxu0
        %v1231 = vadd.f32 %v942, %v1230
        %v1232 = vpop.f32.mrb[0].mxu0
        %v1233 = vadd.f32 %v944, %v1232
        %v1234 = vpop.f32.mrb[0].mxu0
        %v1235 = vadd.f32 %v946, %v1234
        %v1236 = vpop.f32.mrb[0].mxu0
        %v1237 = vadd.f32 %v948, %v1236
        %1238 = vmatprep.mubr.bf16.mxu0 0
        %1239 = vmatmul.mubr.bf16.gmra.mrb[0].mxu0 %v1093
        %v1240 = vpop.f32.mrb[0].mxu0
        %v1241 = vadd.f32 %v952, %v1240
        %v1242 = vpop.f32.mrb[0].mxu0
        %v1243 = vadd.f32 %v954, %v1242
        %v1244 = vpop.f32.mrb[0].mxu0
        %v1245 = vadd.f32 %v956, %v1244
        %v1246 = vpop.f32.mrb[0].mxu0
        %v1247 = vadd.f32 %v958, %v1246
        %1248 = vmatprep.mubr.bf16.mxu0 0
        %1249 = vmatmul.mubr.bf16.gmra.mrb[0].mxu0 %v1095
        %v1250 = vpop.f32.mrb[0].mxu0
        %v1251 = vadd.f32 %v962, %v1250
        %v1252 = vpop.f32.mrb[0].mxu0
        %v1253 = vadd.f32 %v964, %v1252
        %v1254 = vpop.f32.mrb[0].mxu0
        %v1255 = vadd.f32 %v966, %v1254
        %v1256 = vpop.f32.mrb[0].mxu0
        %v1257 = vadd.f32 %v968, %v1256
        %1258 = vmatprep.mubr.bf16.mxu0 0
        %1259 = vmatmul.mubr.bf16.gmra.mrb[0].mxu0 %v1097
        %v1260 = vpop.f32.mrb[0].mxu0
        %v1261 = vadd.f32 %v972, %v1260
        %v1262 = vpop.f32.mrb[0].mxu0
        %v1263 = vadd.f32 %v974, %v1262
        %v1264 = vpop.f32.mrb[0].mxu0
        %v1265 = vadd.f32 %v976, %v1264
        %v1266 = vpop.f32.mrb[0].mxu0
        %v1267 = vadd.f32 %v978, %v1266
        %1268 = vmatprep.mubr.bf16.mxu0 0
        %1269 = vmatmul.mubr.bf16.gmra.mrb[0].mxu0 %v1099
        %v1270 = vpop.f32.mrb[0].mxu0
        %v1271 = vadd.f32 %v982, %v1270
        %v1272 = vpop.f32.mrb[0].mxu0
        %v1273 = vadd.f32 %v984, %v1272
        %v1274 = vpop.f32.mrb[0].mxu0
        %v1275 = vadd.f32 %v986, %v1274
        %v1276 = vpop.f32.mrb[0].mxu0
        %v1277 = vadd.f32 %v988, %v1276
        %1278 = vmatprep.mubr.bf16.mxu0 0
        %1279 = vmatmul.mubr.bf16.gmra.mrb[0].mxu0 %v1101
        %v1280 = vpop.f32.mrb[0].mxu0
        %v1281 = vadd.f32 %v992, %v1280
        %v1282 = vpop.f32.mrb[0].mxu0
        %v1283 = vadd.f32 %v994, %v1282
        %v1284 = vpop.f32.mrb[0].mxu0
        %v1285 = vadd.f32 %v996, %v1284
        %v1286 = vpop.f32.mrb[0].mxu0
        %v1287 = vadd.f32 %v998, %v1286
        %1288 = vmatprep.mubr.bf16.mxu0 0
        %1289 = vmatmul.mubr.bf16.gmra.mrb[0].mxu0 %v1104
        %v1290 = vpop.f32.mrb[0].mxu0
        %v1291 = vadd.f32 %v1002, %v1290
        %v1292 = vpop.f32.mrb[0].mxu0
        %v1293 = vadd.f32 %v1004, %v1292
        %v1294 = vpop.f32.mrb[0].mxu0
        %v1295 = vadd.f32 %v1006, %v1294
        %v1296 = vpop.f32.mrb[0].mxu0
        %v1297 = vadd.f32 %v1008, %v1296
        %1298 = vdwg.mxu0
        %v1299 = vld [vmem:[%s439] sm:$0xe]
        %s1300 = scalar_lea.vmem %s1, 192
        %v1301 = vld [vmem:[%s1300] sm:$0xff]
        %v1302 = vld [vmem:[%s1300 + $0x8] sm:$0xff]
        %v1303 = vld [vmem:[%s1300 + $0x10] sm:$0xff]
        %v1304 = vld [vmem:[%s1300 + $0x18] sm:$0xff]
        %v1305 = vld [vmem:[%s1300 + $0x20] sm:$0xff]
        %v1306 = vld [vmem:[%s1300 + $0x28] sm:$0xff]
        %v1307 = vld [vmem:[%s1300 + $0x30] sm:$0xff]
        %v1308 = vld [vmem:[%s1300 + $0x38] sm:$0xff]
        %v1309 = vld [vmem:[%s1300 + $0x40] sm:$0xff]
        %v1310 = vld [vmem:[%s1300 + $0x48] sm:$0xff]
        %v1311 = vld [vmem:[%s1300 + $0x50] sm:$0xff]
        %v1312 = vld [vmem:[%s1300 + $0x58] sm:$0xff]
        %v1314 = vunpack.c.l.b16 %v1299
        %v1315 = vpack.c.b16 %v533, %v1314
        %vm1316 = vcmask 1046528
        %v1317 = vrot.slane %v1315, 1
        %v1318 = vrot.slane %v565, 1
        %v1319 = vsel %vm1316, %v1317, %v1318
        %v1320 = vrot.slane %v566, 1
        %v1321 = vsel %vm1316, %v1318, %v1320
        %v1322 = vrot.slane %v567, 1
        %v1323 = vsel %vm1316, %v1320, %v1322
        %v1324 = vrot.slane %v568, 1
        %v1325 = vsel %vm1316, %v1322, %v1324
        %v1326 = vrot.slane %v569, 1
        %v1327 = vsel %vm1316, %v1324, %v1326
        %v1328 = vrot.slane %v570, 1
        %v1329 = vsel %vm1316, %v1326, %v1328
        %v1330 = vrot.slane %v571, 1
        %v1331 = vsel %vm1316, %v1328, %v1330
        %v1332 = vrot.slane %v572, 1
        %v1333 = vsel %vm1316, %v1330, %v1332
        %v1334 = vrot.slane %v573, 1
        %v1335 = vsel %vm1316, %v1332, %v1334
        %v1336 = vrot.slane %v574, 1
        %v1337 = vsel %vm1316, %v1334, %v1336
        %v1338 = vrot.slane %v575, 1
        %v1339 = vsel %vm1316, %v1336, %v1338
        %v1340 = vrot.slane %v576, 1
        %v1341 = vsel %vm1316, %v1338, %v1340
        %v1342 = vrot.slane %v577, 1
        %v1343 = vsel %vm1316, %v1340, %v1342
        %v1344 = vrot.slane %v578, 1
        %v1345 = vsel %vm1316, %v1342, %v1344
        %v1346 = vrot.slane %v579, 1
        %v1347 = vsel %vm1316, %v1344, %v1346
        %v1360 = vunpack.c.l.b16 %v1301
        %v1361 = vunpack.c.h.b16 %v1301
        %v1362 = vunpack.c.l.b16 %v1302
        %v1363 = vunpack.c.h.b16 %v1302
        %v1364 = vunpack.c.l.b16 %v1303
        %v1365 = vunpack.c.h.b16 %v1303
        %v1366 = vunpack.c.l.b16 %v1304
        %v1367 = vunpack.c.h.b16 %v1304
        %v1368 = vunpack.c.l.b16 %v1305
        %v1369 = vunpack.c.h.b16 %v1305
        %v1370 = vunpack.c.l.b16 %v1306
        %v1371 = vunpack.c.h.b16 %v1306
        %v1372 = vunpack.c.l.b16 %v1307
        %v1373 = vunpack.c.h.b16 %v1307
        %v1374 = vunpack.c.l.b16 %v1308
        %v1375 = vunpack.c.h.b16 %v1308
        %v1376 = vunpack.c.l.b16 %v1309
        %v1377 = vunpack.c.h.b16 %v1309
        %v1378 = vunpack.c.l.b16 %v1310
        %v1379 = vunpack.c.h.b16 %v1310
        %v1380 = vunpack.c.l.b16 %v1311
        %v1381 = vunpack.c.h.b16 %v1311
        %v1382 = vunpack.c.l.b16 %v1312
        %v1383 = vunpack.c.h.b16 %v1312
        %v1384 = vpack.c.b16 %v1362, %v1360
        %v1385 = vpack.c.b16 %v1363, %v1361
        %v1386 = vpack.c.b16 %v1366, %v1364
        %v1387 = vpack.c.b16 %v1367, %v1365
        %v1388 = vpack.c.b16 %v1370, %v1368
        %v1389 = vpack.c.b16 %v1371, %v1369
        %v1390 = vpack.c.b16 %v1374, %v1372
        %v1391 = vpack.c.b16 %v1375, %v1373
        %v1392 = vpack.c.b16 %v1378, %v1376
        %v1393 = vpack.c.b16 %v1379, %v1377
        %v1394 = vpack.c.b16 %v1382, %v1380
        %v1395 = vpack.c.b16 %v1383, %v1381
        %v1409 = vsel %vm768, %v1319, 0
        %v1412 = vsel %vm768, %v1321, 0
        %v1415 = vsel %vm768, %v1323, 0
        %v1418 = vsel %vm768, %v1325, 0
        %v1421 = vsel %vm768, %v1327, 0
        %v1424 = vsel %vm768, %v1329, 0
        %v1427 = vsel %vm768, %v1331, 0
        %v1430 = vsel %vm768, %v1333, 0
        %v1433 = vsel %vm768, %v1335, 0
        %v1436 = vsel %vm768, %v1337, 0
        %v1439 = vsel %vm768, %v1339, 0
        %v1442 = vsel %vm768, %v1341, 0
        %v1445 = vsel %vm768, %v1343, 0
        %v1448 = vsel %vm768, %v1345, 0
        %v1451 = vsel %vm768, %v1347, 0
        %v1454 = vsel %vm768, %v1346, 0
        %1456 = vmatprep.subr.bf16.mxu0 %v1385
        %1457 = vmatpush1.bf16.msra.mxu0 %v1384
        %1458 = vmatprep.subr.bf16.mxu0 %v1387
        %1459 = vmatpush1.bf16.msra.mxu0 %v1386
        %1460 = vmatprep.subr.bf16.mxu0 %v1389
        %1461 = vmatpush1.bf16.msra.mxu0 %v1388
        %1462 = vmatprep.subr.bf16.mxu0 %v1391
        %1463 = vmatpush1.bf16.msra.mxu0 %v1390
        %1464 = vmatprep.subr.bf16.mxu0 %v1393
        %1465 = vmatpush1.bf16.msra.mxu0 %v1392
        %1466 = vmatprep.subr.bf16.mxu0 %v1395
        %1467 = vmatpush1.bf16.msra.mxu0 %v1394
        %1468 = vmatprep.subr.bf16.mxu0 0
        %1469 = vmatpush1.bf16.msra.mxu0 0
        %1470 = vmatprep.subr.bf16.mxu0 0
        %1471 = vmatpush1.bf16.msra.mxu0 0
        %1472 = vmatprep.subr.bf16.mxu0 0
        %1473 = vmatpush1.bf16.msra.mxu0 0
        %1474 = vmatprep.subr.bf16.mxu0 0
        %1475 = vmatpush1.bf16.msra.mxu0 0
        %1476 = vmatprep.subr.bf16.mxu0 0
        %1477 = vmatpush1.bf16.msra.mxu0 0
        %1478 = vmatprep.subr.bf16.mxu0 0
        %1479 = vmatpush1.bf16.msra.mxu0 0
        %1480 = vmatprep.subr.bf16.mxu0 0
        %1481 = vmatpush1.bf16.msra.mxu0 0
        %1482 = vmatprep.subr.bf16.mxu0 0
        %1483 = vmatpush1.bf16.msra.mxu0 0
        %1484 = vmatprep.subr.bf16.mxu0 0
        %1485 = vmatpush1.bf16.msra.mxu0 0
        %1486 = vmatprep.subr.bf16.mxu0 0
        %1487 = vmatpush1.bf16.msra.mxu0 0
        %1488 = vmatprep.mubr.bf16.mxu0 0
        %1489 = vmatmul.mubr.bf16.gmra.mrb[0].mxu0 %v1409
        %v1490 = vpop.f32.mrb[0].mxu0
        %v1491 = vadd.f32 0.0, %v1490
        %v1492 = vpop.f32.mrb[0].mxu0
        %v1493 = vadd.f32 0.0, %v1492
        %v1494 = vpop.f32.mrb[0].mxu0
        %v1495 = vadd.f32 0.0, %v1494
        %v1496 = vpop.f32.mrb[0].mxu0
        %v1497 = vadd.f32 0.0, %v1496
        %1498 = vmatprep.mubr.bf16.mxu0 0
        %1499 = vmatmul.mubr.bf16.gmra.mrb[0].mxu0 %v1412
        %v1500 = vpop.f32.mrb[0].mxu0
        %v1501 = vadd.f32 0.0, %v1500
        %v1502 = vpop.f32.mrb[0].mxu0
        %v1503 = vadd.f32 0.0, %v1502
        %v1504 = vpop.f32.mrb[0].mxu0
        %v1505 = vadd.f32 0.0, %v1504
        %v1506 = vpop.f32.mrb[0].mxu0
        %v1507 = vadd.f32 0.0, %v1506
        %1508 = vmatprep.mubr.bf16.mxu0 0
        %1509 = vmatmul.mubr.bf16.gmra.mrb[0].mxu0 %v1415
        %v1510 = vpop.f32.mrb[0].mxu0
        %v1511 = vadd.f32 0.0, %v1510
        %v1512 = vpop.f32.mrb[0].mxu0
        %v1513 = vadd.f32 0.0, %v1512
        %v1514 = vpop.f32.mrb[0].mxu0
        %v1515 = vadd.f32 0.0, %v1514
        %v1516 = vpop.f32.mrb[0].mxu0
        %v1517 = vadd.f32 0.0, %v1516
        %1518 = vmatprep.mubr.bf16.mxu0 0
        %1519 = vmatmul.mubr.bf16.gmra.mrb[0].mxu0 %v1418
        %v1520 = vpop.f32.mrb[0].mxu0
        %v1521 = vadd.f32 0.0, %v1520
        %v1522 = vpop.f32.mrb[0].mxu0
        %v1523 = vadd.f32 0.0, %v1522
        %v1524 = vpop.f32.mrb[0].mxu0
        %v1525 = vadd.f32 0.0, %v1524
        %v1526 = vpop.f32.mrb[0].mxu0
        %v1527 = vadd.f32 0.0, %v1526
        %1528 = vmatprep.mubr.bf16.mxu0 0
        %1529 = vmatmul.mubr.bf16.gmra.mrb[0].mxu0 %v1421
        %v1530 = vpop.f32.mrb[0].mxu0
        %v1531 = vadd.f32 0.0, %v1530
        %v1532 = vpop.f32.mrb[0].mxu0
        %v1533 = vadd.f32 0.0, %v1532
        %v1534 = vpop.f32.mrb[0].mxu0
        %v1535 = vadd.f32 0.0, %v1534
        %v1536 = vpop.f32.mrb[0].mxu0
        %v1537 = vadd.f32 0.0, %v1536
        %1538 = vmatprep.mubr.bf16.mxu0 0
        %1539 = vmatmul.mubr.bf16.gmra.mrb[0].mxu0 %v1424
        %v1540 = vpop.f32.mrb[0].mxu0
        %v1541 = vadd.f32 0.0, %v1540
        %v1542 = vpop.f32.mrb[0].mxu0
        %v1543 = vadd.f32 0.0, %v1542
        %v1544 = vpop.f32.mrb[0].mxu0
        %v1545 = vadd.f32 0.0, %v1544
        %v1546 = vpop.f32.mrb[0].mxu0
        %v1547 = vadd.f32 0.0, %v1546
        %1548 = vmatprep.mubr.bf16.mxu0 0
        %1549 = vmatmul.mubr.bf16.gmra.mrb[0].mxu0 %v1427
        %v1550 = vpop.f32.mrb[0].mxu0
        %v1551 = vadd.f32 0.0, %v1550
        %v1552 = vpop.f32.mrb[0].mxu0
        %v1553 = vadd.f32 0.0, %v1552
        %v1554 = vpop.f32.mrb[0].mxu0
        %v1555 = vadd.f32 0.0, %v1554
        %v1556 = vpop.f32.mrb[0].mxu0
        %v1557 = vadd.f32 0.0, %v1556
        %1558 = vmatprep.mubr.bf16.mxu0 0
        %1559 = vmatmul.mubr.bf16.gmra.mrb[0].mxu0 %v1430
        %v1560 = vpop.f32.mrb[0].mxu0
        %v1561 = vadd.f32 0.0, %v1560
        %v1562 = vpop.f32.mrb[0].mxu0
        %v1563 = vadd.f32 0.0, %v1562
        %v1564 = vpop.f32.mrb[0].mxu0
        %v1565 = vadd.f32 0.0, %v1564
        %v1566 = vpop.f32.mrb[0].mxu0
        %v1567 = vadd.f32 0.0, %v1566
        %1568 = vmatprep.mubr.bf16.mxu0 0
        %1569 = vmatmul.mubr.bf16.gmra.mrb[0].mxu0 %v1433
        %v1570 = vpop.f32.mrb[0].mxu0
        %v1571 = vadd.f32 0.0, %v1570
        %v1572 = vpop.f32.mrb[0].mxu0
        %v1573 = vadd.f32 0.0, %v1572
        %v1574 = vpop.f32.mrb[0].mxu0
        %v1575 = vadd.f32 0.0, %v1574
        %v1576 = vpop.f32.mrb[0].mxu0
        %v1577 = vadd.f32 0.0, %v1576
        %1578 = vmatprep.mubr.bf16.mxu0 0
        %1579 = vmatmul.mubr.bf16.gmra.mrb[0].mxu0 %v1436
        %v1580 = vpop.f32.mrb[0].mxu0
        %v1581 = vadd.f32 0.0, %v1580
        %v1582 = vpop.f32.mrb[0].mxu0
        %v1583 = vadd.f32 0.0, %v1582
        %v1584 = vpop.f32.mrb[0].mxu0
        %v1585 = vadd.f32 0.0, %v1584
        %v1586 = vpop.f32.mrb[0].mxu0
        %v1587 = vadd.f32 0.0, %v1586
        %1588 = vmatprep.mubr.bf16.mxu0 0
        %1589 = vmatmul.mubr.bf16.gmra.mrb[0].mxu0 %v1439
        %v1590 = vpop.f32.mrb[0].mxu0
        %v1591 = vadd.f32 0.0, %v1590
        %v1592 = vpop.f32.mrb[0].mxu0
        %v1593 = vadd.f32 0.0, %v1592
        %v1594 = vpop.f32.mrb[0].mxu0
        %v1595 = vadd.f32 0.0, %v1594
        %v1596 = vpop.f32.mrb[0].mxu0
        %v1597 = vadd.f32 0.0, %v1596
        %1598 = vmatprep.mubr.bf16.mxu0 0
        %1599 = vmatmul.mubr.bf16.gmra.mrb[0].mxu0 %v1442
        %v1600 = vpop.f32.mrb[0].mxu0
        %v1601 = vadd.f32 0.0, %v1600
        %v1602 = vpop.f32.mrb[0].mxu0
        %v1603 = vadd.f32 0.0, %v1602
        %v1604 = vpop.f32.mrb[0].mxu0
        %v1605 = vadd.f32 0.0, %v1604
        %v1606 = vpop.f32.mrb[0].mxu0
        %v1607 = vadd.f32 0.0, %v1606
        %1608 = vmatprep.mubr.bf16.mxu0 0
        %1609 = vmatmul.mubr.bf16.gmra.mrb[0].mxu0 %v1445
        %v1610 = vpop.f32.mrb[0].mxu0
        %v1611 = vadd.f32 0.0, %v1610
        %v1612 = vpop.f32.mrb[0].mxu0
        %v1613 = vadd.f32 0.0, %v1612
        %v1614 = vpop.f32.mrb[0].mxu0
        %v1615 = vadd.f32 0.0, %v1614
        %v1616 = vpop.f32.mrb[0].mxu0
        %v1617 = vadd.f32 0.0, %v1616
        %1618 = vmatprep.mubr.bf16.mxu0 0
        %1619 = vmatmul.mubr.bf16.gmra.mrb[0].mxu0 %v1448
        %v1620 = vpop.f32.mrb[0].mxu0
        %v1621 = vadd.f32 0.0, %v1620
        %v1622 = vpop.f32.mrb[0].mxu0
        %v1623 = vadd.f32 0.0, %v1622
        %v1624 = vpop.f32.mrb[0].mxu0
        %v1625 = vadd.f32 0.0, %v1624
        %v1626 = vpop.f32.mrb[0].mxu0
        %v1627 = vadd.f32 0.0, %v1626
        %1628 = vmatprep.mubr.bf16.mxu0 0
        %1629 = vmatmul.mubr.bf16.gmra.mrb[0].mxu0 %v1451
        %v1630 = vpop.f32.mrb[0].mxu0
        %v1631 = vadd.f32 0.0, %v1630
        %v1632 = vpop.f32.mrb[0].mxu0
        %v1633 = vadd.f32 0.0, %v1632
        %v1634 = vpop.f32.mrb[0].mxu0
        %v1635 = vadd.f32 0.0, %v1634
        %v1636 = vpop.f32.mrb[0].mxu0
        %v1637 = vadd.f32 0.0, %v1636
        %1638 = vmatprep.mubr.bf16.mxu0 0
        %1639 = vmatmul.mubr.bf16.gmra.mrb[0].mxu0 %v1454
        %v1640 = vpop.f32.mrb[0].mxu0
        %v1641 = vadd.f32 0.0, %v1640
        %v1642 = vpop.f32.mrb[0].mxu0
        %v1643 = vadd.f32 0.0, %v1642
        %v1644 = vpop.f32.mrb[0].mxu0
        %v1645 = vadd.f32 0.0, %v1644
        %v1646 = vpop.f32.mrb[0].mxu0
        %v1647 = vadd.f32 0.0, %v1646
        %1648 = vdwg.mxu0
        %v1649 = vadd.f32 %v1141, %v1491
        %v1650 = vadd.f32 %v1143, %v1493
        %v1651 = vadd.f32 %v1145, %v1495
        %v1652 = vadd.f32 %v1147, %v1497
        %v1653 = vadd.f32 %v1151, %v1501
        %v1654 = vadd.f32 %v1153, %v1503
        %v1655 = vadd.f32 %v1155, %v1505
        %v1656 = vadd.f32 %v1157, %v1507
        %v1657 = vadd.f32 %v1161, %v1511
        %v1658 = vadd.f32 %v1163, %v1513
        %v1659 = vadd.f32 %v1165, %v1515
        %v1660 = vadd.f32 %v1167, %v1517
        %v1661 = vadd.f32 %v1171, %v1521
        %v1662 = vadd.f32 %v1173, %v1523
        %v1663 = vadd.f32 %v1175, %v1525
        %v1664 = vadd.f32 %v1177, %v1527
        %v1665 = vadd.f32 %v1181, %v1531
        %v1666 = vadd.f32 %v1183, %v1533
        %v1667 = vadd.f32 %v1185, %v1535
        %v1668 = vadd.f32 %v1187, %v1537
        %v1669 = vadd.f32 %v1191, %v1541
        %v1670 = vadd.f32 %v1193, %v1543
        %v1671 = vadd.f32 %v1195, %v1545
        %v1672 = vadd.f32 %v1197, %v1547
        %v1673 = vadd.f32 %v1201, %v1551
        %v1674 = vadd.f32 %v1203, %v1553
        %v1675 = vadd.f32 %v1205, %v1555
        %v1676 = vadd.f32 %v1207, %v1557
        %v1677 = vadd.f32 %v1211, %v1561
        %v1678 = vadd.f32 %v1213, %v1563
        %v1679 = vadd.f32 %v1215, %v1565
        %v1680 = vadd.f32 %v1217, %v1567
        %v1681 = vadd.f32 %v1221, %v1571
        %v1682 = vadd.f32 %v1223, %v1573
        %v1683 = vadd.f32 %v1225, %v1575
        %v1684 = vadd.f32 %v1227, %v1577
        %v1685 = vadd.f32 %v1231, %v1581
        %v1686 = vadd.f32 %v1233, %v1583
        %v1687 = vadd.f32 %v1235, %v1585
        %v1688 = vadd.f32 %v1237, %v1587
        %v1689 = vadd.f32 %v1241, %v1591
        %v1690 = vadd.f32 %v1243, %v1593
        %v1691 = vadd.f32 %v1245, %v1595
        %v1692 = vadd.f32 %v1247, %v1597
        %v1693 = vadd.f32 %v1251, %v1601
        %v1694 = vadd.f32 %v1253, %v1603
        %v1695 = vadd.f32 %v1255, %v1605
        %v1696 = vadd.f32 %v1257, %v1607
        %v1697 = vadd.f32 %v1261, %v1611
        %v1698 = vadd.f32 %v1263, %v1613
        %v1699 = vadd.f32 %v1265, %v1615
        %v1700 = vadd.f32 %v1267, %v1617
        %v1701 = vadd.f32 %v1271, %v1621
        %v1702 = vadd.f32 %v1273, %v1623
        %v1703 = vadd.f32 %v1275, %v1625
        %v1704 = vadd.f32 %v1277, %v1627
        %v1705 = vadd.f32 %v1281, %v1631
        %v1706 = vadd.f32 %v1283, %v1633
        %v1707 = vadd.f32 %v1285, %v1635
        %v1708 = vadd.f32 %v1287, %v1637
        %v1709 = vadd.f32 %v1291, %v1641
        %v1710 = vadd.f32 %v1293, %v1643
        %v1711 = vadd.f32 %v1295, %v1645
        %v1712 = vadd.f32 %v1297, %v1647
        %v1713 = vld [vmem:[%s439 + $0x7c] sm:$0xf]
        %s1714 = scalar_lea.vmem %s1, 288
        %v1715 = vld [vmem:[%s1714] sm:$0xff]
        %v1716 = vld [vmem:[%s1714 + $0x8] sm:$0xff]
        %v1717 = vld [vmem:[%s1714 + $0x10] sm:$0xff]
        %v1718 = vld [vmem:[%s1714 + $0x18] sm:$0xff]
        %v1719 = vld [vmem:[%s1714 + $0x20] sm:$0xff]
        %v1720 = vld [vmem:[%s1714 + $0x28] sm:$0xff]
        %v1721 = vld [vmem:[%s1714 + $0x30] sm:$0xff]
        %v1722 = vld [vmem:[%s1714 + $0x38] sm:$0xff]
        %v1723 = vld [vmem:[%s1714 + $0x40] sm:$0xff]
        %v1724 = vld [vmem:[%s1714 + $0x48] sm:$0xff]
        %v1725 = vld [vmem:[%s1714 + $0x50] sm:$0xff]
        %v1726 = vld [vmem:[%s1714 + $0x58] sm:$0xff]
        %v1728 = vunpack.c.l.b16 %v1713
        %v1729 = vpack.c.b16 %v1728, %v562
        %vm1730 = vsmask.f32 6400
        %v1732 = vshrl.u32 %v1315, 16
        %v1734 = vrot.slane %v1732, 1
        %v1735 = vshll.u32 %v1315, 16
        %v1737 = vrot.slane %v1735, 2
        %v1738 = vor.u32 %v1734, %v1737
        %v1739 = vrot.slane %v593, 1
        %v1740 = vrot.slane %v589, 2
        %v1741 = vor.u32 %v1739, %v1740
        %v1742 = vsel %vm1730, %v1738, %v1741
        %v1743 = vrot.slane %v601, 1
        %v1744 = vrot.slane %v597, 2
        %v1745 = vor.u32 %v1743, %v1744
        %v1746 = vsel %vm1730, %v1741, %v1745
        %v1747 = vrot.slane %v609, 1
        %v1748 = vrot.slane %v605, 2
        %v1749 = vor.u32 %v1747, %v1748
        %v1750 = vsel %vm1730, %v1745, %v1749
        %v1751 = vrot.slane %v617, 1
        %v1752 = vrot.slane %v613, 2
        %v1753 = vor.u32 %v1751, %v1752
        %v1754 = vsel %vm1730, %v1749, %v1753
        %v1755 = vrot.slane %v625, 1
        %v1756 = vrot.slane %v621, 2
        %v1757 = vor.u32 %v1755, %v1756
        %v1758 = vsel %vm1730, %v1753, %v1757
        %v1759 = vrot.slane %v633, 1
        %v1760 = vrot.slane %v629, 2
        %v1761 = vor.u32 %v1759, %v1760
        %v1762 = vsel %vm1730, %v1757, %v1761
        %v1763 = vrot.slane %v641, 1
        %v1764 = vrot.slane %v637, 2
        %v1765 = vor.u32 %v1763, %v1764
        %v1766 = vsel %vm1730, %v1761, %v1765
        %v1767 = vrot.slane %v649, 1
        %v1768 = vrot.slane %v645, 2
        %v1769 = vor.u32 %v1767, %v1768
        %v1770 = vsel %vm1730, %v1765, %v1769
        %v1771 = vrot.slane %v657, 1
        %v1772 = vrot.slane %v653, 2
        %v1773 = vor.u32 %v1771, %v1772
        %v1774 = vsel %vm1730, %v1769, %v1773
        %v1775 = vrot.slane %v665, 1
        %v1776 = vrot.slane %v661, 2
        %v1777 = vor.u32 %v1775, %v1776
        %v1778 = vsel %vm1730, %v1773, %v1777
        %v1779 = vrot.slane %v673, 1
        %v1780 = vrot.slane %v669, 2
        %v1781 = vor.u32 %v1779, %v1780
        %v1782 = vsel %vm1730, %v1777, %v1781
        %v1783 = vrot.slane %v681, 1
        %v1784 = vrot.slane %v677, 2
        %v1785 = vor.u32 %v1783, %v1784
        %v1786 = vsel %vm1730, %v1781, %v1785
        %v1787 = vrot.slane %v689, 1
        %v1788 = vrot.slane %v685, 2
        %v1789 = vor.u32 %v1787, %v1788
        %v1790 = vsel %vm1730, %v1785, %v1789
        %v1791 = vrot.slane %v697, 1
        %v1792 = vrot.slane %v693, 2
        %v1793 = vor.u32 %v1791, %v1792
        %v1794 = vsel %vm1730, %v1789, %v1793
        %v1796 = vshrl.u32 %v1729, 16
        %v1798 = vrot.slane %v1796, 1
        %v1799 = vshll.u32 %v1729, 16
        %v1801 = vrot.slane %v1799, 2
        %v1802 = vor.u32 %v1798, %v1801
        %v1803 = vsel %vm1730, %v1793, %v1802
        %v1816 = vunpack.c.l.b16 %v1715
        %v1817 = vunpack.c.h.b16 %v1715
        %v1818 = vunpack.c.l.b16 %v1716
        %v1819 = vunpack.c.h.b16 %v1716
        %v1820 = vunpack.c.l.b16 %v1717
        %v1821 = vunpack.c.h.b16 %v1717
        %v1822 = vunpack.c.l.b16 %v1718
        %v1823 = vunpack.c.h.b16 %v1718
        %v1824 = vunpack.c.l.b16 %v1719
        %v1825 = vunpack.c.h.b16 %v1719
        %v1826 = vunpack.c.l.b16 %v1720
        %v1827 = vunpack.c.h.b16 %v1720
        %v1828 = vunpack.c.l.b16 %v1721
        %v1829 = vunpack.c.h.b16 %v1721
        %v1830 = vunpack.c.l.b16 %v1722
        %v1831 = vunpack.c.h.b16 %v1722
        %v1832 = vunpack.c.l.b16 %v1723
        %v1833 = vunpack.c.h.b16 %v1723
        %v1834 = vunpack.c.l.b16 %v1724
        %v1835 = vunpack.c.h.b16 %v1724
        %v1836 = vunpack.c.l.b16 %v1725
        %v1837 = vunpack.c.h.b16 %v1725
        %v1838 = vunpack.c.l.b16 %v1726
        %v1839 = vunpack.c.h.b16 %v1726
        %v1840 = vpack.c.b16 %v1818, %v1816
        %v1841 = vpack.c.b16 %v1819, %v1817
        %v1842 = vpack.c.b16 %v1822, %v1820
        %v1843 = vpack.c.b16 %v1823, %v1821
        %v1844 = vpack.c.b16 %v1826, %v1824
        %v1845 = vpack.c.b16 %v1827, %v1825
        %v1846 = vpack.c.b16 %v1830, %v1828
        %v1847 = vpack.c.b16 %v1831, %v1829
        %v1848 = vpack.c.b16 %v1834, %v1832
        %v1849 = vpack.c.b16 %v1835, %v1833
        %v1850 = vpack.c.b16 %v1838, %v1836
        %v1851 = vpack.c.b16 %v1839, %v1837
        %v1865 = vsel %vm768, %v1742, 0
        %v1868 = vsel %vm768, %v1746, 0
        %v1871 = vsel %vm768, %v1750, 0
        %v1874 = vsel %vm768, %v1754, 0
        %v1877 = vsel %vm768, %v1758, 0
        %v1880 = vsel %vm768, %v1762, 0
        %v1883 = vsel %vm768, %v1766, 0
        %v1886 = vsel %vm768, %v1770, 0
        %v1889 = vsel %vm768, %v1774, 0
        %v1892 = vsel %vm768, %v1778, 0
        %v1895 = vsel %vm768, %v1782, 0
        %v1898 = vsel %vm768, %v1786, 0
        %v1901 = vsel %vm768, %v1790, 0
        %v1904 = vsel %vm768, %v1794, 0
        %v1907 = vsel %vm768, %v1803, 0
        %v1910 = vsel %vm768, %v1802, 0
        %1912 = vmatprep.subr.bf16.mxu0 %v1841
        %1913 = vmatpush1.bf16.msra.mxu0 %v1840
        %1914 = vmatprep.subr.bf16.mxu0 %v1843
        %1915 = vmatpush1.bf16.msra.mxu0 %v1842
        %1916 = vmatprep.subr.bf16.mxu0 %v1845
        %1917 = vmatpush1.bf16.msra.mxu0 %v1844
        %1918 = vmatprep.subr.bf16.mxu0 %v1847
        %1919 = vmatpush1.bf16.msra.mxu0 %v1846
        %1920 = vmatprep.subr.bf16.mxu0 %v1849
        %1921 = vmatpush1.bf16.msra.mxu0 %v1848
        %1922 = vmatprep.subr.bf16.mxu0 %v1851
        %1923 = vmatpush1.bf16.msra.mxu0 %v1850
        %1924 = vmatprep.subr.bf16.mxu0 0
        %1925 = vmatpush1.bf16.msra.mxu0 0
        %1926 = vmatprep.subr.bf16.mxu0 0
        %1927 = vmatpush1.bf16.msra.mxu0 0
        %1928 = vmatprep.subr.bf16.mxu0 0
        %1929 = vmatpush1.bf16.msra.mxu0 0
        %1930 = vmatprep.subr.bf16.mxu0 0
        %1931 = vmatpush1.bf16.msra.mxu0 0
        %1932 = vmatprep.subr.bf16.mxu0 0
        %1933 = vmatpush1.bf16.msra.mxu0 0
        %1934 = vmatprep.subr.bf16.mxu0 0
        %1935 = vmatpush1.bf16.msra.mxu0 0
        %1936 = vmatprep.subr.bf16.mxu0 0
        %1937 = vmatpush1.bf16.msra.mxu0 0
        %1938 = vmatprep.subr.bf16.mxu0 0
        %1939 = vmatpush1.bf16.msra.mxu0 0
        %1940 = vmatprep.subr.bf16.mxu0 0
        %1941 = vmatpush1.bf16.msra.mxu0 0
        %1942 = vmatprep.subr.bf16.mxu0 0
        %1943 = vmatpush1.bf16.msra.mxu0 0
        %1944 = vmatprep.mubr.bf16.mxu0 0
        %1945 = vmatmul.mubr.bf16.gmra.mrb[0].mxu0 %v1865
        %v1946 = vpop.f32.mrb[0].mxu0
        %v1947 = vadd.f32 0.0, %v1946
        %v1948 = vpop.f32.mrb[0].mxu0
        %v1949 = vadd.f32 0.0, %v1948
        %v1950 = vpop.f32.mrb[0].mxu0
        %v1951 = vadd.f32 0.0, %v1950
        %v1952 = vpop.f32.mrb[0].mxu0
        %v1953 = vadd.f32 0.0, %v1952
        %1954 = vmatprep.mubr.bf16.mxu0 0
        %1955 = vmatmul.mubr.bf16.gmra.mrb[0].mxu0 %v1868
        %v1956 = vpop.f32.mrb[0].mxu0
        %v1957 = vadd.f32 0.0, %v1956
        %v1958 = vpop.f32.mrb[0].mxu0
        %v1959 = vadd.f32 0.0, %v1958
        %v1960 = vpop.f32.mrb[0].mxu0
        %v1961 = vadd.f32 0.0, %v1960
        %v1962 = vpop.f32.mrb[0].mxu0
        %v1963 = vadd.f32 0.0, %v1962
        %1964 = vmatprep.mubr.bf16.mxu0 0
        %1965 = vmatmul.mubr.bf16.gmra.mrb[0].mxu0 %v1871
        %v1966 = vpop.f32.mrb[0].mxu0
        %v1967 = vadd.f32 0.0, %v1966
        %v1968 = vpop.f32.mrb[0].mxu0
        %v1969 = vadd.f32 0.0, %v1968
        %v1970 = vpop.f32.mrb[0].mxu0
        %v1971 = vadd.f32 0.0, %v1970
        %v1972 = vpop.f32.mrb[0].mxu0
        %v1973 = vadd.f32 0.0, %v1972
        %1974 = vmatprep.mubr.bf16.mxu0 0
        %1975 = vmatmul.mubr.bf16.gmra.mrb[0].mxu0 %v1874
        %v1976 = vpop.f32.mrb[0].mxu0
        %v1977 = vadd.f32 0.0, %v1976
        %v1978 = vpop.f32.mrb[0].mxu0
        %v1979 = vadd.f32 0.0, %v1978
        %v1980 = vpop.f32.mrb[0].mxu0
        %v1981 = vadd.f32 0.0, %v1980
        %v1982 = vpop.f32.mrb[0].mxu0
        %v1983 = vadd.f32 0.0, %v1982
        %1984 = vmatprep.mubr.bf16.mxu0 0
        %1985 = vmatmul.mubr.bf16.gmra.mrb[0].mxu0 %v1877
        %v1986 = vpop.f32.mrb[0].mxu0
        %v1987 = vadd.f32 0.0, %v1986
        %v1988 = vpop.f32.mrb[0].mxu0
        %v1989 = vadd.f32 0.0, %v1988
        %v1990 = vpop.f32.mrb[0].mxu0
        %v1991 = vadd.f32 0.0, %v1990
        %v1992 = vpop.f32.mrb[0].mxu0
        %v1993 = vadd.f32 0.0, %v1992
        %1994 = vmatprep.mubr.bf16.mxu0 0
        %1995 = vmatmul.mubr.bf16.gmra.mrb[0].mxu0 %v1880
        %v1996 = vpop.f32.mrb[0].mxu0
        %v1997 = vadd.f32 0.0, %v1996
        %v1998 = vpop.f32.mrb[0].mxu0
        %v1999 = vadd.f32 0.0, %v1998
        %v2000 = vpop.f32.mrb[0].mxu0
        %v2001 = vadd.f32 0.0, %v2000
        %v2002 = vpop.f32.mrb[0].mxu0
        %v2003 = vadd.f32 0.0, %v2002
        %2004 = vmatprep.mubr.bf16.mxu0 0
        %2005 = vmatmul.mubr.bf16.gmra.mrb[0].mxu0 %v1883
        %v2006 = vpop.f32.mrb[0].mxu0
        %v2007 = vadd.f32 0.0, %v2006
        %v2008 = vpop.f32.mrb[0].mxu0
        %v2009 = vadd.f32 0.0, %v2008
        %v2010 = vpop.f32.mrb[0].mxu0
        %v2011 = vadd.f32 0.0, %v2010
        %v2012 = vpop.f32.mrb[0].mxu0
        %v2013 = vadd.f32 0.0, %v2012
        %2014 = vmatprep.mubr.bf16.mxu0 0
        %2015 = vmatmul.mubr.bf16.gmra.mrb[0].mxu0 %v1886
        %v2016 = vpop.f32.mrb[0].mxu0
        %v2017 = vadd.f32 0.0, %v2016
        %v2018 = vpop.f32.mrb[0].mxu0
        %v2019 = vadd.f32 0.0, %v2018
        %v2020 = vpop.f32.mrb[0].mxu0
        %v2021 = vadd.f32 0.0, %v2020
        %v2022 = vpop.f32.mrb[0].mxu0
        %v2023 = vadd.f32 0.0, %v2022
        %2024 = vmatprep.mubr.bf16.mxu0 0
        %2025 = vmatmul.mubr.bf16.gmra.mrb[0].mxu0 %v1889
        %v2026 = vpop.f32.mrb[0].mxu0
        %v2027 = vadd.f32 0.0, %v2026
        %v2028 = vpop.f32.mrb[0].mxu0
        %v2029 = vadd.f32 0.0, %v2028
        %v2030 = vpop.f32.mrb[0].mxu0
        %v2031 = vadd.f32 0.0, %v2030
        %v2032 = vpop.f32.mrb[0].mxu0
        %v2033 = vadd.f32 0.0, %v2032
        %2034 = vmatprep.mubr.bf16.mxu0 0
        %2035 = vmatmul.mubr.bf16.gmra.mrb[0].mxu0 %v1892
        %v2036 = vpop.f32.mrb[0].mxu0
        %v2037 = vadd.f32 0.0, %v2036
        %v2038 = vpop.f32.mrb[0].mxu0
        %v2039 = vadd.f32 0.0, %v2038
        %v2040 = vpop.f32.mrb[0].mxu0
        %v2041 = vadd.f32 0.0, %v2040
        %v2042 = vpop.f32.mrb[0].mxu0
        %v2043 = vadd.f32 0.0, %v2042
        %2044 = vmatprep.mubr.bf16.mxu0 0
        %2045 = vmatmul.mubr.bf16.gmra.mrb[0].mxu0 %v1895
        %v2046 = vpop.f32.mrb[0].mxu0
        %v2047 = vadd.f32 0.0, %v2046
        %v2048 = vpop.f32.mrb[0].mxu0
        %v2049 = vadd.f32 0.0, %v2048
        %v2050 = vpop.f32.mrb[0].mxu0
        %v2051 = vadd.f32 0.0, %v2050
        %v2052 = vpop.f32.mrb[0].mxu0
        %v2053 = vadd.f32 0.0, %v2052
        %2054 = vmatprep.mubr.bf16.mxu0 0
        %2055 = vmatmul.mubr.bf16.gmra.mrb[0].mxu0 %v1898
        %v2056 = vpop.f32.mrb[0].mxu0
        %v2057 = vadd.f32 0.0, %v2056
        %v2058 = vpop.f32.mrb[0].mxu0
        %v2059 = vadd.f32 0.0, %v2058
        %v2060 = vpop.f32.mrb[0].mxu0
        %v2061 = vadd.f32 0.0, %v2060
        %v2062 = vpop.f32.mrb[0].mxu0
        %v2063 = vadd.f32 0.0, %v2062
        %2064 = vmatprep.mubr.bf16.mxu0 0
        %2065 = vmatmul.mubr.bf16.gmra.mrb[0].mxu0 %v1901
        %v2066 = vpop.f32.mrb[0].mxu0
        %v2067 = vadd.f32 0.0, %v2066
        %v2068 = vpop.f32.mrb[0].mxu0
        %v2069 = vadd.f32 0.0, %v2068
        %v2070 = vpop.f32.mrb[0].mxu0
        %v2071 = vadd.f32 0.0, %v2070
        %v2072 = vpop.f32.mrb[0].mxu0
        %v2073 = vadd.f32 0.0, %v2072
        %2074 = vmatprep.mubr.bf16.mxu0 0
        %2075 = vmatmul.mubr.bf16.gmra.mrb[0].mxu0 %v1904
        %v2076 = vpop.f32.mrb[0].mxu0
        %v2077 = vadd.f32 0.0, %v2076
        %v2078 = vpop.f32.mrb[0].mxu0
        %v2079 = vadd.f32 0.0, %v2078
        %v2080 = vpop.f32.mrb[0].mxu0
        %v2081 = vadd.f32 0.0, %v2080
        %v2082 = vpop.f32.mrb[0].mxu0
        %v2083 = vadd.f32 0.0, %v2082
        %2084 = vmatprep.mubr.bf16.mxu0 0
        %2085 = vmatmul.mubr.bf16.gmra.mrb[0].mxu0 %v1907
        %v2086 = vpop.f32.mrb[0].mxu0
        %v2087 = vadd.f32 0.0, %v2086
        %v2088 = vpop.f32.mrb[0].mxu0
        %v2089 = vadd.f32 0.0, %v2088
        %v2090 = vpop.f32.mrb[0].mxu0
        %v2091 = vadd.f32 0.0, %v2090
        %v2092 = vpop.f32.mrb[0].mxu0
        %v2093 = vadd.f32 0.0, %v2092
        %2094 = vmatprep.mubr.bf16.mxu0 0
        %2095 = vmatmul.mubr.bf16.gmra.mrb[0].mxu0 %v1910
        %v2096 = vpop.f32.mrb[0].mxu0
        %v2097 = vadd.f32 0.0, %v2096
        %v2098 = vpop.f32.mrb[0].mxu0
        %v2099 = vadd.f32 0.0, %v2098
        %v2100 = vpop.f32.mrb[0].mxu0
        %v2101 = vadd.f32 0.0, %v2100
        %v2102 = vpop.f32.mrb[0].mxu0
        %v2103 = vadd.f32 0.0, %v2102
        %2104 = vdwg.mxu0
        %v2105 = vadd.f32 %v1649, %v1947
        %v2106 = vadd.f32 %v1650, %v1949
        %v2107 = vadd.f32 %v1651, %v1951
        %v2108 = vadd.f32 %v1652, %v1953
        %v2109 = vadd.f32 %v1653, %v1957
        %v2110 = vadd.f32 %v1654, %v1959
        %v2111 = vadd.f32 %v1655, %v1961
        %v2112 = vadd.f32 %v1656, %v1963
        %v2113 = vadd.f32 %v1657, %v1967
        %v2114 = vadd.f32 %v1658, %v1969
        %v2115 = vadd.f32 %v1659, %v1971
        %v2116 = vadd.f32 %v1660, %v1973
        %v2117 = vadd.f32 %v1661, %v1977
        %v2118 = vadd.f32 %v1662, %v1979
        %v2119 = vadd.f32 %v1663, %v1981
        %v2120 = vadd.f32 %v1664, %v1983
        %v2121 = vadd.f32 %v1665, %v1987
        %v2122 = vadd.f32 %v1666, %v1989
        %v2123 = vadd.f32 %v1667, %v1991
        %v2124 = vadd.f32 %v1668, %v1993
        %v2125 = vadd.f32 %v1669, %v1997
        %v2126 = vadd.f32 %v1670, %v1999
        %v2127 = vadd.f32 %v1671, %v2001
        %v2128 = vadd.f32 %v1672, %v2003
        %v2129 = vadd.f32 %v1673, %v2007
        %v2130 = vadd.f32 %v1674, %v2009
        %v2131 = vadd.f32 %v1675, %v2011
        %v2132 = vadd.f32 %v1676, %v2013
        %v2133 = vadd.f32 %v1677, %v2017
        %v2134 = vadd.f32 %v1678, %v2019
        %v2135 = vadd.f32 %v1679, %v2021
        %v2136 = vadd.f32 %v1680, %v2023
        %v2137 = vadd.f32 %v1681, %v2027
        %v2138 = vadd.f32 %v1682, %v2029
        %v2139 = vadd.f32 %v1683, %v2031
        %v2140 = vadd.f32 %v1684, %v2033
        %v2141 = vadd.f32 %v1685, %v2037
        %v2142 = vadd.f32 %v1686, %v2039
        %v2143 = vadd.f32 %v1687, %v2041
        %v2144 = vadd.f32 %v1688, %v2043
        %v2145 = vadd.f32 %v1689, %v2047
        %v2146 = vadd.f32 %v1690, %v2049
        %v2147 = vadd.f32 %v1691, %v2051
        %v2148 = vadd.f32 %v1692, %v2053
        %v2149 = vadd.f32 %v1693, %v2057
        %v2150 = vadd.f32 %v1694, %v2059
        %v2151 = vadd.f32 %v1695, %v2061
        %v2152 = vadd.f32 %v1696, %v2063
        %v2153 = vadd.f32 %v1697, %v2067
        %v2154 = vadd.f32 %v1698, %v2069
        %v2155 = vadd.f32 %v1699, %v2071
        %v2156 = vadd.f32 %v1700, %v2073
        %v2157 = vadd.f32 %v1701, %v2077
        %v2158 = vadd.f32 %v1702, %v2079
        %v2159 = vadd.f32 %v1703, %v2081
        %v2160 = vadd.f32 %v1704, %v2083
        %v2161 = vadd.f32 %v1705, %v2087
        %v2162 = vadd.f32 %v1706, %v2089
        %v2163 = vadd.f32 %v1707, %v2091
        %v2164 = vadd.f32 %v1708, %v2093
        %v2165 = vadd.f32 %v1709, %v2097
        %v2166 = vadd.f32 %v1710, %v2099
        %v2167 = vadd.f32 %v1711, %v2101
        %v2168 = vadd.f32 %v1712, %v2103
        %v2169 = vld [vmem:[%s439] sm:$0xc]
        %s2170 = scalar_lea.vmem %s1, 384
        %v2171 = vld [vmem:[%s2170] sm:$0xff]
        %v2172 = vld [vmem:[%s2170 + $0x8] sm:$0xff]
        %v2173 = vld [vmem:[%s2170 + $0x10] sm:$0xff]
        %v2174 = vld [vmem:[%s2170 + $0x18] sm:$0xff]
        %v2175 = vld [vmem:[%s2170 + $0x20] sm:$0xff]
        %v2176 = vld [vmem:[%s2170 + $0x28] sm:$0xff]
        %v2177 = vld [vmem:[%s2170 + $0x30] sm:$0xff]
        %v2178 = vld [vmem:[%s2170 + $0x38] sm:$0xff]
        %v2179 = vld [vmem:[%s2170 + $0x40] sm:$0xff]
        %v2180 = vld [vmem:[%s2170 + $0x48] sm:$0xff]
        %v2181 = vld [vmem:[%s2170 + $0x50] sm:$0xff]
        %v2182 = vld [vmem:[%s2170 + $0x58] sm:$0xff]
        %v2184 = vunpack.c.l.b16 %v2169
        %v2185 = vpack.c.b16 %v533, %v2184
        %vm2186 = vcmask 1045504
        %v2187 = vrot.slane %v2185, 2
        %v2188 = vrot.slane %v565, 2
        %v2189 = vsel %vm2186, %v2187, %v2188
        %v2190 = vrot.slane %v566, 2
        %v2191 = vsel %vm2186, %v2188, %v2190
        %v2192 = vrot.slane %v567, 2
        %v2193 = vsel %vm2186, %v2190, %v2192
        %v2194 = vrot.slane %v568, 2
        %v2195 = vsel %vm2186, %v2192, %v2194
        %v2196 = vrot.slane %v569, 2
        %v2197 = vsel %vm2186, %v2194, %v2196
        %v2198 = vrot.slane %v570, 2
        %v2199 = vsel %vm2186, %v2196, %v2198
        %v2200 = vrot.slane %v571, 2
        %v2201 = vsel %vm2186, %v2198, %v2200
        %v2202 = vrot.slane %v572, 2
        %v2203 = vsel %vm2186, %v2200, %v2202
        %v2204 = vrot.slane %v573, 2
        %v2205 = vsel %vm2186, %v2202, %v2204
        %v2206 = vrot.slane %v574, 2
        %v2207 = vsel %vm2186, %v2204, %v2206
        %v2208 = vrot.slane %v575, 2
        %v2209 = vsel %vm2186, %v2206, %v2208
        %v2210 = vrot.slane %v576, 2
        %v2211 = vsel %vm2186, %v2208, %v2210
        %v2212 = vrot.slane %v577, 2
        %v2213 = vsel %vm2186, %v2210, %v2212
        %v2214 = vrot.slane %v578, 2
        %v2215 = vsel %vm2186, %v2212, %v2214
        %v2216 = vrot.slane %v1729, 2
        %v2217 = vsel %vm2186, %v2214, %v2216
        %v2230 = vunpack.c.l.b16 %v2171
        %v2231 = vunpack.c.h.b16 %v2171
        %v2232 = vunpack.c.l.b16 %v2172
        %v2233 = vunpack.c.h.b16 %v2172
        %v2234 = vunpack.c.l.b16 %v2173
        %v2235 = vunpack.c.h.b16 %v2173
        %v2236 = vunpack.c.l.b16 %v2174
        %v2237 = vunpack.c.h.b16 %v2174
        %v2238 = vunpack.c.l.b16 %v2175
        %v2239 = vunpack.c.h.b16 %v2175
        %v2240 = vunpack.c.l.b16 %v2176
        %v2241 = vunpack.c.h.b16 %v2176
        %v2242 = vunpack.c.l.b16 %v2177
        %v2243 = vunpack.c.h.b16 %v2177
        %v2244 = vunpack.c.l.b16 %v2178
        %v2245 = vunpack.c.h.b16 %v2178
        %v2246 = vunpack.c.l.b16 %v2179
        %v2247 = vunpack.c.h.b16 %v2179
        %v2248 = vunpack.c.l.b16 %v2180
        %v2249 = vunpack.c.h.b16 %v2180
        %v2250 = vunpack.c.l.b16 %v2181
        %v2251 = vunpack.c.h.b16 %v2181
        %v2252 = vunpack.c.l.b16 %v2182
        %v2253 = vunpack.c.h.b16 %v2182
        %v2254 = vpack.c.b16 %v2232, %v2230
        %v2255 = vpack.c.b16 %v2233, %v2231
        %v2256 = vpack.c.b16 %v2236, %v2234
        %v2257 = vpack.c.b16 %v2237, %v2235
        %v2258 = vpack.c.b16 %v2240, %v2238
        %v2259 = vpack.c.b16 %v2241, %v2239
        %v2260 = vpack.c.b16 %v2244, %v2242
        %v2261 = vpack.c.b16 %v2245, %v2243
        %v2262 = vpack.c.b16 %v2248, %v2246
        %v2263 = vpack.c.b16 %v2249, %v2247
        %v2264 = vpack.c.b16 %v2252, %v2250
        %v2265 = vpack.c.b16 %v2253, %v2251
        %v2279 = vsel %vm768, %v2189, 0
        %v2282 = vsel %vm768, %v2191, 0
        %v2285 = vsel %vm768, %v2193, 0
        %v2288 = vsel %vm768, %v2195, 0
        %v2291 = vsel %vm768, %v2197, 0
        %v2294 = vsel %vm768, %v2199, 0
        %v2297 = vsel %vm768, %v2201, 0
        %v2300 = vsel %vm768, %v2203, 0
        %v2303 = vsel %vm768, %v2205, 0
        %v2306 = vsel %vm768, %v2207, 0
        %v2309 = vsel %vm768, %v2209, 0
        %v2312 = vsel %vm768, %v2211, 0
        %v2315 = vsel %vm768, %v2213, 0
        %v2318 = vsel %vm768, %v2215, 0
        %v2321 = vsel %vm768, %v2217, 0
        %v2324 = vsel %vm768, %v2216, 0
        %2326 = vmatprep.subr.bf16.mxu0 %v2255
        %2327 = vmatpush1.bf16.msra.mxu0 %v2254
        %2328 = vmatprep.subr.bf16.mxu0 %v2257
        %2329 = vmatpush1.bf16.msra.mxu0 %v2256
        %2330 = vmatprep.subr.bf16.mxu0 %v2259
        %2331 = vmatpush1.bf16.msra.mxu0 %v2258
        %2332 = vmatprep.subr.bf16.mxu0 %v2261
        %2333 = vmatpush1.bf16.msra.mxu0 %v2260
        %2334 = vmatprep.subr.bf16.mxu0 %v2263
        %2335 = vmatpush1.bf16.msra.mxu0 %v2262
        %2336 = vmatprep.subr.bf16.mxu0 %v2265
        %2337 = vmatpush1.bf16.msra.mxu0 %v2264
        %2338 = vmatprep.subr.bf16.mxu0 0
        %2339 = vmatpush1.bf16.msra.mxu0 0
        %2340 = vmatprep.subr.bf16.mxu0 0
        %2341 = vmatpush1.bf16.msra.mxu0 0
        %2342 = vmatprep.subr.bf16.mxu0 0
        %2343 = vmatpush1.bf16.msra.mxu0 0
        %2344 = vmatprep.subr.bf16.mxu0 0
        %2345 = vmatpush1.bf16.msra.mxu0 0
        %2346 = vmatprep.subr.bf16.mxu0 0
        %2347 = vmatpush1.bf16.msra.mxu0 0
        %2348 = vmatprep.subr.bf16.mxu0 0
        %2349 = vmatpush1.bf16.msra.mxu0 0
        %2350 = vmatprep.subr.bf16.mxu0 0
        %2351 = vmatpush1.bf16.msra.mxu0 0
        %2352 = vmatprep.subr.bf16.mxu0 0
        %2353 = vmatpush1.bf16.msra.mxu0 0
        %2354 = vmatprep.subr.bf16.mxu0 0
        %2355 = vmatpush1.bf16.msra.mxu0 0
        %2356 = vmatprep.subr.bf16.mxu0 0
        %2357 = vmatpush1.bf16.msra.mxu0 0
        %2358 = vmatprep.mubr.bf16.mxu0 0
        %2359 = vmatmul.mubr.bf16.gmra.mrb[0].mxu0 %v2279
        %v2360 = vpop.f32.mrb[0].mxu0
        %v2361 = vadd.f32 0.0, %v2360
        %v2362 = vpop.f32.mrb[0].mxu0
        %v2363 = vadd.f32 0.0, %v2362
        %v2364 = vpop.f32.mrb[0].mxu0
        %v2365 = vadd.f32 0.0, %v2364
        %v2366 = vpop.f32.mrb[0].mxu0
        %v2367 = vadd.f32 0.0, %v2366
        %2368 = vmatprep.mubr.bf16.mxu0 0
        %2369 = vmatmul.mubr.bf16.gmra.mrb[0].mxu0 %v2282
        %v2370 = vpop.f32.mrb[0].mxu0
        %v2371 = vadd.f32 0.0, %v2370
        %v2372 = vpop.f32.mrb[0].mxu0
        %v2373 = vadd.f32 0.0, %v2372
        %v2374 = vpop.f32.mrb[0].mxu0
        %v2375 = vadd.f32 0.0, %v2374
        %v2376 = vpop.f32.mrb[0].mxu0
        %v2377 = vadd.f32 0.0, %v2376
        %2378 = vmatprep.mubr.bf16.mxu0 0
        %2379 = vmatmul.mubr.bf16.gmra.mrb[0].mxu0 %v2285
        %v2380 = vpop.f32.mrb[0].mxu0
        %v2381 = vadd.f32 0.0, %v2380
        %v2382 = vpop.f32.mrb[0].mxu0
        %v2383 = vadd.f32 0.0, %v2382
        %v2384 = vpop.f32.mrb[0].mxu0
        %v2385 = vadd.f32 0.0, %v2384
        %v2386 = vpop.f32.mrb[0].mxu0
        %v2387 = vadd.f32 0.0, %v2386
        %2388 = vmatprep.mubr.bf16.mxu0 0
        %2389 = vmatmul.mubr.bf16.gmra.mrb[0].mxu0 %v2288
        %v2390 = vpop.f32.mrb[0].mxu0
        %v2391 = vadd.f32 0.0, %v2390
        %v2392 = vpop.f32.mrb[0].mxu0
        %v2393 = vadd.f32 0.0, %v2392
        %v2394 = vpop.f32.mrb[0].mxu0
        %v2395 = vadd.f32 0.0, %v2394
        %v2396 = vpop.f32.mrb[0].mxu0
        %v2397 = vadd.f32 0.0, %v2396
        %2398 = vmatprep.mubr.bf16.mxu0 0
        %2399 = vmatmul.mubr.bf16.gmra.mrb[0].mxu0 %v2291
        %v2400 = vpop.f32.mrb[0].mxu0
        %v2401 = vadd.f32 0.0, %v2400
        %v2402 = vpop.f32.mrb[0].mxu0
        %v2403 = vadd.f32 0.0, %v2402
        %v2404 = vpop.f32.mrb[0].mxu0
        %v2405 = vadd.f32 0.0, %v2404
        %v2406 = vpop.f32.mrb[0].mxu0
        %v2407 = vadd.f32 0.0, %v2406
        %2408 = vmatprep.mubr.bf16.mxu0 0
        %2409 = vmatmul.mubr.bf16.gmra.mrb[0].mxu0 %v2294
        %v2410 = vpop.f32.mrb[0].mxu0
        %v2411 = vadd.f32 0.0, %v2410
        %v2412 = vpop.f32.mrb[0].mxu0
        %v2413 = vadd.f32 0.0, %v2412
        %v2414 = vpop.f32.mrb[0].mxu0
        %v2415 = vadd.f32 0.0, %v2414
        %v2416 = vpop.f32.mrb[0].mxu0
        %v2417 = vadd.f32 0.0, %v2416
        %2418 = vmatprep.mubr.bf16.mxu0 0
        %2419 = vmatmul.mubr.bf16.gmra.mrb[0].mxu0 %v2297
        %v2420 = vpop.f32.mrb[0].mxu0
        %v2421 = vadd.f32 0.0, %v2420
        %v2422 = vpop.f32.mrb[0].mxu0
        %v2423 = vadd.f32 0.0, %v2422
        %v2424 = vpop.f32.mrb[0].mxu0
        %v2425 = vadd.f32 0.0, %v2424
        %v2426 = vpop.f32.mrb[0].mxu0
        %v2427 = vadd.f32 0.0, %v2426
        %2428 = vmatprep.mubr.bf16.mxu0 0
        %2429 = vmatmul.mubr.bf16.gmra.mrb[0].mxu0 %v2300
        %v2430 = vpop.f32.mrb[0].mxu0
        %v2431 = vadd.f32 0.0, %v2430
        %v2432 = vpop.f32.mrb[0].mxu0
        %v2433 = vadd.f32 0.0, %v2432
        %v2434 = vpop.f32.mrb[0].mxu0
        %v2435 = vadd.f32 0.0, %v2434
        %v2436 = vpop.f32.mrb[0].mxu0
        %v2437 = vadd.f32 0.0, %v2436
        %2438 = vmatprep.mubr.bf16.mxu0 0
        %2439 = vmatmul.mubr.bf16.gmra.mrb[0].mxu0 %v2303
        %v2440 = vpop.f32.mrb[0].mxu0
        %v2441 = vadd.f32 0.0, %v2440
        %v2442 = vpop.f32.mrb[0].mxu0
        %v2443 = vadd.f32 0.0, %v2442
        %v2444 = vpop.f32.mrb[0].mxu0
        %v2445 = vadd.f32 0.0, %v2444
        %v2446 = vpop.f32.mrb[0].mxu0
        %v2447 = vadd.f32 0.0, %v2446
        %2448 = vmatprep.mubr.bf16.mxu0 0
        %2449 = vmatmul.mubr.bf16.gmra.mrb[0].mxu0 %v2306
        %v2450 = vpop.f32.mrb[0].mxu0
        %v2451 = vadd.f32 0.0, %v2450
        %v2452 = vpop.f32.mrb[0].mxu0
        %v2453 = vadd.f32 0.0, %v2452
        %v2454 = vpop.f32.mrb[0].mxu0
        %v2455 = vadd.f32 0.0, %v2454
        %v2456 = vpop.f32.mrb[0].mxu0
        %v2457 = vadd.f32 0.0, %v2456
        %2458 = vmatprep.mubr.bf16.mxu0 0
        %2459 = vmatmul.mubr.bf16.gmra.mrb[0].mxu0 %v2309
        %v2460 = vpop.f32.mrb[0].mxu0
        %v2461 = vadd.f32 0.0, %v2460
        %v2462 = vpop.f32.mrb[0].mxu0
        %v2463 = vadd.f32 0.0, %v2462
        %v2464 = vpop.f32.mrb[0].mxu0
        %v2465 = vadd.f32 0.0, %v2464
        %v2466 = vpop.f32.mrb[0].mxu0
        %v2467 = vadd.f32 0.0, %v2466
        %2468 = vmatprep.mubr.bf16.mxu0 0
        %2469 = vmatmul.mubr.bf16.gmra.mrb[0].mxu0 %v2312
        %v2470 = vpop.f32.mrb[0].mxu0
        %v2471 = vadd.f32 0.0, %v2470
        %v2472 = vpop.f32.mrb[0].mxu0
        %v2473 = vadd.f32 0.0, %v2472
        %v2474 = vpop.f32.mrb[0].mxu0
        %v2475 = vadd.f32 0.0, %v2474
        %v2476 = vpop.f32.mrb[0].mxu0
        %v2477 = vadd.f32 0.0, %v2476
        %2478 = vmatprep.mubr.bf16.mxu0 0
        %2479 = vmatmul.mubr.bf16.gmra.mrb[0].mxu0 %v2315
        %v2480 = vpop.f32.mrb[0].mxu0
        %v2481 = vadd.f32 0.0, %v2480
        %v2482 = vpop.f32.mrb[0].mxu0
        %v2483 = vadd.f32 0.0, %v2482
        %v2484 = vpop.f32.mrb[0].mxu0
        %v2485 = vadd.f32 0.0, %v2484
        %v2486 = vpop.f32.mrb[0].mxu0
        %v2487 = vadd.f32 0.0, %v2486
        %2488 = vmatprep.mubr.bf16.mxu0 0
        %2489 = vmatmul.mubr.bf16.gmra.mrb[0].mxu0 %v2318
        %v2490 = vpop.f32.mrb[0].mxu0
        %v2491 = vadd.f32 0.0, %v2490
        %v2492 = vpop.f32.mrb[0].mxu0
        %v2493 = vadd.f32 0.0, %v2492
        %v2494 = vpop.f32.mrb[0].mxu0
        %v2495 = vadd.f32 0.0, %v2494
        %v2496 = vpop.f32.mrb[0].mxu0
        %v2497 = vadd.f32 0.0, %v2496
        %2498 = vmatprep.mubr.bf16.mxu0 0
        %2499 = vmatmul.mubr.bf16.gmra.mrb[0].mxu0 %v2321
        %v2500 = vpop.f32.mrb[0].mxu0
        %v2501 = vadd.f32 0.0, %v2500
        %v2502 = vpop.f32.mrb[0].mxu0
        %v2503 = vadd.f32 0.0, %v2502
        %v2504 = vpop.f32.mrb[0].mxu0
        %v2505 = vadd.f32 0.0, %v2504
        %v2506 = vpop.f32.mrb[0].mxu0
        %v2507 = vadd.f32 0.0, %v2506
        %2508 = vmatprep.mubr.bf16.mxu0 0
        %2509 = vmatmul.mubr.bf16.gmra.mrb[0].mxu0 %v2324
        %v2510 = vpop.f32.mrb[0].mxu0
        %v2511 = vadd.f32 0.0, %v2510
        %v2512 = vpop.f32.mrb[0].mxu0
        %v2513 = vadd.f32 0.0, %v2512
        %v2514 = vpop.f32.mrb[0].mxu0
        %v2515 = vadd.f32 0.0, %v2514
        %v2516 = vpop.f32.mrb[0].mxu0
        %v2517 = vadd.f32 0.0, %v2516
        %2518 = vdwg.mxu0
        %v2519 = vadd.f32 %v2105, %v2361
        %v2520 = vadd.f32 %v2106, %v2363
        %v2521 = vadd.f32 %v2107, %v2365
        %v2522 = vadd.f32 %v2108, %v2367
        %v2523 = vadd.f32 %v2109, %v2371
        %v2524 = vadd.f32 %v2110, %v2373
        %v2525 = vadd.f32 %v2111, %v2375
        %v2526 = vadd.f32 %v2112, %v2377
        %v2527 = vadd.f32 %v2113, %v2381
        %v2528 = vadd.f32 %v2114, %v2383
        %v2529 = vadd.f32 %v2115, %v2385
        %v2530 = vadd.f32 %v2116, %v2387
        %v2531 = vadd.f32 %v2117, %v2391
        %v2532 = vadd.f32 %v2118, %v2393
        %v2533 = vadd.f32 %v2119, %v2395
        %v2534 = vadd.f32 %v2120, %v2397
        %v2535 = vadd.f32 %v2121, %v2401
        %v2536 = vadd.f32 %v2122, %v2403
        %v2537 = vadd.f32 %v2123, %v2405
        %v2538 = vadd.f32 %v2124, %v2407
        %v2539 = vadd.f32 %v2125, %v2411
        %v2540 = vadd.f32 %v2126, %v2413
        %v2541 = vadd.f32 %v2127, %v2415
        %v2542 = vadd.f32 %v2128, %v2417
        %v2543 = vadd.f32 %v2129, %v2421
        %v2544 = vadd.f32 %v2130, %v2423
        %v2545 = vadd.f32 %v2131, %v2425
        %v2546 = vadd.f32 %v2132, %v2427
        %v2547 = vadd.f32 %v2133, %v2431
        %v2548 = vadd.f32 %v2134, %v2433
        %v2549 = vadd.f32 %v2135, %v2435
        %v2550 = vadd.f32 %v2136, %v2437
        %v2551 = vadd.f32 %v2137, %v2441
        %v2552 = vadd.f32 %v2138, %v2443
        %v2553 = vadd.f32 %v2139, %v2445
        %v2554 = vadd.f32 %v2140, %v2447
        %v2555 = vadd.f32 %v2141, %v2451
        %v2556 = vadd.f32 %v2142, %v2453
        %v2557 = vadd.f32 %v2143, %v2455
        %v2558 = vadd.f32 %v2144, %v2457
        %v2559 = vadd.f32 %v2145, %v2461
        %v2560 = vadd.f32 %v2146, %v2463
        %v2561 = vadd.f32 %v2147, %v2465
        %v2562 = vadd.f32 %v2148, %v2467
        %v2563 = vadd.f32 %v2149, %v2471
        %v2564 = vadd.f32 %v2150, %v2473
        %v2565 = vadd.f32 %v2151, %v2475
        %v2566 = vadd.f32 %v2152, %v2477
        %v2567 = vadd.f32 %v2153, %v2481
        %v2568 = vadd.f32 %v2154, %v2483
        %v2569 = vadd.f32 %v2155, %v2485
        %v2570 = vadd.f32 %v2156, %v2487
        %v2571 = vadd.f32 %v2157, %v2491
        %v2572 = vadd.f32 %v2158, %v2493
        %v2573 = vadd.f32 %v2159, %v2495
        %v2574 = vadd.f32 %v2160, %v2497
        %v2575 = vadd.f32 %v2161, %v2501
        %v2576 = vadd.f32 %v2162, %v2503
        %v2577 = vadd.f32 %v2163, %v2505
        %v2578 = vadd.f32 %v2164, %v2507
        %v2579 = vadd.f32 %v2165, %v2511
        %v2580 = vadd.f32 %v2166, %v2513
        %v2581 = vadd.f32 %v2167, %v2515
        %v2582 = vadd.f32 %v2168, %v2517
        %v2583 = vmax.f32 %v2519, %v2520
        %v2584 = vmax.f32 %v2521, %v2522
        %v2585 = vmax.f32 %v2523, %v2524
        %v2586 = vmax.f32 %v2525, %v2526
        %v2587 = vmax.f32 %v2527, %v2528
        %v2588 = vmax.f32 %v2529, %v2530
        %v2589 = vmax.f32 %v2531, %v2532
        %v2590 = vmax.f32 %v2533, %v2534
        %v2591 = vmax.f32 %v2535, %v2536
        %v2592 = vmax.f32 %v2537, %v2538
        %v2593 = vmax.f32 %v2539, %v2540
        %v2594 = vmax.f32 %v2541, %v2542
        %v2595 = vmax.f32 %v2543, %v2544
        %v2596 = vmax.f32 %v2545, %v2546
        %v2597 = vmax.f32 %v2547, %v2548
        %v2598 = vmax.f32 %v2549, %v2550
        %v2599 = vmax.f32 %v2551, %v2552
        %v2600 = vmax.f32 %v2553, %v2554
        %v2601 = vmax.f32 %v2555, %v2556
        %v2602 = vmax.f32 %v2557, %v2558
        %v2603 = vmax.f32 %v2559, %v2560
        %v2604 = vmax.f32 %v2561, %v2562
        %v2605 = vmax.f32 %v2563, %v2564
        %v2606 = vmax.f32 %v2565, %v2566
        %v2607 = vmax.f32 %v2567, %v2568
        %v2608 = vmax.f32 %v2569, %v2570
        %v2609 = vmax.f32 %v2571, %v2572
        %v2610 = vmax.f32 %v2573, %v2574
        %v2611 = vmax.f32 %v2575, %v2576
        %v2612 = vmax.f32 %v2577, %v2578
        %v2613 = vmax.f32 %v2579, %v2580
        %v2614 = vmax.f32 %v2581, %v2582
        %v2615 = vpack.c.bf16 %v2584, %v2583
        %v2616 = vpack.c.bf16 %v2586, %v2585
        %v2617 = vpack.c.bf16 %v2588, %v2587
        %v2618 = vpack.c.bf16 %v2590, %v2589
        %v2619 = vpack.c.bf16 %v2592, %v2591
        %v2620 = vpack.c.bf16 %v2594, %v2593
        %v2621 = vpack.c.bf16 %v2596, %v2595
        %v2622 = vpack.c.bf16 %v2598, %v2597
        %v2623 = vpack.c.bf16 %v2600, %v2599
        %v2624 = vpack.c.bf16 %v2602, %v2601
        %v2625 = vpack.c.bf16 %v2604, %v2603
        %v2626 = vpack.c.bf16 %v2606, %v2605
        %v2627 = vpack.c.bf16 %v2608, %v2607
        %v2628 = vpack.c.bf16 %v2610, %v2609
        %v2629 = vpack.c.bf16 %v2612, %v2611
        %v2630 = vpack.c.bf16 %v2614, %v2613
        %v2631 = vld [vmem:[%s3] sm:$0xff]
        %v2632 = vld [vmem:[%s3 + $0x8] sm:$0xff]
        %v2633 = vld [vmem:[%s3 + $0x10] sm:$0xff]
        %v2634 = vld [vmem:[%s3 + $0x18] sm:$0xff]
        %v2635 = vld [vmem:[%s3 + $0x20] sm:$0xff]
        %v2636 = vld [vmem:[%s3 + $0x28] sm:$0xff]
        %v2637 = vld [vmem:[%s3 + $0x30] sm:$0xff]
        %v2638 = vld [vmem:[%s3 + $0x38] sm:$0xff]
        %v2639 = vld [vmem:[%s3 + $0x40] sm:$0xff]
        %v2640 = vld [vmem:[%s3 + $0x48] sm:$0xff]
        %v2641 = vld [vmem:[%s3 + $0x50] sm:$0xff]
        %v2642 = vld [vmem:[%s3 + $0x58] sm:$0xff]
        %v2643 = vld [vmem:[%s3 + $0x60] sm:$0xff]
        %v2644 = vld [vmem:[%s3 + $0x68] sm:$0xff]
        %v2659 = vunpack.c.l.b16 %v2631
        %v2660 = vunpack.c.h.b16 %v2631
        %v2661 = vunpack.c.l.b16 %v2632
        %v2662 = vunpack.c.h.b16 %v2632
        %v2663 = vunpack.c.l.b16 %v2633
        %v2664 = vunpack.c.h.b16 %v2633
        %v2665 = vunpack.c.l.b16 %v2634
        %v2666 = vunpack.c.h.b16 %v2634
        %v2667 = vunpack.c.l.b16 %v2635
        %v2668 = vunpack.c.h.b16 %v2635
        %v2669 = vunpack.c.l.b16 %v2636
        %v2670 = vunpack.c.h.b16 %v2636
        %v2671 = vunpack.c.l.b16 %v2637
        %v2672 = vunpack.c.h.b16 %v2637
        %v2673 = vunpack.c.l.b16 %v2638
        %v2674 = vunpack.c.h.b16 %v2638
        %v2675 = vunpack.c.l.b16 %v2639
        %v2676 = vunpack.c.h.b16 %v2639
        %v2677 = vunpack.c.l.b16 %v2640
        %v2678 = vunpack.c.h.b16 %v2640
        %v2679 = vunpack.c.l.b16 %v2641
        %v2680 = vunpack.c.h.b16 %v2641
        %v2681 = vunpack.c.l.b16 %v2642
        %v2682 = vunpack.c.h.b16 %v2642
        %v2683 = vunpack.c.l.b16 %v2643
        %v2684 = vunpack.c.h.b16 %v2643
        %v2685 = vunpack.c.l.b16 %v2644
        %v2686 = vunpack.c.h.b16 %v2644
        %v2687 = vpack.c.b16 %v2661, %v2659
        %v2688 = vpack.c.b16 %v2662, %v2660
        %v2689 = vpack.c.b16 %v2665, %v2663
        %v2690 = vpack.c.b16 %v2666, %v2664
        %v2691 = vpack.c.b16 %v2669, %v2667
        %v2692 = vpack.c.b16 %v2670, %v2668
        %v2693 = vpack.c.b16 %v2673, %v2671
        %v2694 = vpack.c.b16 %v2674, %v2672
        %v2695 = vpack.c.b16 %v2677, %v2675
        %v2696 = vpack.c.b16 %v2678, %v2676
        %v2697 = vpack.c.b16 %v2681, %v2679
        %v2698 = vpack.c.b16 %v2682, %v2680
        %v2699 = vpack.c.b16 %v2685, %v2683
        %v2700 = vpack.c.b16 %v2686, %v2684
        %vm2708 = vcmask 1014784
        %v2710 = vsel %vm2708, %v2688, 0
        %v2713 = vsel %vm2708, %v2690, 0
        %v2716 = vsel %vm2708, %v2692, 0
        %v2719 = vsel %vm2708, %v2694, 0
        %v2722 = vsel %vm2708, %v2696, 0
        %v2725 = vsel %vm2708, %v2698, 0
        %v2728 = vsel %vm2708, %v2700, 0
        %vm2730 = vcmask 1045504
        %v2732 = vsel %vm2730, %v2630, 0
        %2734 = vmatprep.subr.bf16.mxu0 0
        %2735 = vmatpush1.bf16.msra.mxu0 %v2615
        %2736 = vmatprep.subr.bf16.mxu0 0
        %2737 = vmatpush1.bf16.msra.mxu0 %v2616
        %2738 = vmatprep.subr.bf16.mxu0 0
        %2739 = vmatpush1.bf16.msra.mxu0 %v2617
        %2740 = vmatprep.subr.bf16.mxu0 0
        %2741 = vmatpush1.bf16.msra.mxu0 %v2618
        %2742 = vmatprep.subr.bf16.mxu0 0
        %2743 = vmatpush1.bf16.msra.mxu0 %v2619
        %2744 = vmatprep.subr.bf16.mxu0 0
        %2745 = vmatpush1.bf16.msra.mxu0 %v2620
        %2746 = vmatprep.subr.bf16.mxu0 0
        %2747 = vmatpush1.bf16.msra.mxu0 %v2621
        %2748 = vmatprep.subr.bf16.mxu0 0
        %2749 = vmatpush1.bf16.msra.mxu0 %v2622
        %2750 = vmatprep.subr.bf16.mxu0 0
        %2751 = vmatpush1.bf16.msra.mxu0 %v2623
        %2752 = vmatprep.subr.bf16.mxu0 0
        %2753 = vmatpush1.bf16.msra.mxu0 %v2624
        %2754 = vmatprep.subr.bf16.mxu0 0
        %2755 = vmatpush1.bf16.msra.mxu0 %v2625
        %2756 = vmatprep.subr.bf16.mxu0 0
        %2757 = vmatpush1.bf16.msra.mxu0 %v2626
        %2758 = vmatprep.subr.bf16.mxu0 0
        %2759 = vmatpush1.bf16.msra.mxu0 %v2627
        %2760 = vmatprep.subr.bf16.mxu0 0
        %2761 = vmatpush1.bf16.msra.mxu0 %v2628
        %2762 = vmatprep.subr.bf16.mxu0 0
        %2763 = vmatpush1.bf16.msra.mxu0 %v2629
        %2764 = vmatprep.subr.bf16.mxu0 0
        %2765 = vmatpush1.bf16.msra.mxu0 %v2732
        %2766 = vmatprep.mubr.bf16.mxu0 %v2710
        %2767 = vmatmul.mubr.bf16.gmra.mrb[0].mxu0 %v2687
        %v2768 = vpop.f32.mrb[0].mxu0
        %v2769 = vadd.f32 0.0, %v2768
        %v2770 = vpop.f32.mrb[0].mxu0
        %v2771 = vpop.f32.mrb[0].mxu0
        %v2772 = vadd.f32 0.0, %v2771
        %v2773 = vpop.f32.mrb[0].mxu0
        %2774 = vmatprep.mubr.bf16.mxu0 %v2713
        %2775 = vmatmul.mubr.bf16.gmra.mrb[0].mxu0 %v2689
        %v2776 = vpop.f32.mrb[0].mxu0
        %v2777 = vadd.f32 0.0, %v2776
        %v2778 = vpop.f32.mrb[0].mxu0
        %v2779 = vpop.f32.mrb[0].mxu0
        %v2780 = vadd.f32 0.0, %v2779
        %v2781 = vpop.f32.mrb[0].mxu0
        %2782 = vmatprep.mubr.bf16.mxu0 %v2716
        %2783 = vmatmul.mubr.bf16.gmra.mrb[0].mxu0 %v2691
        %v2784 = vpop.f32.mrb[0].mxu0
        %v2785 = vadd.f32 0.0, %v2784
        %v2786 = vpop.f32.mrb[0].mxu0
        %v2787 = vpop.f32.mrb[0].mxu0
        %v2788 = vadd.f32 0.0, %v2787
        %v2789 = vpop.f32.mrb[0].mxu0
        %2790 = vmatprep.mubr.bf16.mxu0 %v2719
        %2791 = vmatmul.mubr.bf16.gmra.mrb[0].mxu0 %v2693
        %v2792 = vpop.f32.mrb[0].mxu0
        %v2793 = vadd.f32 0.0, %v2792
        %v2794 = vpop.f32.mrb[0].mxu0
        %v2795 = vpop.f32.mrb[0].mxu0
        %v2796 = vadd.f32 0.0, %v2795
        %v2797 = vpop.f32.mrb[0].mxu0
        %2798 = vmatprep.mubr.bf16.mxu0 %v2722
        %2799 = vmatmul.mubr.bf16.gmra.mrb[0].mxu0 %v2695
        %v2800 = vpop.f32.mrb[0].mxu0
        %v2801 = vadd.f32 0.0, %v2800
        %v2802 = vpop.f32.mrb[0].mxu0
        %v2803 = vpop.f32.mrb[0].mxu0
        %v2804 = vadd.f32 0.0, %v2803
        %v2805 = vpop.f32.mrb[0].mxu0
        %2806 = vmatprep.mubr.bf16.mxu0 %v2725
        %2807 = vmatmul.mubr.bf16.gmra.mrb[0].mxu0 %v2697
        %v2808 = vpop.f32.mrb[0].mxu0
        %v2809 = vadd.f32 0.0, %v2808
        %v2810 = vpop.f32.mrb[0].mxu0
        %v2811 = vpop.f32.mrb[0].mxu0
        %v2812 = vadd.f32 0.0, %v2811
        %v2813 = vpop.f32.mrb[0].mxu0
        %2814 = vmatprep.mubr.bf16.mxu0 %v2728
        %2815 = vmatmul.mubr.bf16.gmra.mrb[0].mxu0 %v2699
        %v2816 = vpop.f32.mrb[0].mxu0
        %v2817 = vadd.f32 0.0, %v2816
        %v2818 = vpop.f32.mrb[0].mxu0
        %v2819 = vpop.f32.mrb[0].mxu0
        %v2820 = vadd.f32 0.0, %v2819
        %v2821 = vpop.f32.mrb[0].mxu0
        %2822 = vdwg.mxu0
        %s2823 = scalar_lea.vmem %s3, 112
        %v2824 = vld [vmem:[%s2823] sm:$0xff]
        %v2825 = vld [vmem:[%s2823 + $0x8] sm:$0xff]
        %v2826 = vld [vmem:[%s2823 + $0x10] sm:$0xff]
        %v2827 = vld [vmem:[%s2823 + $0x18] sm:$0xff]
        %v2828 = vld [vmem:[%s2823 + $0x20] sm:$0xff]
        %v2829 = vld [vmem:[%s2823 + $0x28] sm:$0xff]
        %v2830 = vld [vmem:[%s2823 + $0x30] sm:$0xff]
        %v2831 = vld [vmem:[%s2823 + $0x38] sm:$0xff]
        %v2832 = vld [vmem:[%s2823 + $0x40] sm:$0xff]
        %v2833 = vld [vmem:[%s2823 + $0x48] sm:$0xff]
        %v2834 = vld [vmem:[%s2823 + $0x50] sm:$0xff]
        %v2835 = vld [vmem:[%s2823 + $0x58] sm:$0xff]
        %v2836 = vld [vmem:[%s2823 + $0x60] sm:$0xff]
        %v2837 = vld [vmem:[%s2823 + $0x68] sm:$0xff]
        %v2852 = vunpack.c.l.b16 %v2824
        %v2853 = vunpack.c.h.b16 %v2824
        %v2854 = vunpack.c.l.b16 %v2825
        %v2855 = vunpack.c.h.b16 %v2825
        %v2856 = vunpack.c.l.b16 %v2826
        %v2857 = vunpack.c.h.b16 %v2826
        %v2858 = vunpack.c.l.b16 %v2827
        %v2859 = vunpack.c.h.b16 %v2827
        %v2860 = vunpack.c.l.b16 %v2828
        %v2861 = vunpack.c.h.b16 %v2828
        %v2862 = vunpack.c.l.b16 %v2829
        %v2863 = vunpack.c.h.b16 %v2829
        %v2864 = vunpack.c.l.b16 %v2830
        %v2865 = vunpack.c.h.b16 %v2830
        %v2866 = vunpack.c.l.b16 %v2831
        %v2867 = vunpack.c.h.b16 %v2831
        %v2868 = vunpack.c.l.b16 %v2832
        %v2869 = vunpack.c.h.b16 %v2832
        %v2870 = vunpack.c.l.b16 %v2833
        %v2871 = vunpack.c.h.b16 %v2833
        %v2872 = vunpack.c.l.b16 %v2834
        %v2873 = vunpack.c.h.b16 %v2834
        %v2874 = vunpack.c.l.b16 %v2835
        %v2875 = vunpack.c.h.b16 %v2835
        %v2876 = vunpack.c.l.b16 %v2836
        %v2877 = vunpack.c.h.b16 %v2836
        %v2878 = vunpack.c.l.b16 %v2837
        %v2879 = vunpack.c.h.b16 %v2837
        %v2880 = vpack.c.b16 %v2854, %v2852
        %v2881 = vpack.c.b16 %v2855, %v2853
        %v2882 = vpack.c.b16 %v2858, %v2856
        %v2883 = vpack.c.b16 %v2859, %v2857
        %v2884 = vpack.c.b16 %v2862, %v2860
        %v2885 = vpack.c.b16 %v2863, %v2861
        %v2886 = vpack.c.b16 %v2866, %v2864
        %v2887 = vpack.c.b16 %v2867, %v2865
        %v2888 = vpack.c.b16 %v2870, %v2868
        %v2889 = vpack.c.b16 %v2871, %v2869
        %v2890 = vpack.c.b16 %v2874, %v2872
        %v2891 = vpack.c.b16 %v2875, %v2873
        %v2892 = vpack.c.b16 %v2878, %v2876
        %v2893 = vpack.c.b16 %v2879, %v2877
        %v2902 = vsel %vm2708, %v2881, 0
        %v2905 = vsel %vm2708, %v2883, 0
        %v2908 = vsel %vm2708, %v2885, 0
        %v2911 = vsel %vm2708, %v2887, 0
        %v2914 = vsel %vm2708, %v2889, 0
        %v2917 = vsel %vm2708, %v2891, 0
        %v2920 = vsel %vm2708, %v2893, 0
        %2922 = vmatprep.subr.bf16.mxu0 0
        %2923 = vmatpush1.bf16.msra.mxu0 %v2615
        %2924 = vmatprep.subr.bf16.mxu0 0
        %2925 = vmatpush1.bf16.msra.mxu0 %v2616
        %2926 = vmatprep.subr.bf16.mxu0 0
        %2927 = vmatpush1.bf16.msra.mxu0 %v2617
        %2928 = vmatprep.subr.bf16.mxu0 0
        %2929 = vmatpush1.bf16.msra.mxu0 %v2618
        %2930 = vmatprep.subr.bf16.mxu0 0
        %2931 = vmatpush1.bf16.msra.mxu0 %v2619
        %2932 = vmatprep.subr.bf16.mxu0 0
        %2933 = vmatpush1.bf16.msra.mxu0 %v2620
        %2934 = vmatprep.subr.bf16.mxu0 0
        %2935 = vmatpush1.bf16.msra.mxu0 %v2621
        %2936 = vmatprep.subr.bf16.mxu0 0
        %2937 = vmatpush1.bf16.msra.mxu0 %v2622
        %2938 = vmatprep.subr.bf16.mxu0 0
        %2939 = vmatpush1.bf16.msra.mxu0 %v2623
        %2940 = vmatprep.subr.bf16.mxu0 0
        %2941 = vmatpush1.bf16.msra.mxu0 %v2624
        %2942 = vmatprep.subr.bf16.mxu0 0
        %2943 = vmatpush1.bf16.msra.mxu0 %v2625
        %2944 = vmatprep.subr.bf16.mxu0 0
        %2945 = vmatpush1.bf16.msra.mxu0 %v2626
        %2946 = vmatprep.subr.bf16.mxu0 0
        %2947 = vmatpush1.bf16.msra.mxu0 %v2627
        %2948 = vmatprep.subr.bf16.mxu0 0
        %2949 = vmatpush1.bf16.msra.mxu0 %v2628
        %2950 = vmatprep.subr.bf16.mxu0 0
        %2951 = vmatpush1.bf16.msra.mxu0 %v2629
        %2952 = vmatprep.subr.bf16.mxu0 0
        %2953 = vmatpush1.bf16.msra.mxu0 %v2732
        %2954 = vmatprep.mubr.bf16.mxu0 %v2902
        %2955 = vmatmul.mubr.bf16.gmra.mrb[0].mxu0 %v2880
        %v2956 = vpop.f32.mrb[0].mxu0
        %v2957 = vadd.f32 0.0, %v2956
        %v2958 = vpop.f32.mrb[0].mxu0
        %v2959 = vpop.f32.mrb[0].mxu0
        %v2960 = vadd.f32 0.0, %v2959
        %v2961 = vpop.f32.mrb[0].mxu0
        %2962 = vmatprep.mubr.bf16.mxu0 %v2905
        %2963 = vmatmul.mubr.bf16.gmra.mrb[0].mxu0 %v2882
        %v2964 = vpop.f32.mrb[0].mxu0
        %v2965 = vadd.f32 0.0, %v2964
        %v2966 = vpop.f32.mrb[0].mxu0
        %v2967 = vpop.f32.mrb[0].mxu0
        %v2968 = vadd.f32 0.0, %v2967
        %v2969 = vpop.f32.mrb[0].mxu0
        %2970 = vmatprep.mubr.bf16.mxu0 %v2908
        %2971 = vmatmul.mubr.bf16.gmra.mrb[0].mxu0 %v2884
        %v2972 = vpop.f32.mrb[0].mxu0
        %v2973 = vadd.f32 0.0, %v2972
        %v2974 = vpop.f32.mrb[0].mxu0
        %v2975 = vpop.f32.mrb[0].mxu0
        %v2976 = vadd.f32 0.0, %v2975
        %v2977 = vpop.f32.mrb[0].mxu0
        %2978 = vmatprep.mubr.bf16.mxu0 %v2911
        %2979 = vmatmul.mubr.bf16.gmra.mrb[0].mxu0 %v2886
        %v2980 = vpop.f32.mrb[0].mxu0
        %v2981 = vadd.f32 0.0, %v2980
        %v2982 = vpop.f32.mrb[0].mxu0
        %v2983 = vpop.f32.mrb[0].mxu0
        %v2984 = vadd.f32 0.0, %v2983
        %v2985 = vpop.f32.mrb[0].mxu0
        %2986 = vmatprep.mubr.bf16.mxu0 %v2914
        %2987 = vmatmul.mubr.bf16.gmra.mrb[0].mxu0 %v2888
        %v2988 = vpop.f32.mrb[0].mxu0
        %v2989 = vadd.f32 0.0, %v2988
        %v2990 = vpop.f32.mrb[0].mxu0
        %v2991 = vpop.f32.mrb[0].mxu0
        %v2992 = vadd.f32 0.0, %v2991
        %v2993 = vpop.f32.mrb[0].mxu0
        %2994 = vmatprep.mubr.bf16.mxu0 %v2917
        %2995 = vmatmul.mubr.bf16.gmra.mrb[0].mxu0 %v2890
        %v2996 = vpop.f32.mrb[0].mxu0
        %v2997 = vadd.f32 0.0, %v2996
        %v2998 = vpop.f32.mrb[0].mxu0
        %v2999 = vpop.f32.mrb[0].mxu0
        %v3000 = vadd.f32 0.0, %v2999
        %v3001 = vpop.f32.mrb[0].mxu0
        %3002 = vmatprep.mubr.bf16.mxu0 %v2920
        %3003 = vmatmul.mubr.bf16.gmra.mrb[0].mxu0 %v2892
        %v3004 = vpop.f32.mrb[0].mxu0
        %v3005 = vadd.f32 0.0, %v3004
        %v3006 = vpop.f32.mrb[0].mxu0
        %v3007 = vpop.f32.mrb[0].mxu0
        %v3008 = vadd.f32 0.0, %v3007
        %v3009 = vpop.f32.mrb[0].mxu0
        %3010 = vdwg.mxu0
        %v3011 = vmax.f32 %v2769, %v2957
        %v3012 = vmax.f32 %v2772, %v2960
        %v3013 = vmax.f32 %v2777, %v2965
        %v3014 = vmax.f32 %v2780, %v2968
        %v3015 = vmax.f32 %v2785, %v2973
        %v3016 = vmax.f32 %v2788, %v2976
        %v3017 = vmax.f32 %v2793, %v2981
        %v3018 = vmax.f32 %v2796, %v2984
        %v3019 = vmax.f32 %v2801, %v2989
        %v3020 = vmax.f32 %v2804, %v2992
        %v3021 = vmax.f32 %v2809, %v2997
        %v3022 = vmax.f32 %v2812, %v3000
        %v3023 = vmax.f32 %v2817, %v3005
        %v3024 = vmax.f32 %v2820, %v3008
        %v3025 = vld [vmem:[%s2] sm:$0x1]
        %v3027 = vlaneseq
        %v3028 = vshrl.u32 %v3027, 7
        %v3029 = vsub.s32 0, %v3028
        %v3030 = vrot.slane %v3025, %v3029
        %v3032 = vadd.f32 %v3011, %v3030
        %v3033 = vadd.f32 %v3012, %v3030
        %v3034 = vadd.f32 %v3013, %v3030
        %v3035 = vadd.f32 %v3014, %v3030
        %v3036 = vadd.f32 %v3015, %v3030
        %v3037 = vadd.f32 %v3016, %v3030
        %v3038 = vadd.f32 %v3017, %v3030
        %v3039 = vadd.f32 %v3018, %v3030
        %v3040 = vadd.f32 %v3019, %v3030
        %v3041 = vadd.f32 %v3020, %v3030
        %v3042 = vadd.f32 %v3021, %v3030
        %v3043 = vadd.f32 %v3022, %v3030
        %v3044 = vadd.f32 %v3023, %v3030
        %v3045 = vadd.f32 %v3024, %v3030
        %v3046 = vmax.f32 %v3032, 0.0
        %v3047 = vmax.f32 %v3033, 0.0
        %v3048 = vmax.f32 %v3034, 0.0
        %v3049 = vmax.f32 %v3035, 0.0
        %v3050 = vmax.f32 %v3036, 0.0
        %v3051 = vmax.f32 %v3037, 0.0
        %v3052 = vmax.f32 %v3038, 0.0
        %v3053 = vmax.f32 %v3039, 0.0
        %v3054 = vmax.f32 %v3040, 0.0
        %v3055 = vmax.f32 %v3041, 0.0
        %v3056 = vmax.f32 %v3042, 0.0
        %v3057 = vmax.f32 %v3043, 0.0
        %v3058 = vmax.f32 %v3044, 0.0
        %v3059 = vmax.f32 %v3045, 0.0
        %v3060 = vpack.c.bf16 %v3047, %v3046
        %v3061 = vpack.c.bf16 %v3049, %v3048
        %v3062 = vpack.c.bf16 %v3051, %v3050
        %v3063 = vpack.c.bf16 %v3053, %v3052
        %v3064 = vpack.c.bf16 %v3055, %v3054
        %v3065 = vpack.c.bf16 %v3057, %v3056
        %v3066 = vpack.c.bf16 %v3059, %v3058
        %3067 = vst [vmem:[#allocation2] sm:$0xff] %v3060
        %3068 = vst [vmem:[#allocation2 + $0x8] sm:$0xff] %v3061
        %3069 = vst [vmem:[#allocation2 + $0x10] sm:$0xff] %v3062
        %3070 = vst [vmem:[#allocation2 + $0x18] sm:$0xff] %v3063
        %3071 = vst [vmem:[#allocation2 + $0x20] sm:$0xff] %v3064
        %3072 = vst [vmem:[#allocation2 + $0x28] sm:$0xff] %v3065
        %3073 = vst [vmem:[#allocation2 + $0x30] sm:$0xff] %v3066
        %v3074 = vld [vmem:[#allocation2] sm:$0xff]
        %v3075 = vld [vmem:[#allocation2 + $0x8] sm:$0xff]
        %v3076 = vld [vmem:[#allocation2 + $0x10] sm:$0xff]
        %v3077 = vld [vmem:[#allocation2 + $0x18] sm:$0xff]
        %v3078 = vld [vmem:[#allocation2 + $0x20] sm:$0xff]
        %v3079 = vld [vmem:[#allocation2 + $0x28] sm:$0xff]
        %v3080 = vld [vmem:[#allocation2 + $0x30] sm:$0x3f]
        %v3081 = vld [vmem:[%s4] sm:$0xff]
        %v3082 = vld [vmem:[%s4 + $0x8] sm:$0xff]
        %v3083 = vld [vmem:[%s4 + $0x10] sm:$0xff]
        %v3084 = vld [vmem:[%s4 + $0x18] sm:$0xff]
        %v3085 = vld [vmem:[%s4 + $0x20] sm:$0xff]
        %v3086 = vld [vmem:[%s4 + $0x28] sm:$0xff]
        %v3087 = vld [vmem:[%s4 + $0x30] sm:$0xff]
        %v3088 = vld [vmem:[%s4 + $0x38] sm:$0xff]
        %v3089 = vld [vmem:[%s4 + $0x40] sm:$0xff]
        %v3090 = vld [vmem:[%s4 + $0x48] sm:$0xff]
        %v3091 = vld [vmem:[%s4 + $0x50] sm:$0xff]
        %v3092 = vld [vmem:[%s4 + $0x58] sm:$0xff]
        %v3093 = vld [vmem:[%s4 + $0x60] sm:$0xff]
        %v3094 = vld [vmem:[%s4 + $0x68] sm:$0xff]
        %v3095 = vld [vmem:[%s4 + $0x70] sm:$0xff]
        %v3096 = vld [vmem:[%s4 + $0x78] sm:$0xff]
        %v3097 = vld [vmem:[#allocation2 + $0x30] sm:$0x7f]
        %s3098 = scalar_lea.vmem %s4, 128
        %v3099 = vld [vmem:[%s3098] sm:$0xff]
        %v3100 = vld [vmem:[%s3098 + $0x8] sm:$0xff]
        %v3101 = vld [vmem:[%s3098 + $0x10] sm:$0xff]
        %v3102 = vld [vmem:[%s3098 + $0x18] sm:$0xff]
        %v3103 = vld [vmem:[%s3098 + $0x20] sm:$0xff]
        %v3104 = vld [vmem:[%s3098 + $0x28] sm:$0xff]
        %v3105 = vld [vmem:[%s3098 + $0x30] sm:$0xff]
        %v3106 = vld [vmem:[%s3098 + $0x38] sm:$0xff]
        %v3107 = vld [vmem:[%s3098 + $0x40] sm:$0xff]
        %v3108 = vld [vmem:[%s3098 + $0x48] sm:$0xff]
        %v3109 = vld [vmem:[%s3098 + $0x50] sm:$0xff]
        %v3110 = vld [vmem:[%s3098 + $0x58] sm:$0xff]
        %v3111 = vld [vmem:[%s3098 + $0x60] sm:$0xff]
        %v3112 = vld [vmem:[%s3098 + $0x68] sm:$0xff]
        %v3113 = vld [vmem:[%s3098 + $0x70] sm:$0xff]
        %v3114 = vld [vmem:[%s3098 + $0x78] sm:$0xff]
        %v3116 = vshrl.u32 %v3074, 16
        %v3118 = vshll.u32 %v3074, 16
        %v3120 = vrot.slane %v3118, 1
        %v3121 = vor.u32 %v3116, %v3120
        %v3123 = vshll.u32 %v3075, 16
        %v3125 = vrot.slane %v3123, 1
        %v3126 = vsel %vm580, %v3121, %v3125
        %v3127 = vshrl.u32 %v3075, 16
        %v3129 = vor.u32 %v3127, %v3125
        %v3131 = vshll.u32 %v3076, 16
        %v3133 = vrot.slane %v3131, 1
        %v3134 = vsel %vm580, %v3129, %v3133
        %v3135 = vshrl.u32 %v3076, 16
        %v3137 = vor.u32 %v3135, %v3133
        %v3139 = vshll.u32 %v3077, 16
        %v3141 = vrot.slane %v3139, 1
        %v3142 = vsel %vm580, %v3137, %v3141
        %v3143 = vshrl.u32 %v3077, 16
        %v3145 = vor.u32 %v3143, %v3141
        %v3147 = vshll.u32 %v3078, 16
        %v3149 = vrot.slane %v3147, 1
        %v3150 = vsel %vm580, %v3145, %v3149
        %v3151 = vshrl.u32 %v3078, 16
        %v3153 = vor.u32 %v3151, %v3149
        %v3155 = vshll.u32 %v3079, 16
        %v3157 = vrot.slane %v3155, 1
        %v3158 = vsel %vm580, %v3153, %v3157
        %v3159 = vshrl.u32 %v3079, 16
        %v3161 = vor.u32 %v3159, %v3157
        %v3163 = vshll.u32 %v3097, 16
        %v3165 = vrot.slane %v3163, 1
        %v3166 = vsel %vm580, %v3161, %v3165
        %v3167 = vshrl.u32 %v3097, 16
        %v3169 = vor.u32 %v3167, %v3165
        %v3193 = vunpack.c.l.b16 %v3099
        %v3194 = vunpack.c.h.b16 %v3099
        %v3195 = vunpack.c.l.b16 %v3100
        %v3196 = vunpack.c.h.b16 %v3100
        %v3197 = vunpack.c.l.b16 %v3101
        %v3198 = vunpack.c.h.b16 %v3101
        %v3199 = vunpack.c.l.b16 %v3102
        %v3200 = vunpack.c.h.b16 %v3102
        %v3201 = vunpack.c.l.b16 %v3103
        %v3202 = vunpack.c.h.b16 %v3103
        %v3203 = vunpack.c.l.b16 %v3104
        %v3204 = vunpack.c.h.b16 %v3104
        %v3205 = vunpack.c.l.b16 %v3105
        %v3206 = vunpack.c.h.b16 %v3105
        %v3207 = vunpack.c.l.b16 %v3106
        %v3208 = vunpack.c.h.b16 %v3106
        %v3209 = vunpack.c.l.b16 %v3107
        %v3210 = vunpack.c.h.b16 %v3107
        %v3211 = vunpack.c.l.b16 %v3108
        %v3212 = vunpack.c.h.b16 %v3108
        %v3213 = vunpack.c.l.b16 %v3109
        %v3214 = vunpack.c.h.b16 %v3109
        %v3215 = vunpack.c.l.b16 %v3110
        %v3216 = vunpack.c.h.b16 %v3110
        %v3217 = vunpack.c.l.b16 %v3111
        %v3218 = vunpack.c.h.b16 %v3111
        %v3219 = vunpack.c.l.b16 %v3112
        %v3220 = vunpack.c.h.b16 %v3112
        %v3221 = vunpack.c.l.b16 %v3113
        %v3222 = vunpack.c.h.b16 %v3113
        %v3223 = vunpack.c.l.b16 %v3114
        %v3224 = vunpack.c.h.b16 %v3114
        %v3225 = vpack.c.b16 %v3195, %v3193
        %v3226 = vpack.c.b16 %v3196, %v3194
        %v3227 = vpack.c.b16 %v3199, %v3197
        %v3228 = vpack.c.b16 %v3200, %v3198
        %v3229 = vpack.c.b16 %v3203, %v3201
        %v3230 = vpack.c.b16 %v3204, %v3202
        %v3231 = vpack.c.b16 %v3207, %v3205
        %v3232 = vpack.c.b16 %v3208, %v3206
        %v3233 = vpack.c.b16 %v3211, %v3209
        %v3234 = vpack.c.b16 %v3212, %v3210
        %v3235 = vpack.c.b16 %v3215, %v3213
        %v3236 = vpack.c.b16 %v3216, %v3214
        %v3237 = vpack.c.b16 %v3219, %v3217
        %v3238 = vpack.c.b16 %v3220, %v3218
        %v3239 = vpack.c.b16 %v3223, %v3221
        %v3240 = vpack.c.b16 %v3224, %v3222
        %3257 = vmatprep.subr.bf16.mxu0 %v3226
        %3258 = vmatpush1.bf16.msra.mxu0 %v3225
        %3259 = vmatprep.subr.bf16.mxu0 %v3228
        %3260 = vmatpush1.bf16.msra.mxu0 %v3227
        %3261 = vmatprep.subr.bf16.mxu0 %v3230
        %3262 = vmatpush1.bf16.msra.mxu0 %v3229
        %3263 = vmatprep.subr.bf16.mxu0 %v3232
        %3264 = vmatpush1.bf16.msra.mxu0 %v3231
        %3265 = vmatprep.subr.bf16.mxu0 %v3234
        %3266 = vmatpush1.bf16.msra.mxu0 %v3233
        %3267 = vmatprep.subr.bf16.mxu0 %v3236
        %3268 = vmatpush1.bf16.msra.mxu0 %v3235
        %3269 = vmatprep.subr.bf16.mxu0 %v3238
        %3270 = vmatpush1.bf16.msra.mxu0 %v3237
        %3271 = vmatprep.subr.bf16.mxu0 %v3240
        %3272 = vmatpush1.bf16.msra.mxu0 %v3239
        %3273 = vmatprep.subr.bf16.mxu0 0
        %3274 = vmatpush1.bf16.msra.mxu0 0
        %3275 = vmatprep.subr.bf16.mxu0 0
        %3276 = vmatpush1.bf16.msra.mxu0 0
        %3277 = vmatprep.subr.bf16.mxu0 0
        %3278 = vmatpush1.bf16.msra.mxu0 0
        %3279 = vmatprep.subr.bf16.mxu0 0
        %3280 = vmatpush1.bf16.msra.mxu0 0
        %3281 = vmatprep.subr.bf16.mxu0 0
        %3282 = vmatpush1.bf16.msra.mxu0 0
        %3283 = vmatprep.subr.bf16.mxu0 0
        %3284 = vmatpush1.bf16.msra.mxu0 0
        %3285 = vmatprep.subr.bf16.mxu0 0
        %3286 = vmatpush1.bf16.msra.mxu0 0
        %3287 = vmatprep.subr.bf16.mxu0 0
        %3288 = vmatpush1.bf16.msra.mxu0 0
        %3289 = vmatprep.mubr.bf16.mxu0 0
        %3290 = vmatmul.mubr.bf16.gmra.mrb[0].mxu0 %v3126
        %v3291 = vpop.f32.mrb[0].mxu0
        %v3292 = vadd.f32 0.0, %v3291
        %v3293 = vpop.f32.mrb[0].mxu0
        %v3294 = vadd.f32 0.0, %v3293
        %v3295 = vpop.f32.mrb[0].mxu0
        %v3296 = vadd.f32 0.0, %v3295
        %v3297 = vpop.f32.mrb[0].mxu0
        %v3298 = vadd.f32 0.0, %v3297
        %3299 = vmatprep.mubr.bf16.mxu0 0
        %3300 = vmatmul.mubr.bf16.gmra.mrb[0].mxu0 %v3134
        %v3301 = vpop.f32.mrb[0].mxu0
        %v3302 = vadd.f32 0.0, %v3301
        %v3303 = vpop.f32.mrb[0].mxu0
        %v3304 = vadd.f32 0.0, %v3303
        %v3305 = vpop.f32.mrb[0].mxu0
        %v3306 = vadd.f32 0.0, %v3305
        %v3307 = vpop.f32.mrb[0].mxu0
        %v3308 = vadd.f32 0.0, %v3307
        %3309 = vmatprep.mubr.bf16.mxu0 0
        %3310 = vmatmul.mubr.bf16.gmra.mrb[0].mxu0 %v3142
        %v3311 = vpop.f32.mrb[0].mxu0
        %v3312 = vadd.f32 0.0, %v3311
        %v3313 = vpop.f32.mrb[0].mxu0
        %v3314 = vadd.f32 0.0, %v3313
        %v3315 = vpop.f32.mrb[0].mxu0
        %v3316 = vadd.f32 0.0, %v3315
        %v3317 = vpop.f32.mrb[0].mxu0
        %v3318 = vadd.f32 0.0, %v3317
        %3319 = vmatprep.mubr.bf16.mxu0 0
        %3320 = vmatmul.mubr.bf16.gmra.mrb[0].mxu0 %v3150
        %v3321 = vpop.f32.mrb[0].mxu0
        %v3322 = vadd.f32 0.0, %v3321
        %v3323 = vpop.f32.mrb[0].mxu0
        %v3324 = vadd.f32 0.0, %v3323
        %v3325 = vpop.f32.mrb[0].mxu0
        %v3326 = vadd.f32 0.0, %v3325
        %v3327 = vpop.f32.mrb[0].mxu0
        %v3328 = vadd.f32 0.0, %v3327
        %3329 = vmatprep.mubr.bf16.mxu0 0
        %3330 = vmatmul.mubr.bf16.gmra.mrb[0].mxu0 %v3158
        %v3331 = vpop.f32.mrb[0].mxu0
        %v3332 = vadd.f32 0.0, %v3331
        %v3333 = vpop.f32.mrb[0].mxu0
        %v3334 = vadd.f32 0.0, %v3333
        %v3335 = vpop.f32.mrb[0].mxu0
        %v3336 = vadd.f32 0.0, %v3335
        %v3337 = vpop.f32.mrb[0].mxu0
        %v3338 = vadd.f32 0.0, %v3337
        %3339 = vmatprep.mubr.bf16.mxu0 0
        %3340 = vmatmul.mubr.bf16.gmra.mrb[0].mxu0 %v3166
        %v3341 = vpop.f32.mrb[0].mxu0
        %v3342 = vadd.f32 0.0, %v3341
        %v3343 = vpop.f32.mrb[0].mxu0
        %v3344 = vadd.f32 0.0, %v3343
        %v3345 = vpop.f32.mrb[0].mxu0
        %v3346 = vadd.f32 0.0, %v3345
        %v3347 = vpop.f32.mrb[0].mxu0
        %v3348 = vadd.f32 0.0, %v3347
        %3349 = vmatprep.mubr.bf16.mxu0 0
        %3350 = vmatmul.mubr.bf16.gmra.mrb[0].mxu0 %v3169
        %v3351 = vpop.f32.mrb[0].mxu0
        %v3352 = vadd.f32 0.0, %v3351
        %v3353 = vpop.f32.mrb[0].mxu0
        %v3354 = vadd.f32 0.0, %v3353
        %v3355 = vpop.f32.mrb[0].mxu0
        %v3356 = vadd.f32 0.0, %v3355
        %v3357 = vpop.f32.mrb[0].mxu0
        %v3358 = vadd.f32 0.0, %v3357
        %3359 = vdwg.mxu0
        %v3376 = vunpack.c.l.b16 %v3081
        %v3377 = vunpack.c.h.b16 %v3081
        %v3378 = vunpack.c.l.b16 %v3082
        %v3379 = vunpack.c.h.b16 %v3082
        %v3380 = vunpack.c.l.b16 %v3083
        %v3381 = vunpack.c.h.b16 %v3083
        %v3382 = vunpack.c.l.b16 %v3084
        %v3383 = vunpack.c.h.b16 %v3084
        %v3384 = vunpack.c.l.b16 %v3085
        %v3385 = vunpack.c.h.b16 %v3085
        %v3386 = vunpack.c.l.b16 %v3086
        %v3387 = vunpack.c.h.b16 %v3086
        %v3388 = vunpack.c.l.b16 %v3087
        %v3389 = vunpack.c.h.b16 %v3087
        %v3390 = vunpack.c.l.b16 %v3088
        %v3391 = vunpack.c.h.b16 %v3088
        %v3392 = vunpack.c.l.b16 %v3089
        %v3393 = vunpack.c.h.b16 %v3089
        %v3394 = vunpack.c.l.b16 %v3090
        %v3395 = vunpack.c.h.b16 %v3090
        %v3396 = vunpack.c.l.b16 %v3091
        %v3397 = vunpack.c.h.b16 %v3091
        %v3398 = vunpack.c.l.b16 %v3092
        %v3399 = vunpack.c.h.b16 %v3092
        %v3400 = vunpack.c.l.b16 %v3093
        %v3401 = vunpack.c.h.b16 %v3093
        %v3402 = vunpack.c.l.b16 %v3094
        %v3403 = vunpack.c.h.b16 %v3094
        %v3404 = vunpack.c.l.b16 %v3095
        %v3405 = vunpack.c.h.b16 %v3095
        %v3406 = vunpack.c.l.b16 %v3096
        %v3407 = vunpack.c.h.b16 %v3096
        %v3408 = vpack.c.b16 %v3378, %v3376
        %v3409 = vpack.c.b16 %v3379, %v3377
        %v3410 = vpack.c.b16 %v3382, %v3380
        %v3411 = vpack.c.b16 %v3383, %v3381
        %v3412 = vpack.c.b16 %v3386, %v3384
        %v3413 = vpack.c.b16 %v3387, %v3385
        %v3414 = vpack.c.b16 %v3390, %v3388
        %v3415 = vpack.c.b16 %v3391, %v3389
        %v3416 = vpack.c.b16 %v3394, %v3392
        %v3417 = vpack.c.b16 %v3395, %v3393
        %v3418 = vpack.c.b16 %v3398, %v3396
        %v3419 = vpack.c.b16 %v3399, %v3397
        %v3420 = vpack.c.b16 %v3402, %v3400
        %v3421 = vpack.c.b16 %v3403, %v3401
        %v3422 = vpack.c.b16 %v3406, %v3404
        %v3423 = vpack.c.b16 %v3407, %v3405
        %3440 = vmatprep.subr.bf16.mxu0 %v3409
        %3441 = vmatpush1.bf16.msra.mxu0 %v3408
        %3442 = vmatprep.subr.bf16.mxu0 %v3411
        %3443 = vmatpush1.bf16.msra.mxu0 %v3410
        %3444 = vmatprep.subr.bf16.mxu0 %v3413
        %3445 = vmatpush1.bf16.msra.mxu0 %v3412
        %3446 = vmatprep.subr.bf16.mxu0 %v3415
        %3447 = vmatpush1.bf16.msra.mxu0 %v3414
        %3448 = vmatprep.subr.bf16.mxu0 %v3417
        %3449 = vmatpush1.bf16.msra.mxu0 %v3416
        %3450 = vmatprep.subr.bf16.mxu0 %v3419
        %3451 = vmatpush1.bf16.msra.mxu0 %v3418
        %3452 = vmatprep.subr.bf16.mxu0 %v3421
        %3453 = vmatpush1.bf16.msra.mxu0 %v3420
        %3454 = vmatprep.subr.bf16.mxu0 %v3423
        %3455 = vmatpush1.bf16.msra.mxu0 %v3422
        %3456 = vmatprep.subr.bf16.mxu0 0
        %3457 = vmatpush1.bf16.msra.mxu0 0
        %3458 = vmatprep.subr.bf16.mxu0 0
        %3459 = vmatpush1.bf16.msra.mxu0 0
        %3460 = vmatprep.subr.bf16.mxu0 0
        %3461 = vmatpush1.bf16.msra.mxu0 0
        %3462 = vmatprep.subr.bf16.mxu0 0
        %3463 = vmatpush1.bf16.msra.mxu0 0
        %3464 = vmatprep.subr.bf16.mxu0 0
        %3465 = vmatpush1.bf16.msra.mxu0 0
        %3466 = vmatprep.subr.bf16.mxu0 0
        %3467 = vmatpush1.bf16.msra.mxu0 0
        %3468 = vmatprep.subr.bf16.mxu0 0
        %3469 = vmatpush1.bf16.msra.mxu0 0
        %3470 = vmatprep.subr.bf16.mxu0 0
        %3471 = vmatpush1.bf16.msra.mxu0 0
        %3472 = vmatprep.mubr.bf16.mxu0 0
        %3473 = vmatmul.mubr.bf16.gmra.mrb[0].mxu0 %v3074
        %v3474 = vpop.f32.mrb[0].mxu0
        %v3475 = vadd.f32 %v3292, %v3474
        %v3476 = vpop.f32.mrb[0].mxu0
        %v3477 = vadd.f32 %v3294, %v3476
        %v3478 = vpop.f32.mrb[0].mxu0
        %v3479 = vadd.f32 %v3296, %v3478
        %v3480 = vpop.f32.mrb[0].mxu0
        %v3481 = vadd.f32 %v3298, %v3480
        %3482 = vmatprep.mubr.bf16.mxu0 0
        %3483 = vmatmul.mubr.bf16.gmra.mrb[0].mxu0 %v3075
        %v3484 = vpop.f32.mrb[0].mxu0
        %v3485 = vadd.f32 %v3302, %v3484
        %v3486 = vpop.f32.mrb[0].mxu0
        %v3487 = vadd.f32 %v3304, %v3486
        %v3488 = vpop.f32.mrb[0].mxu0
        %v3489 = vadd.f32 %v3306, %v3488
        %v3490 = vpop.f32.mrb[0].mxu0
        %v3491 = vadd.f32 %v3308, %v3490
        %3492 = vmatprep.mubr.bf16.mxu0 0
        %3493 = vmatmul.mubr.bf16.gmra.mrb[0].mxu0 %v3076
        %v3494 = vpop.f32.mrb[0].mxu0
        %v3495 = vadd.f32 %v3312, %v3494
        %v3496 = vpop.f32.mrb[0].mxu0
        %v3497 = vadd.f32 %v3314, %v3496
        %v3498 = vpop.f32.mrb[0].mxu0
        %v3499 = vadd.f32 %v3316, %v3498
        %v3500 = vpop.f32.mrb[0].mxu0
        %v3501 = vadd.f32 %v3318, %v3500
        %3502 = vmatprep.mubr.bf16.mxu0 0
        %3503 = vmatmul.mubr.bf16.gmra.mrb[0].mxu0 %v3077
        %v3504 = vpop.f32.mrb[0].mxu0
        %v3505 = vadd.f32 %v3322, %v3504
        %v3506 = vpop.f32.mrb[0].mxu0
        %v3507 = vadd.f32 %v3324, %v3506
        %v3508 = vpop.f32.mrb[0].mxu0
        %v3509 = vadd.f32 %v3326, %v3508
        %v3510 = vpop.f32.mrb[0].mxu0
        %v3511 = vadd.f32 %v3328, %v3510
        %3512 = vmatprep.mubr.bf16.mxu0 0
        %3513 = vmatmul.mubr.bf16.gmra.mrb[0].mxu0 %v3078
        %v3514 = vpop.f32.mrb[0].mxu0
        %v3515 = vadd.f32 %v3332, %v3514
        %v3516 = vpop.f32.mrb[0].mxu0
        %v3517 = vadd.f32 %v3334, %v3516
        %v3518 = vpop.f32.mrb[0].mxu0
        %v3519 = vadd.f32 %v3336, %v3518
        %v3520 = vpop.f32.mrb[0].mxu0
        %v3521 = vadd.f32 %v3338, %v3520
        %3522 = vmatprep.mubr.bf16.mxu0 0
        %3523 = vmatmul.mubr.bf16.gmra.mrb[0].mxu0 %v3079
        %v3524 = vpop.f32.mrb[0].mxu0
        %v3525 = vadd.f32 %v3342, %v3524
        %v3526 = vpop.f32.mrb[0].mxu0
        %v3527 = vadd.f32 %v3344, %v3526
        %v3528 = vpop.f32.mrb[0].mxu0
        %v3529 = vadd.f32 %v3346, %v3528
        %v3530 = vpop.f32.mrb[0].mxu0
        %v3531 = vadd.f32 %v3348, %v3530
        %3532 = vmatprep.mubr.bf16.mxu0 0
        %3533 = vmatmul.mubr.bf16.gmra.mrb[0].mxu0 %v3080
        %v3534 = vpop.f32.mrb[0].mxu0
        %v3535 = vadd.f32 %v3352, %v3534
        %v3536 = vpop.f32.mrb[0].mxu0
        %v3537 = vadd.f32 %v3354, %v3536
        %v3538 = vpop.f32.mrb[0].mxu0
        %v3539 = vadd.f32 %v3356, %v3538
        %v3540 = vpop.f32.mrb[0].mxu0
        %v3541 = vadd.f32 %v3358, %v3540
        %3542 = vdwg.mxu0
        %v3543 = vld [vmem:[#allocation2] sm:$0xfe]
        %s3544 = scalar_lea.vmem %s4, 256
        %v3545 = vld [vmem:[%s3544] sm:$0xff]
        %v3546 = vld [vmem:[%s3544 + $0x8] sm:$0xff]
        %v3547 = vld [vmem:[%s3544 + $0x10] sm:$0xff]
        %v3548 = vld [vmem:[%s3544 + $0x18] sm:$0xff]
        %v3549 = vld [vmem:[%s3544 + $0x20] sm:$0xff]
        %v3550 = vld [vmem:[%s3544 + $0x28] sm:$0xff]
        %v3551 = vld [vmem:[%s3544 + $0x30] sm:$0xff]
        %v3552 = vld [vmem:[%s3544 + $0x38] sm:$0xff]
        %v3553 = vld [vmem:[%s3544 + $0x40] sm:$0xff]
        %v3554 = vld [vmem:[%s3544 + $0x48] sm:$0xff]
        %v3555 = vld [vmem:[%s3544 + $0x50] sm:$0xff]
        %v3556 = vld [vmem:[%s3544 + $0x58] sm:$0xff]
        %v3557 = vld [vmem:[%s3544 + $0x60] sm:$0xff]
        %v3558 = vld [vmem:[%s3544 + $0x68] sm:$0xff]
        %v3559 = vld [vmem:[%s3544 + $0x70] sm:$0xff]
        %v3560 = vld [vmem:[%s3544 + $0x78] sm:$0xff]
        %v3568 = vrot.slane %v3543, 1
        %v3569 = vrot.slane %v3075, 1
        %v3570 = vsel %vm1316, %v3568, %v3569
        %v3571 = vrot.slane %v3076, 1
        %v3572 = vsel %vm1316, %v3569, %v3571
        %v3573 = vrot.slane %v3077, 1
        %v3574 = vsel %vm1316, %v3571, %v3573
        %v3575 = vrot.slane %v3078, 1
        %v3576 = vsel %vm1316, %v3573, %v3575
        %v3577 = vrot.slane %v3079, 1
        %v3578 = vsel %vm1316, %v3575, %v3577
        %v3579 = vrot.slane %v3097, 1
        %v3580 = vsel %vm1316, %v3577, %v3579
        %v3604 = vunpack.c.l.b16 %v3545
        %v3605 = vunpack.c.h.b16 %v3545
        %v3606 = vunpack.c.l.b16 %v3546
        %v3607 = vunpack.c.h.b16 %v3546
        %v3608 = vunpack.c.l.b16 %v3547
        %v3609 = vunpack.c.h.b16 %v3547
        %v3610 = vunpack.c.l.b16 %v3548
        %v3611 = vunpack.c.h.b16 %v3548
        %v3612 = vunpack.c.l.b16 %v3549
        %v3613 = vunpack.c.h.b16 %v3549
        %v3614 = vunpack.c.l.b16 %v3550
        %v3615 = vunpack.c.h.b16 %v3550
        %v3616 = vunpack.c.l.b16 %v3551
        %v3617 = vunpack.c.h.b16 %v3551
        %v3618 = vunpack.c.l.b16 %v3552
        %v3619 = vunpack.c.h.b16 %v3552
        %v3620 = vunpack.c.l.b16 %v3553
        %v3621 = vunpack.c.h.b16 %v3553
        %v3622 = vunpack.c.l.b16 %v3554
        %v3623 = vunpack.c.h.b16 %v3554
        %v3624 = vunpack.c.l.b16 %v3555
        %v3625 = vunpack.c.h.b16 %v3555
        %v3626 = vunpack.c.l.b16 %v3556
        %v3627 = vunpack.c.h.b16 %v3556
        %v3628 = vunpack.c.l.b16 %v3557
        %v3629 = vunpack.c.h.b16 %v3557
        %v3630 = vunpack.c.l.b16 %v3558
        %v3631 = vunpack.c.h.b16 %v3558
        %v3632 = vunpack.c.l.b16 %v3559
        %v3633 = vunpack.c.h.b16 %v3559
        %v3634 = vunpack.c.l.b16 %v3560
        %v3635 = vunpack.c.h.b16 %v3560
        %v3636 = vpack.c.b16 %v3606, %v3604
        %v3637 = vpack.c.b16 %v3607, %v3605
        %v3638 = vpack.c.b16 %v3610, %v3608
        %v3639 = vpack.c.b16 %v3611, %v3609
        %v3640 = vpack.c.b16 %v3614, %v3612
        %v3641 = vpack.c.b16 %v3615, %v3613
        %v3642 = vpack.c.b16 %v3618, %v3616
        %v3643 = vpack.c.b16 %v3619, %v3617
        %v3644 = vpack.c.b16 %v3622, %v3620
        %v3645 = vpack.c.b16 %v3623, %v3621
        %v3646 = vpack.c.b16 %v3626, %v3624
        %v3647 = vpack.c.b16 %v3627, %v3625
        %v3648 = vpack.c.b16 %v3630, %v3628
        %v3649 = vpack.c.b16 %v3631, %v3629
        %v3650 = vpack.c.b16 %v3634, %v3632
        %v3651 = vpack.c.b16 %v3635, %v3633
        %3668 = vmatprep.subr.bf16.mxu0 %v3637
        %3669 = vmatpush1.bf16.msra.mxu0 %v3636
        %3670 = vmatprep.subr.bf16.mxu0 %v3639
        %3671 = vmatpush1.bf16.msra.mxu0 %v3638
        %3672 = vmatprep.subr.bf16.mxu0 %v3641
        %3673 = vmatpush1.bf16.msra.mxu0 %v3640
        %3674 = vmatprep.subr.bf16.mxu0 %v3643
        %3675 = vmatpush1.bf16.msra.mxu0 %v3642
        %3676 = vmatprep.subr.bf16.mxu0 %v3645
        %3677 = vmatpush1.bf16.msra.mxu0 %v3644
        %3678 = vmatprep.subr.bf16.mxu0 %v3647
        %3679 = vmatpush1.bf16.msra.mxu0 %v3646
        %3680 = vmatprep.subr.bf16.mxu0 %v3649
        %3681 = vmatpush1.bf16.msra.mxu0 %v3648
        %3682 = vmatprep.subr.bf16.mxu0 %v3651
        %3683 = vmatpush1.bf16.msra.mxu0 %v3650
        %3684 = vmatprep.subr.bf16.mxu0 0
        %3685 = vmatpush1.bf16.msra.mxu0 0
        %3686 = vmatprep.subr.bf16.mxu0 0
        %3687 = vmatpush1.bf16.msra.mxu0 0
        %3688 = vmatprep.subr.bf16.mxu0 0
        %3689 = vmatpush1.bf16.msra.mxu0 0
        %3690 = vmatprep.subr.bf16.mxu0 0
        %3691 = vmatpush1.bf16.msra.mxu0 0
        %3692 = vmatprep.subr.bf16.mxu0 0
        %3693 = vmatpush1.bf16.msra.mxu0 0
        %3694 = vmatprep.subr.bf16.mxu0 0
        %3695 = vmatpush1.bf16.msra.mxu0 0
        %3696 = vmatprep.subr.bf16.mxu0 0
        %3697 = vmatpush1.bf16.msra.mxu0 0
        %3698 = vmatprep.subr.bf16.mxu0 0
        %3699 = vmatpush1.bf16.msra.mxu0 0
        %3700 = vmatprep.mubr.bf16.mxu0 0
        %3701 = vmatmul.mubr.bf16.gmra.mrb[0].mxu0 %v3570
        %v3702 = vpop.f32.mrb[0].mxu0
        %v3703 = vadd.f32 0.0, %v3702
        %v3704 = vpop.f32.mrb[0].mxu0
        %v3705 = vadd.f32 0.0, %v3704
        %v3706 = vpop.f32.mrb[0].mxu0
        %v3707 = vadd.f32 0.0, %v3706
        %v3708 = vpop.f32.mrb[0].mxu0
        %v3709 = vadd.f32 0.0, %v3708
        %3710 = vmatprep.mubr.bf16.mxu0 0
        %3711 = vmatmul.mubr.bf16.gmra.mrb[0].mxu0 %v3572
        %v3712 = vpop.f32.mrb[0].mxu0
        %v3713 = vadd.f32 0.0, %v3712
        %v3714 = vpop.f32.mrb[0].mxu0
        %v3715 = vadd.f32 0.0, %v3714
        %v3716 = vpop.f32.mrb[0].mxu0
        %v3717 = vadd.f32 0.0, %v3716
        %v3718 = vpop.f32.mrb[0].mxu0
        %v3719 = vadd.f32 0.0, %v3718
        %3720 = vmatprep.mubr.bf16.mxu0 0
        %3721 = vmatmul.mubr.bf16.gmra.mrb[0].mxu0 %v3574
        %v3722 = vpop.f32.mrb[0].mxu0
        %v3723 = vadd.f32 0.0, %v3722
        %v3724 = vpop.f32.mrb[0].mxu0
        %v3725 = vadd.f32 0.0, %v3724
        %v3726 = vpop.f32.mrb[0].mxu0
        %v3727 = vadd.f32 0.0, %v3726
        %v3728 = vpop.f32.mrb[0].mxu0
        %v3729 = vadd.f32 0.0, %v3728
        %3730 = vmatprep.mubr.bf16.mxu0 0
        %3731 = vmatmul.mubr.bf16.gmra.mrb[0].mxu0 %v3576
        %v3732 = vpop.f32.mrb[0].mxu0
        %v3733 = vadd.f32 0.0, %v3732
        %v3734 = vpop.f32.mrb[0].mxu0
        %v3735 = vadd.f32 0.0, %v3734
        %v3736 = vpop.f32.mrb[0].mxu0
        %v3737 = vadd.f32 0.0, %v3736
        %v3738 = vpop.f32.mrb[0].mxu0
        %v3739 = vadd.f32 0.0, %v3738
        %3740 = vmatprep.mubr.bf16.mxu0 0
        %3741 = vmatmul.mubr.bf16.gmra.mrb[0].mxu0 %v3578
        %v3742 = vpop.f32.mrb[0].mxu0
        %v3743 = vadd.f32 0.0, %v3742
        %v3744 = vpop.f32.mrb[0].mxu0
        %v3745 = vadd.f32 0.0, %v3744
        %v3746 = vpop.f32.mrb[0].mxu0
        %v3747 = vadd.f32 0.0, %v3746
        %v3748 = vpop.f32.mrb[0].mxu0
        %v3749 = vadd.f32 0.0, %v3748
        %3750 = vmatprep.mubr.bf16.mxu0 0
        %3751 = vmatmul.mubr.bf16.gmra.mrb[0].mxu0 %v3580
        %v3752 = vpop.f32.mrb[0].mxu0
        %v3753 = vadd.f32 0.0, %v3752
        %v3754 = vpop.f32.mrb[0].mxu0
        %v3755 = vadd.f32 0.0, %v3754
        %v3756 = vpop.f32.mrb[0].mxu0
        %v3757 = vadd.f32 0.0, %v3756
        %v3758 = vpop.f32.mrb[0].mxu0
        %v3759 = vadd.f32 0.0, %v3758
        %3760 = vmatprep.mubr.bf16.mxu0 0
        %3761 = vmatmul.mubr.bf16.gmra.mrb[0].mxu0 %v3579
        %v3762 = vpop.f32.mrb[0].mxu0
        %v3763 = vadd.f32 0.0, %v3762
        %v3764 = vpop.f32.mrb[0].mxu0
        %v3765 = vadd.f32 0.0, %v3764
        %v3766 = vpop.f32.mrb[0].mxu0
        %v3767 = vadd.f32 0.0, %v3766
        %v3768 = vpop.f32.mrb[0].mxu0
        %v3769 = vadd.f32 0.0, %v3768
        %3770 = vdwg.mxu0
        %v3771 = vadd.f32 %v3475, %v3703
        %v3772 = vadd.f32 %v3477, %v3705
        %v3773 = vadd.f32 %v3479, %v3707
        %v3774 = vadd.f32 %v3481, %v3709
        %v3775 = vadd.f32 %v3485, %v3713
        %v3776 = vadd.f32 %v3487, %v3715
        %v3777 = vadd.f32 %v3489, %v3717
        %v3778 = vadd.f32 %v3491, %v3719
        %v3779 = vadd.f32 %v3495, %v3723
        %v3780 = vadd.f32 %v3497, %v3725
        %v3781 = vadd.f32 %v3499, %v3727
        %v3782 = vadd.f32 %v3501, %v3729
        %v3783 = vadd.f32 %v3505, %v3733
        %v3784 = vadd.f32 %v3507, %v3735
        %v3785 = vadd.f32 %v3509, %v3737
        %v3786 = vadd.f32 %v3511, %v3739
        %v3787 = vadd.f32 %v3515, %v3743
        %v3788 = vadd.f32 %v3517, %v3745
        %v3789 = vadd.f32 %v3519, %v3747
        %v3790 = vadd.f32 %v3521, %v3749
        %v3791 = vadd.f32 %v3525, %v3753
        %v3792 = vadd.f32 %v3527, %v3755
        %v3793 = vadd.f32 %v3529, %v3757
        %v3794 = vadd.f32 %v3531, %v3759
        %v3795 = vadd.f32 %v3535, %v3763
        %v3796 = vadd.f32 %v3537, %v3765
        %v3797 = vadd.f32 %v3539, %v3767
        %v3798 = vadd.f32 %v3541, %v3769
        %v3799 = vld [vmem:[#allocation2 + $0x30] sm:$0xff]
        %s3800 = scalar_lea.vmem %s4, 384
        %v3801 = vld [vmem:[%s3800] sm:$0xff]
        %v3802 = vld [vmem:[%s3800 + $0x8] sm:$0xff]
        %v3803 = vld [vmem:[%s3800 + $0x10] sm:$0xff]
        %v3804 = vld [vmem:[%s3800 + $0x18] sm:$0xff]
        %v3805 = vld [vmem:[%s3800 + $0x20] sm:$0xff]
        %v3806 = vld [vmem:[%s3800 + $0x28] sm:$0xff]
        %v3807 = vld [vmem:[%s3800 + $0x30] sm:$0xff]
        %v3808 = vld [vmem:[%s3800 + $0x38] sm:$0xff]
        %v3809 = vld [vmem:[%s3800 + $0x40] sm:$0xff]
        %v3810 = vld [vmem:[%s3800 + $0x48] sm:$0xff]
        %v3811 = vld [vmem:[%s3800 + $0x50] sm:$0xff]
        %v3812 = vld [vmem:[%s3800 + $0x58] sm:$0xff]
        %v3813 = vld [vmem:[%s3800 + $0x60] sm:$0xff]
        %v3814 = vld [vmem:[%s3800 + $0x68] sm:$0xff]
        %v3815 = vld [vmem:[%s3800 + $0x70] sm:$0xff]
        %v3816 = vld [vmem:[%s3800 + $0x78] sm:$0xff]
        %v3818 = vshrl.u32 %v3543, 16
        %v3820 = vrot.slane %v3818, 1
        %v3821 = vshll.u32 %v3543, 16
        %v3823 = vrot.slane %v3821, 2
        %v3824 = vor.u32 %v3820, %v3823
        %v3825 = vrot.slane %v3127, 1
        %v3826 = vrot.slane %v3123, 2
        %v3827 = vor.u32 %v3825, %v3826
        %v3828 = vsel %vm1730, %v3824, %v3827
        %v3829 = vrot.slane %v3135, 1
        %v3830 = vrot.slane %v3131, 2
        %v3831 = vor.u32 %v3829, %v3830
        %v3832 = vsel %vm1730, %v3827, %v3831
        %v3833 = vrot.slane %v3143, 1
        %v3834 = vrot.slane %v3139, 2
        %v3835 = vor.u32 %v3833, %v3834
        %v3836 = vsel %vm1730, %v3831, %v3835
        %v3837 = vrot.slane %v3151, 1
        %v3838 = vrot.slane %v3147, 2
        %v3839 = vor.u32 %v3837, %v3838
        %v3840 = vsel %vm1730, %v3835, %v3839
        %v3841 = vrot.slane %v3159, 1
        %v3842 = vrot.slane %v3155, 2
        %v3843 = vor.u32 %v3841, %v3842
        %v3844 = vsel %vm1730, %v3839, %v3843
        %v3846 = vshrl.u32 %v3799, 16
        %v3848 = vrot.slane %v3846, 1
        %v3849 = vshll.u32 %v3799, 16
        %v3851 = vrot.slane %v3849, 2
        %v3852 = vor.u32 %v3848, %v3851
        %v3853 = vsel %vm1730, %v3843, %v3852
        %v3877 = vunpack.c.l.b16 %v3801
        %v3878 = vunpack.c.h.b16 %v3801
        %v3879 = vunpack.c.l.b16 %v3802
        %v3880 = vunpack.c.h.b16 %v3802
        %v3881 = vunpack.c.l.b16 %v3803
        %v3882 = vunpack.c.h.b16 %v3803
        %v3883 = vunpack.c.l.b16 %v3804
        %v3884 = vunpack.c.h.b16 %v3804
        %v3885 = vunpack.c.l.b16 %v3805
        %v3886 = vunpack.c.h.b16 %v3805
        %v3887 = vunpack.c.l.b16 %v3806
        %v3888 = vunpack.c.h.b16 %v3806
        %v3889 = vunpack.c.l.b16 %v3807
        %v3890 = vunpack.c.h.b16 %v3807
        %v3891 = vunpack.c.l.b16 %v3808
        %v3892 = vunpack.c.h.b16 %v3808
        %v3893 = vunpack.c.l.b16 %v3809
        %v3894 = vunpack.c.h.b16 %v3809
        %v3895 = vunpack.c.l.b16 %v3810
        %v3896 = vunpack.c.h.b16 %v3810
        %v3897 = vunpack.c.l.b16 %v3811
        %v3898 = vunpack.c.h.b16 %v3811
        %v3899 = vunpack.c.l.b16 %v3812
        %v3900 = vunpack.c.h.b16 %v3812
        %v3901 = vunpack.c.l.b16 %v3813
        %v3902 = vunpack.c.h.b16 %v3813
        %v3903 = vunpack.c.l.b16 %v3814
        %v3904 = vunpack.c.h.b16 %v3814
        %v3905 = vunpack.c.l.b16 %v3815
        %v3906 = vunpack.c.h.b16 %v3815
        %v3907 = vunpack.c.l.b16 %v3816
        %v3908 = vunpack.c.h.b16 %v3816
        %v3909 = vpack.c.b16 %v3879, %v3877
        %v3910 = vpack.c.b16 %v3880, %v3878
        %v3911 = vpack.c.b16 %v3883, %v3881
        %v3912 = vpack.c.b16 %v3884, %v3882
        %v3913 = vpack.c.b16 %v3887, %v3885
        %v3914 = vpack.c.b16 %v3888, %v3886
        %v3915 = vpack.c.b16 %v3891, %v3889
        %v3916 = vpack.c.b16 %v3892, %v3890
        %v3917 = vpack.c.b16 %v3895, %v3893
        %v3918 = vpack.c.b16 %v3896, %v3894
        %v3919 = vpack.c.b16 %v3899, %v3897
        %v3920 = vpack.c.b16 %v3900, %v3898
        %v3921 = vpack.c.b16 %v3903, %v3901
        %v3922 = vpack.c.b16 %v3904, %v3902
        %v3923 = vpack.c.b16 %v3907, %v3905
        %v3924 = vpack.c.b16 %v3908, %v3906
        %3941 = vmatprep.subr.bf16.mxu0 %v3910
        %3942 = vmatpush1.bf16.msra.mxu0 %v3909
        %3943 = vmatprep.subr.bf16.mxu0 %v3912
        %3944 = vmatpush1.bf16.msra.mxu0 %v3911
        %3945 = vmatprep.subr.bf16.mxu0 %v3914
        %3946 = vmatpush1.bf16.msra.mxu0 %v3913
        %3947 = vmatprep.subr.bf16.mxu0 %v3916
        %3948 = vmatpush1.bf16.msra.mxu0 %v3915
        %3949 = vmatprep.subr.bf16.mxu0 %v3918
        %3950 = vmatpush1.bf16.msra.mxu0 %v3917
        %3951 = vmatprep.subr.bf16.mxu0 %v3920
        %3952 = vmatpush1.bf16.msra.mxu0 %v3919
        %3953 = vmatprep.subr.bf16.mxu0 %v3922
        %3954 = vmatpush1.bf16.msra.mxu0 %v3921
        %3955 = vmatprep.subr.bf16.mxu0 %v3924
        %3956 = vmatpush1.bf16.msra.mxu0 %v3923
        %3957 = vmatprep.subr.bf16.mxu0 0
        %3958 = vmatpush1.bf16.msra.mxu0 0
        %3959 = vmatprep.subr.bf16.mxu0 0
        %3960 = vmatpush1.bf16.msra.mxu0 0
        %3961 = vmatprep.subr.bf16.mxu0 0
        %3962 = vmatpush1.bf16.msra.mxu0 0
        %3963 = vmatprep.subr.bf16.mxu0 0
        %3964 = vmatpush1.bf16.msra.mxu0 0
        %3965 = vmatprep.subr.bf16.mxu0 0
        %3966 = vmatpush1.bf16.msra.mxu0 0
        %3967 = vmatprep.subr.bf16.mxu0 0
        %3968 = vmatpush1.bf16.msra.mxu0 0
        %3969 = vmatprep.subr.bf16.mxu0 0
        %3970 = vmatpush1.bf16.msra.mxu0 0
        %3971 = vmatprep.subr.bf16.mxu0 0
        %3972 = vmatpush1.bf16.msra.mxu0 0
        %3973 = vmatprep.mubr.bf16.mxu0 0
        %3974 = vmatmul.mubr.bf16.gmra.mrb[0].mxu0 %v3828
        %v3975 = vpop.f32.mrb[0].mxu0
        %v3976 = vadd.f32 0.0, %v3975
        %v3977 = vpop.f32.mrb[0].mxu0
        %v3978 = vadd.f32 0.0, %v3977
        %v3979 = vpop.f32.mrb[0].mxu0
        %v3980 = vadd.f32 0.0, %v3979
        %v3981 = vpop.f32.mrb[0].mxu0
        %v3982 = vadd.f32 0.0, %v3981
        %3983 = vmatprep.mubr.bf16.mxu0 0
        %3984 = vmatmul.mubr.bf16.gmra.mrb[0].mxu0 %v3832
        %v3985 = vpop.f32.mrb[0].mxu0
        %v3986 = vadd.f32 0.0, %v3985
        %v3987 = vpop.f32.mrb[0].mxu0
        %v3988 = vadd.f32 0.0, %v3987
        %v3989 = vpop.f32.mrb[0].mxu0
        %v3990 = vadd.f32 0.0, %v3989
        %v3991 = vpop.f32.mrb[0].mxu0
        %v3992 = vadd.f32 0.0, %v3991
        %3993 = vmatprep.mubr.bf16.mxu0 0
        %3994 = vmatmul.mubr.bf16.gmra.mrb[0].mxu0 %v3836
        %v3995 = vpop.f32.mrb[0].mxu0
        %v3996 = vadd.f32 0.0, %v3995
        %v3997 = vpop.f32.mrb[0].mxu0
        %v3998 = vadd.f32 0.0, %v3997
        %v3999 = vpop.f32.mrb[0].mxu0
        %v4000 = vadd.f32 0.0, %v3999
        %v4001 = vpop.f32.mrb[0].mxu0
        %v4002 = vadd.f32 0.0, %v4001
        %4003 = vmatprep.mubr.bf16.mxu0 0
        %4004 = vmatmul.mubr.bf16.gmra.mrb[0].mxu0 %v3840
        %v4005 = vpop.f32.mrb[0].mxu0
        %v4006 = vadd.f32 0.0, %v4005
        %v4007 = vpop.f32.mrb[0].mxu0
        %v4008 = vadd.f32 0.0, %v4007
        %v4009 = vpop.f32.mrb[0].mxu0
        %v4010 = vadd.f32 0.0, %v4009
        %v4011 = vpop.f32.mrb[0].mxu0
        %v4012 = vadd.f32 0.0, %v4011
        %4013 = vmatprep.mubr.bf16.mxu0 0
        %4014 = vmatmul.mubr.bf16.gmra.mrb[0].mxu0 %v3844
        %v4015 = vpop.f32.mrb[0].mxu0
        %v4016 = vadd.f32 0.0, %v4015
        %v4017 = vpop.f32.mrb[0].mxu0
        %v4018 = vadd.f32 0.0, %v4017
        %v4019 = vpop.f32.mrb[0].mxu0
        %v4020 = vadd.f32 0.0, %v4019
        %v4021 = vpop.f32.mrb[0].mxu0
        %v4022 = vadd.f32 0.0, %v4021
        %4023 = vmatprep.mubr.bf16.mxu0 0
        %4024 = vmatmul.mubr.bf16.gmra.mrb[0].mxu0 %v3853
        %v4025 = vpop.f32.mrb[0].mxu0
        %v4026 = vadd.f32 0.0, %v4025
        %v4027 = vpop.f32.mrb[0].mxu0
        %v4028 = vadd.f32 0.0, %v4027
        %v4029 = vpop.f32.mrb[0].mxu0
        %v4030 = vadd.f32 0.0, %v4029
        %v4031 = vpop.f32.mrb[0].mxu0
        %v4032 = vadd.f32 0.0, %v4031
        %4033 = vmatprep.mubr.bf16.mxu0 0
        %4034 = vmatmul.mubr.bf16.gmra.mrb[0].mxu0 %v3852
        %v4035 = vpop.f32.mrb[0].mxu0
        %v4036 = vadd.f32 0.0, %v4035
        %v4037 = vpop.f32.mrb[0].mxu0
        %v4038 = vadd.f32 0.0, %v4037
        %v4039 = vpop.f32.mrb[0].mxu0
        %v4040 = vadd.f32 0.0, %v4039
        %v4041 = vpop.f32.mrb[0].mxu0
        %v4042 = vadd.f32 0.0, %v4041
        %4043 = vdwg.mxu0
        %v4044 = vadd.f32 %v3771, %v3976
        %v4045 = vadd.f32 %v3772, %v3978
        %v4046 = vadd.f32 %v3773, %v3980
        %v4047 = vadd.f32 %v3774, %v3982
        %v4048 = vadd.f32 %v3775, %v3986
        %v4049 = vadd.f32 %v3776, %v3988
        %v4050 = vadd.f32 %v3777, %v3990
        %v4051 = vadd.f32 %v3778, %v3992
        %v4052 = vadd.f32 %v3779, %v3996
        %v4053 = vadd.f32 %v3780, %v3998
        %v4054 = vadd.f32 %v3781, %v4000
        %v4055 = vadd.f32 %v3782, %v4002
        %v4056 = vadd.f32 %v3783, %v4006
        %v4057 = vadd.f32 %v3784, %v4008
        %v4058 = vadd.f32 %v3785, %v4010
        %v4059 = vadd.f32 %v3786, %v4012
        %v4060 = vadd.f32 %v3787, %v4016
        %v4061 = vadd.f32 %v3788, %v4018
        %v4062 = vadd.f32 %v3789, %v4020
        %v4063 = vadd.f32 %v3790, %v4022
        %v4064 = vadd.f32 %v3791, %v4026
        %v4065 = vadd.f32 %v3792, %v4028
        %v4066 = vadd.f32 %v3793, %v4030
        %v4067 = vadd.f32 %v3794, %v4032
        %v4068 = vadd.f32 %v3795, %v4036
        %v4069 = vadd.f32 %v3796, %v4038
        %v4070 = vadd.f32 %v3797, %v4040
        %v4071 = vadd.f32 %v3798, %v4042
        %v4072 = vld [vmem:[#allocation2] sm:$0xfc]
        %s4073 = scalar_lea.vmem %s4, 512
        %v4074 = vld [vmem:[%s4073] sm:$0xff]
        %v4075 = vld [vmem:[%s4073 + $0x8] sm:$0xff]
        %v4076 = vld [vmem:[%s4073 + $0x10] sm:$0xff]
        %v4077 = vld [vmem:[%s4073 + $0x18] sm:$0xff]
        %v4078 = vld [vmem:[%s4073 + $0x20] sm:$0xff]
        %v4079 = vld [vmem:[%s4073 + $0x28] sm:$0xff]
        %v4080 = vld [vmem:[%s4073 + $0x30] sm:$0xff]
        %v4081 = vld [vmem:[%s4073 + $0x38] sm:$0xff]
        %v4082 = vld [vmem:[%s4073 + $0x40] sm:$0xff]
        %v4083 = vld [vmem:[%s4073 + $0x48] sm:$0xff]
        %v4084 = vld [vmem:[%s4073 + $0x50] sm:$0xff]
        %v4085 = vld [vmem:[%s4073 + $0x58] sm:$0xff]
        %v4086 = vld [vmem:[%s4073 + $0x60] sm:$0xff]
        %v4087 = vld [vmem:[%s4073 + $0x68] sm:$0xff]
        %v4088 = vld [vmem:[%s4073 + $0x70] sm:$0xff]
        %v4089 = vld [vmem:[%s4073 + $0x78] sm:$0xff]
        %v4092 = vrot.slane %v4072, 2
        %v4093 = vrot.slane %v3075, 2
        %v4094 = vsel %vm2186, %v4092, %v4093
        %v4095 = vrot.slane %v3076, 2
        %v4096 = vsel %vm2186, %v4093, %v4095
        %v4097 = vrot.slane %v3077, 2
        %v4098 = vsel %vm2186, %v4095, %v4097
        %v4099 = vrot.slane %v3078, 2
        %v4100 = vsel %vm2186, %v4097, %v4099
        %v4101 = vrot.slane %v3079, 2
        %v4102 = vsel %vm2186, %v4099, %v4101
        %v4103 = vrot.slane %v3799, 2
        %v4104 = vsel %vm2186, %v4101, %v4103
        %v4128 = vunpack.c.l.b16 %v4074
        %v4129 = vunpack.c.h.b16 %v4074
        %v4130 = vunpack.c.l.b16 %v4075
        %v4131 = vunpack.c.h.b16 %v4075
        %v4132 = vunpack.c.l.b16 %v4076
        %v4133 = vunpack.c.h.b16 %v4076
        %v4134 = vunpack.c.l.b16 %v4077
        %v4135 = vunpack.c.h.b16 %v4077
        %v4136 = vunpack.c.l.b16 %v4078
        %v4137 = vunpack.c.h.b16 %v4078
        %v4138 = vunpack.c.l.b16 %v4079
        %v4139 = vunpack.c.h.b16 %v4079
        %v4140 = vunpack.c.l.b16 %v4080
        %v4141 = vunpack.c.h.b16 %v4080
        %v4142 = vunpack.c.l.b16 %v4081
        %v4143 = vunpack.c.h.b16 %v4081
        %v4144 = vunpack.c.l.b16 %v4082
        %v4145 = vunpack.c.h.b16 %v4082
        %v4146 = vunpack.c.l.b16 %v4083
        %v4147 = vunpack.c.h.b16 %v4083
        %v4148 = vunpack.c.l.b16 %v4084
        %v4149 = vunpack.c.h.b16 %v4084
        %v4150 = vunpack.c.l.b16 %v4085
        %v4151 = vunpack.c.h.b16 %v4085
        %v4152 = vunpack.c.l.b16 %v4086
        %v4153 = vunpack.c.h.b16 %v4086
        %v4154 = vunpack.c.l.b16 %v4087
        %v4155 = vunpack.c.h.b16 %v4087
        %v4156 = vunpack.c.l.b16 %v4088
        %v4157 = vunpack.c.h.b16 %v4088
        %v4158 = vunpack.c.l.b16 %v4089
        %v4159 = vunpack.c.h.b16 %v4089
        %v4160 = vpack.c.b16 %v4130, %v4128
        %v4161 = vpack.c.b16 %v4131, %v4129
        %v4162 = vpack.c.b16 %v4134, %v4132
        %v4163 = vpack.c.b16 %v4135, %v4133
        %v4164 = vpack.c.b16 %v4138, %v4136
        %v4165 = vpack.c.b16 %v4139, %v4137
        %v4166 = vpack.c.b16 %v4142, %v4140
        %v4167 = vpack.c.b16 %v4143, %v4141
        %v4168 = vpack.c.b16 %v4146, %v4144
        %v4169 = vpack.c.b16 %v4147, %v4145
        %v4170 = vpack.c.b16 %v4150, %v4148
        %v4171 = vpack.c.b16 %v4151, %v4149
        %v4172 = vpack.c.b16 %v4154, %v4152
        %v4173 = vpack.c.b16 %v4155, %v4153
        %v4174 = vpack.c.b16 %v4158, %v4156
        %v4175 = vpack.c.b16 %v4159, %v4157
        %4192 = vmatprep.subr.bf16.mxu0 %v4161
        %4193 = vmatpush1.bf16.msra.mxu0 %v4160
        %4194 = vmatprep.subr.bf16.mxu0 %v4163
        %4195 = vmatpush1.bf16.msra.mxu0 %v4162
        %4196 = vmatprep.subr.bf16.mxu0 %v4165
        %4197 = vmatpush1.bf16.msra.mxu0 %v4164
        %4198 = vmatprep.subr.bf16.mxu0 %v4167
        %4199 = vmatpush1.bf16.msra.mxu0 %v4166
        %4200 = vmatprep.subr.bf16.mxu0 %v4169
        %4201 = vmatpush1.bf16.msra.mxu0 %v4168
        %4202 = vmatprep.subr.bf16.mxu0 %v4171
        %4203 = vmatpush1.bf16.msra.mxu0 %v4170
        %4204 = vmatprep.subr.bf16.mxu0 %v4173
        %4205 = vmatpush1.bf16.msra.mxu0 %v4172
        %4206 = vmatprep.subr.bf16.mxu0 %v4175
        %4207 = vmatpush1.bf16.msra.mxu0 %v4174
        %4208 = vmatprep.subr.bf16.mxu0 0
        %4209 = vmatpush1.bf16.msra.mxu0 0
        %4210 = vmatprep.subr.bf16.mxu0 0
        %4211 = vmatpush1.bf16.msra.mxu0 0
        %4212 = vmatprep.subr.bf16.mxu0 0
        %4213 = vmatpush1.bf16.msra.mxu0 0
        %4214 = vmatprep.subr.bf16.mxu0 0
        %4215 = vmatpush1.bf16.msra.mxu0 0
        %4216 = vmatprep.subr.bf16.mxu0 0
        %4217 = vmatpush1.bf16.msra.mxu0 0
        %4218 = vmatprep.subr.bf16.mxu0 0
        %4219 = vmatpush1.bf16.msra.mxu0 0
        %4220 = vmatprep.subr.bf16.mxu0 0
        %4221 = vmatpush1.bf16.msra.mxu0 0
        %4222 = vmatprep.subr.bf16.mxu0 0
        %4223 = vmatpush1.bf16.msra.mxu0 0
        %4224 = vmatprep.mubr.bf16.mxu0 0
        %4225 = vmatmul.mubr.bf16.gmra.mrb[0].mxu0 %v4094
        %v4226 = vpop.f32.mrb[0].mxu0
        %v4227 = vadd.f32 0.0, %v4226
        %v4228 = vpop.f32.mrb[0].mxu0
        %v4229 = vadd.f32 0.0, %v4228
        %v4230 = vpop.f32.mrb[0].mxu0
        %v4231 = vadd.f32 0.0, %v4230
        %v4232 = vpop.f32.mrb[0].mxu0
        %v4233 = vadd.f32 0.0, %v4232
        %4234 = vmatprep.mubr.bf16.mxu0 0
        %4235 = vmatmul.mubr.bf16.gmra.mrb[0].mxu0 %v4096
        %v4236 = vpop.f32.mrb[0].mxu0
        %v4237 = vadd.f32 0.0, %v4236
        %v4238 = vpop.f32.mrb[0].mxu0
        %v4239 = vadd.f32 0.0, %v4238
        %v4240 = vpop.f32.mrb[0].mxu0
        %v4241 = vadd.f32 0.0, %v4240
        %v4242 = vpop.f32.mrb[0].mxu0
        %v4243 = vadd.f32 0.0, %v4242
        %4244 = vmatprep.mubr.bf16.mxu0 0
        %4245 = vmatmul.mubr.bf16.gmra.mrb[0].mxu0 %v4098
        %v4246 = vpop.f32.mrb[0].mxu0
        %v4247 = vadd.f32 0.0, %v4246
        %v4248 = vpop.f32.mrb[0].mxu0
        %v4249 = vadd.f32 0.0, %v4248
        %v4250 = vpop.f32.mrb[0].mxu0
        %v4251 = vadd.f32 0.0, %v4250
        %v4252 = vpop.f32.mrb[0].mxu0
        %v4253 = vadd.f32 0.0, %v4252
        %4254 = vmatprep.mubr.bf16.mxu0 0
        %4255 = vmatmul.mubr.bf16.gmra.mrb[0].mxu0 %v4100
        %v4256 = vpop.f32.mrb[0].mxu0
        %v4257 = vadd.f32 0.0, %v4256
        %v4258 = vpop.f32.mrb[0].mxu0
        %v4259 = vadd.f32 0.0, %v4258
        %v4260 = vpop.f32.mrb[0].mxu0
        %v4261 = vadd.f32 0.0, %v4260
        %v4262 = vpop.f32.mrb[0].mxu0
        %v4263 = vadd.f32 0.0, %v4262
        %4264 = vmatprep.mubr.bf16.mxu0 0
        %4265 = vmatmul.mubr.bf16.gmra.mrb[0].mxu0 %v4102
        %v4266 = vpop.f32.mrb[0].mxu0
        %v4267 = vadd.f32 0.0, %v4266
        %v4268 = vpop.f32.mrb[0].mxu0
        %v4269 = vadd.f32 0.0, %v4268
        %v4270 = vpop.f32.mrb[0].mxu0
        %v4271 = vadd.f32 0.0, %v4270
        %v4272 = vpop.f32.mrb[0].mxu0
        %v4273 = vadd.f32 0.0, %v4272
        %4274 = vmatprep.mubr.bf16.mxu0 0
        %4275 = vmatmul.mubr.bf16.gmra.mrb[0].mxu0 %v4104
        %v4276 = vpop.f32.mrb[0].mxu0
        %v4277 = vadd.f32 0.0, %v4276
        %v4278 = vpop.f32.mrb[0].mxu0
        %v4279 = vadd.f32 0.0, %v4278
        %v4280 = vpop.f32.mrb[0].mxu0
        %v4281 = vadd.f32 0.0, %v4280
        %v4282 = vpop.f32.mrb[0].mxu0
        %v4283 = vadd.f32 0.0, %v4282
        %4284 = vmatprep.mubr.bf16.mxu0 0
        %4285 = vmatmul.mubr.bf16.gmra.mrb[0].mxu0 %v4103
        %v4286 = vpop.f32.mrb[0].mxu0
        %v4287 = vadd.f32 0.0, %v4286
        %v4288 = vpop.f32.mrb[0].mxu0
        %v4289 = vadd.f32 0.0, %v4288
        %v4290 = vpop.f32.mrb[0].mxu0
        %v4291 = vadd.f32 0.0, %v4290
        %v4292 = vpop.f32.mrb[0].mxu0
        %v4293 = vadd.f32 0.0, %v4292
        %4294 = vdwg.mxu0
        %v4295 = vadd.f32 %v4044, %v4227
        %v4296 = vadd.f32 %v4045, %v4229
        %v4297 = vadd.f32 %v4046, %v4231
        %v4298 = vadd.f32 %v4047, %v4233
        %v4299 = vadd.f32 %v4048, %v4237
        %v4300 = vadd.f32 %v4049, %v4239
        %v4301 = vadd.f32 %v4050, %v4241
        %v4302 = vadd.f32 %v4051, %v4243
        %v4303 = vadd.f32 %v4052, %v4247
        %v4304 = vadd.f32 %v4053, %v4249
        %v4305 = vadd.f32 %v4054, %v4251
        %v4306 = vadd.f32 %v4055, %v4253
        %v4307 = vadd.f32 %v4056, %v4257
        %v4308 = vadd.f32 %v4057, %v4259
        %v4309 = vadd.f32 %v4058, %v4261
        %v4310 = vadd.f32 %v4059, %v4263
        %v4311 = vadd.f32 %v4060, %v4267
        %v4312 = vadd.f32 %v4061, %v4269
        %v4313 = vadd.f32 %v4062, %v4271
        %v4314 = vadd.f32 %v4063, %v4273
        %v4315 = vadd.f32 %v4064, %v4277
        %v4316 = vadd.f32 %v4065, %v4279
        %v4317 = vadd.f32 %v4066, %v4281
        %v4318 = vadd.f32 %v4067, %v4283
        %v4319 = vadd.f32 %v4068, %v4287
        %v4320 = vadd.f32 %v4069, %v4289
        %v4321 = vadd.f32 %v4070, %v4291
        %v4322 = vadd.f32 %v4071, %v4293
        %v4323 = vmax.f32 %v4295, %v4296
        %v4324 = vmax.f32 %v4297, %v4298
        %v4325 = vmax.f32 %v4299, %v4300
        %v4326 = vmax.f32 %v4301, %v4302
        %v4327 = vmax.f32 %v4303, %v4304
        %v4328 = vmax.f32 %v4305, %v4306
        %v4329 = vmax.f32 %v4307, %v4308
        %v4330 = vmax.f32 %v4309, %v4310
        %v4331 = vmax.f32 %v4311, %v4312
        %v4332 = vmax.f32 %v4313, %v4314
        %v4333 = vmax.f32 %v4315, %v4316
        %v4334 = vmax.f32 %v4317, %v4318
        %v4335 = vmax.f32 %v4319, %v4320
        %v4336 = vmax.f32 %v4321, %v4322
        %v4337 = vpack.c.bf16 %v4324, %v4323
        %v4338 = vpack.c.bf16 %v4326, %v4325
        %v4339 = vpack.c.bf16 %v4328, %v4327
        %v4340 = vpack.c.bf16 %v4330, %v4329
        %v4341 = vpack.c.bf16 %v4332, %v4331
        %v4342 = vpack.c.bf16 %v4334, %v4333
        %v4343 = vpack.c.bf16 %v4336, %v4335
        %v4344 = vld [vmem:[%s6] sm:$0xf]
        %v4345 = vld [vmem:[%s6 + $0x4] sm:$0xf]
        %v4346 = vld [vmem:[%s6 + $0x8] sm:$0xf]
        %v4347 = vld [vmem:[%s6 + $0xc] sm:$0xf]
        %v4348 = vld [vmem:[%s6 + $0x10] sm:$0xf]
        %v4354 = vunpack.c.l.b16 %v4344
        %v4355 = vunpack.c.l.b16 %v4345
        %v4356 = vunpack.c.l.b16 %v4346
        %v4357 = vunpack.c.l.b16 %v4347
        %v4358 = vunpack.c.l.b16 %v4348
        %v4359 = vpack.c.b16 %v4355, %v4354
        %v4360 = vpack.c.b16 %v4357, %v4356
        %v4361 = vpack.c.b16 %v4358, %v4358
        %vm4362 = vcmask 883712
        %v4364 = vsel %vm4362, %v4359, 0
        %v4367 = vsel %vm4362, %v4360, 0
        %v4370 = vsel %vm4362, %v4361, 0
        %v4373 = vsel %vm2730, %v4343, 0
        %4375 = vmatprep.subr.bf16.mxu0 0
        %4376 = vmatpush1.bf16.msra.mxu0 %v4337
        %4377 = vmatprep.subr.bf16.mxu0 0
        %4378 = vmatpush1.bf16.msra.mxu0 %v4338
        %4379 = vmatprep.subr.bf16.mxu0 0
        %4380 = vmatpush1.bf16.msra.mxu0 %v4339
        %4381 = vmatprep.subr.bf16.mxu0 0
        %4382 = vmatpush1.bf16.msra.mxu0 %v4340
        %4383 = vmatprep.subr.bf16.mxu0 0
        %4384 = vmatpush1.bf16.msra.mxu0 %v4341
        %4385 = vmatprep.subr.bf16.mxu0 0
        %4386 = vmatpush1.bf16.msra.mxu0 %v4342
        %4387 = vmatprep.subr.bf16.mxu0 0
        %4388 = vmatpush1.bf16.msra.mxu0 %v4373
        %4389 = vmatprep.subr.bf16.mxu0 0
        %4390 = vmatpush1.bf16.msra.mxu0 0
        %4391 = vmatprep.subr.bf16.mxu0 0
        %4392 = vmatpush1.bf16.msra.mxu0 0
        %4393 = vmatprep.subr.bf16.mxu0 0
        %4394 = vmatpush1.bf16.msra.mxu0 0
        %4395 = vmatprep.subr.bf16.mxu0 0
        %4396 = vmatpush1.bf16.msra.mxu0 0
        %4397 = vmatprep.subr.bf16.mxu0 0
        %4398 = vmatpush1.bf16.msra.mxu0 0
        %4399 = vmatprep.subr.bf16.mxu0 0
        %4400 = vmatpush1.bf16.msra.mxu0 0
        %4401 = vmatprep.subr.bf16.mxu0 0
        %4402 = vmatpush1.bf16.msra.mxu0 0
        %4403 = vmatprep.subr.bf16.mxu0 0
        %4404 = vmatpush1.bf16.msra.mxu0 0
        %4405 = vmatprep.subr.bf16.mxu0 0
        %4406 = vmatpush1.bf16.msra.mxu0 0
        %4407 = vmatprep.mubr.bf16.mxu0 0
        %4408 = vmatmul.mubr.bf16.gmra.mrb[0].mxu0 %v4364
        %v4409 = vpop.f32.mrb[0].mxu0
        %v4410 = vadd.f32 0.0, %v4409
        %v4411 = vpop.f32.mrb[0].mxu0
        %v4412 = vpop.f32.mrb[0].mxu0
        %v4413 = vadd.f32 0.0, %v4412
        %v4414 = vpop.f32.mrb[0].mxu0
        %4415 = vmatprep.mubr.bf16.mxu0 0
        %4416 = vmatmul.mubr.bf16.gmra.mrb[0].mxu0 %v4367
        %v4417 = vpop.f32.mrb[0].mxu0
        %v4418 = vadd.f32 0.0, %v4417
        %v4419 = vpop.f32.mrb[0].mxu0
        %v4420 = vpop.f32.mrb[0].mxu0
        %v4421 = vadd.f32 0.0, %v4420
        %v4422 = vpop.f32.mrb[0].mxu0
        %4423 = vmatprep.mubr.bf16.mxu0 0
        %4424 = vmatmul.mubr.bf16.gmra.mrb[0].mxu0 %v4370
        %v4425 = vpop.f32.mrb[0].mxu0
        %v4426 = vadd.f32 0.0, %v4425
        %v4427 = vpop.f32.mrb[0].mxu0
        %v4428 = vpop.f32.mrb[0].mxu0
        %v4429 = vpop.f32.mrb[0].mxu0
        %4430 = vdwg.mxu0
        %s4431 = scalar_lea.vmem %s6, 20
        %v4432 = vld [vmem:[%s4431] sm:$0xf]
        %v4433 = vld [vmem:[%s4431 + $0x4] sm:$0xf]
        %v4434 = vld [vmem:[%s4431 + $0x8] sm:$0xf]
        %v4435 = vld [vmem:[%s4431 + $0xc] sm:$0xf]
        %v4436 = vld [vmem:[%s4431 + $0x10] sm:$0xf]
        %v4442 = vunpack.c.l.b16 %v4432
        %v4443 = vunpack.c.l.b16 %v4433
        %v4444 = vunpack.c.l.b16 %v4434
        %v4445 = vunpack.c.l.b16 %v4435
        %v4446 = vunpack.c.l.b16 %v4436
        %v4447 = vpack.c.b16 %v4443, %v4442
        %v4448 = vpack.c.b16 %v4445, %v4444
        %v4449 = vpack.c.b16 %v4446, %v4446
        %v4451 = vsel %vm4362, %v4447, 0
        %v4454 = vsel %vm4362, %v4448, 0
        %v4457 = vsel %vm4362, %v4449, 0
        %4459 = vmatprep.subr.bf16.mxu0 0
        %4460 = vmatpush1.bf16.msra.mxu0 %v4337
        %4461 = vmatprep.subr.bf16.mxu0 0
        %4462 = vmatpush1.bf16.msra.mxu0 %v4338
        %4463 = vmatprep.subr.bf16.mxu0 0
        %4464 = vmatpush1.bf16.msra.mxu0 %v4339
        %4465 = vmatprep.subr.bf16.mxu0 0
        %4466 = vmatpush1.bf16.msra.mxu0 %v4340
        %4467 = vmatprep.subr.bf16.mxu0 0
        %4468 = vmatpush1.bf16.msra.mxu0 %v4341
        %4469 = vmatprep.subr.bf16.mxu0 0
        %4470 = vmatpush1.bf16.msra.mxu0 %v4342
        %4471 = vmatprep.subr.bf16.mxu0 0
        %4472 = vmatpush1.bf16.msra.mxu0 %v4373
        %4473 = vmatprep.subr.bf16.mxu0 0
        %4474 = vmatpush1.bf16.msra.mxu0 0
        %4475 = vmatprep.subr.bf16.mxu0 0
        %4476 = vmatpush1.bf16.msra.mxu0 0
        %4477 = vmatprep.subr.bf16.mxu0 0
        %4478 = vmatpush1.bf16.msra.mxu0 0
        %4479 = vmatprep.subr.bf16.mxu0 0
        %4480 = vmatpush1.bf16.msra.mxu0 0
        %4481 = vmatprep.subr.bf16.mxu0 0
        %4482 = vmatpush1.bf16.msra.mxu0 0
        %4483 = vmatprep.subr.bf16.mxu0 0
        %4484 = vmatpush1.bf16.msra.mxu0 0
        %4485 = vmatprep.subr.bf16.mxu0 0
        %4486 = vmatpush1.bf16.msra.mxu0 0
        %4487 = vmatprep.subr.bf16.mxu0 0
        %4488 = vmatpush1.bf16.msra.mxu0 0
        %4489 = vmatprep.subr.bf16.mxu0 0
        %4490 = vmatpush1.bf16.msra.mxu0 0
        %4491 = vmatprep.mubr.bf16.mxu0 0
        %4492 = vmatmul.mubr.bf16.gmra.mrb[0].mxu0 %v4451
        %v4493 = vpop.f32.mrb[0].mxu0
        %v4494 = vadd.f32 0.0, %v4493
        %v4495 = vpop.f32.mrb[0].mxu0
        %v4496 = vpop.f32.mrb[0].mxu0
        %v4497 = vadd.f32 0.0, %v4496
        %v4498 = vpop.f32.mrb[0].mxu0
        %4499 = vmatprep.mubr.bf16.mxu0 0
        %4500 = vmatmul.mubr.bf16.gmra.mrb[0].mxu0 %v4454
        %v4501 = vpop.f32.mrb[0].mxu0
        %v4502 = vadd.f32 0.0, %v4501
        %v4503 = vpop.f32.mrb[0].mxu0
        %v4504 = vpop.f32.mrb[0].mxu0
        %v4505 = vadd.f32 0.0, %v4504
        %v4506 = vpop.f32.mrb[0].mxu0
        %4507 = vmatprep.mubr.bf16.mxu0 0
        %4508 = vmatmul.mubr.bf16.gmra.mrb[0].mxu0 %v4457
        %v4509 = vpop.f32.mrb[0].mxu0
        %v4510 = vadd.f32 0.0, %v4509
        %v4511 = vpop.f32.mrb[0].mxu0
        %v4512 = vpop.f32.mrb[0].mxu0
        %v4513 = vpop.f32.mrb[0].mxu0
        %4514 = vdwg.mxu0
        %v4515 = vmax.f32 %v4410, %v4494
        %v4516 = vmax.f32 %v4413, %v4497
        %v4517 = vmax.f32 %v4418, %v4502
        %v4518 = vmax.f32 %v4421, %v4505
        %v4519 = vmax.f32 %v4426, %v4510
        %v4520 = vld [vmem:[%s5] sm:$0x1]
        %v4522 = vlaneseq
        %v4523 = vshrl.u32 %v4522, 7
        %v4524 = vsub.s32 0, %v4523
        %v4525 = vrot.slane %v4520, %v4524
        %v4527 = vadd.f32 %v4515, %v4525
        %v4528 = vadd.f32 %v4516, %v4525
        %v4529 = vadd.f32 %v4517, %v4525
        %v4530 = vadd.f32 %v4518, %v4525
        %v4531 = vadd.f32 %v4519, %v4525
        %v4532 = vmax.f32 %v4527, 0.0
        %v4533 = vmax.f32 %v4528, 0.0
        %v4534 = vmax.f32 %v4529, 0.0
        %v4535 = vmax.f32 %v4530, 0.0
        %v4536 = vmax.f32 %v4531, 0.0
        %v4537 = vpack.c.bf16 %v4533, %v4532
        %v4538 = vpack.c.bf16 %v4535, %v4534
        %v4539 = vpack.c.bf16 %v4536, %v4536
        %v4543 = vunpack.c.l.b16 %v4537
        %v4544 = vunpack.c.h.b16 %v4537
        %v4545 = vunpack.c.l.b16 %v4538
        %v4546 = vunpack.c.h.b16 %v4538
        %v4547 = vunpack.c.l.b16 %v4539
        %v4548 = vpack.c.b16 %v4543, %v4543
        %v4549 = vpack.c.b16 %v4544, %v4544
        %v4550 = vpack.c.b16 %v4545, %v4545
        %v4551 = vpack.c.b16 %v4546, %v4546
        %v4552 = vpack.c.b16 %v4547, %v4547
        %4558 = vst [vmem:[#allocation3] sm:$0xf] %v4548
        %4559 = vst [vmem:[#allocation3 + $0x4] sm:$0xf] %v4549
        %4560 = vst [vmem:[#allocation3 + $0x8] sm:$0xf] %v4550
        %4561 = vst [vmem:[#allocation3 + $0xc] sm:$0xf] %v4551
        %4562 = vst [vmem:[#allocation3 + $0x10] sm:$0xf] %v4552
        %v4563 = vld [vmem:[#allocation3] sm:$0xf]
        %v4564 = vld [vmem:[%s7] sm:$0xf]
        %v4565 = vld [vmem:[%s7 + $0x4] sm:$0xf]
        %v4566 = vld [vmem:[%s7 + $0x8] sm:$0xf]
        %v4567 = vld [vmem:[%s7 + $0xc] sm:$0xf]
        %v4568 = vld [vmem:[%s7 + $0x10] sm:$0xf]
        %v4569 = vld [vmem:[%s7 + $0x14] sm:$0xf]
        %v4570 = vld [vmem:[%s7 + $0x18] sm:$0xf]
        %v4571 = vld [vmem:[%s7 + $0x1c] sm:$0xf]
        %v4572 = vld [vmem:[%s7 + $0x20] sm:$0xf]
        %v4573 = vld [vmem:[%s7 + $0x24] sm:$0xf]
        %v4574 = vld [vmem:[%s7 + $0x28] sm:$0xf]
        %v4575 = vld [vmem:[%s7 + $0x2c] sm:$0xf]
        %v4576 = vld [vmem:[%s7 + $0x30] sm:$0xf]
        %v4577 = vld [vmem:[%s7 + $0x34] sm:$0xf]
        %v4578 = vld [vmem:[%s7 + $0x38] sm:$0xf]
        %v4579 = vld [vmem:[%s7 + $0x3c] sm:$0xf]
        %v4580 = vld [vmem:[#allocation3 + $0x4] sm:$0xf]
        %s4581 = scalar_lea.vmem %s7, 64
        %v4582 = vld [vmem:[%s4581] sm:$0xf]
        %v4583 = vld [vmem:[%s4581 + $0x4] sm:$0xf]
        %v4584 = vld [vmem:[%s4581 + $0x8] sm:$0xf]
        %v4585 = vld [vmem:[%s4581 + $0xc] sm:$0xf]
        %v4586 = vld [vmem:[%s4581 + $0x10] sm:$0xf]
        %v4587 = vld [vmem:[%s4581 + $0x14] sm:$0xf]
        %v4588 = vld [vmem:[%s4581 + $0x18] sm:$0xf]
        %v4589 = vld [vmem:[%s4581 + $0x1c] sm:$0xf]
        %v4590 = vld [vmem:[%s4581 + $0x20] sm:$0xf]
        %v4591 = vld [vmem:[%s4581 + $0x24] sm:$0xf]
        %v4592 = vld [vmem:[%s4581 + $0x28] sm:$0xf]
        %v4593 = vld [vmem:[%s4581 + $0x2c] sm:$0xf]
        %v4594 = vld [vmem:[%s4581 + $0x30] sm:$0xf]
        %v4595 = vld [vmem:[%s4581 + $0x34] sm:$0xf]
        %v4596 = vld [vmem:[%s4581 + $0x38] sm:$0xf]
        %v4597 = vld [vmem:[%s4581 + $0x3c] sm:$0xf]
        %v4614 = vunpack.c.l.b16 %v4582
        %v4615 = vunpack.c.l.b16 %v4583
        %v4616 = vunpack.c.l.b16 %v4584
        %v4617 = vunpack.c.l.b16 %v4585
        %v4618 = vunpack.c.l.b16 %v4586
        %v4619 = vunpack.c.l.b16 %v4587
        %v4620 = vunpack.c.l.b16 %v4588
        %v4621 = vunpack.c.l.b16 %v4589
        %v4622 = vunpack.c.l.b16 %v4590
        %v4623 = vunpack.c.l.b16 %v4591
        %v4624 = vunpack.c.l.b16 %v4592
        %v4625 = vunpack.c.l.b16 %v4593
        %v4626 = vunpack.c.l.b16 %v4594
        %v4627 = vunpack.c.l.b16 %v4595
        %v4628 = vunpack.c.l.b16 %v4596
        %v4629 = vunpack.c.l.b16 %v4597
        %v4630 = vpack.c.b16 %v4615, %v4614
        %v4631 = vpack.c.b16 %v4617, %v4616
        %v4632 = vpack.c.b16 %v4619, %v4618
        %v4633 = vpack.c.b16 %v4621, %v4620
        %v4634 = vpack.c.b16 %v4623, %v4622
        %v4635 = vpack.c.b16 %v4625, %v4624
        %v4636 = vpack.c.b16 %v4627, %v4626
        %v4637 = vpack.c.b16 %v4629, %v4628
        %4646 = vmatprep.subr.bf16.mxu0 0
        %4647 = vmatpush1.bf16.msra.mxu0 %v4630
        %4648 = vmatprep.subr.bf16.mxu0 0
        %4649 = vmatpush1.bf16.msra.mxu0 %v4631
        %4650 = vmatprep.subr.bf16.mxu0 0
        %4651 = vmatpush1.bf16.msra.mxu0 %v4632
        %4652 = vmatprep.subr.bf16.mxu0 0
        %4653 = vmatpush1.bf16.msra.mxu0 %v4633
        %4654 = vmatprep.subr.bf16.mxu0 0
        %4655 = vmatpush1.bf16.msra.mxu0 %v4634
        %4656 = vmatprep.subr.bf16.mxu0 0
        %4657 = vmatpush1.bf16.msra.mxu0 %v4635
        %4658 = vmatprep.subr.bf16.mxu0 0
        %4659 = vmatpush1.bf16.msra.mxu0 %v4636
        %4660 = vmatprep.subr.bf16.mxu0 0
        %4661 = vmatpush1.bf16.msra.mxu0 %v4637
        %4662 = vmatprep.subr.bf16.mxu0 0
        %4663 = vmatpush1.bf16.msra.mxu0 0
        %4664 = vmatprep.subr.bf16.mxu0 0
        %4665 = vmatpush1.bf16.msra.mxu0 0
        %4666 = vmatprep.subr.bf16.mxu0 0
        %4667 = vmatpush1.bf16.msra.mxu0 0
        %4668 = vmatprep.subr.bf16.mxu0 0
        %4669 = vmatpush1.bf16.msra.mxu0 0
        %4670 = vmatprep.subr.bf16.mxu0 0
        %4671 = vmatpush1.bf16.msra.mxu0 0
        %4672 = vmatprep.subr.bf16.mxu0 0
        %4673 = vmatpush1.bf16.msra.mxu0 0
        %4674 = vmatprep.subr.bf16.mxu0 0
        %4675 = vmatpush1.bf16.msra.mxu0 0
        %4676 = vmatprep.subr.bf16.mxu0 0
        %4677 = vmatpush1.bf16.msra.mxu0 0
        %4678 = vmatprep.mubr.bf16.mxu0 0
        %4679 = vmatmul.mubr.bf16.gmra.mrb[0].mxu0 %v4580
        %v4680 = vpop.f32.mrb[0].mxu0
        %v4681 = vadd.f32 0.0, %v4680
        %v4682 = vpop.f32.mrb[0].mxu0
        %v4683 = vpop.f32.mrb[0].mxu0
        %v4684 = vpop.f32.mrb[0].mxu0
        %4685 = vdwg.mxu0
        %v4702 = vunpack.c.l.b16 %v4564
        %v4703 = vunpack.c.l.b16 %v4565
        %v4704 = vunpack.c.l.b16 %v4566
        %v4705 = vunpack.c.l.b16 %v4567
        %v4706 = vunpack.c.l.b16 %v4568
        %v4707 = vunpack.c.l.b16 %v4569
        %v4708 = vunpack.c.l.b16 %v4570
        %v4709 = vunpack.c.l.b16 %v4571
        %v4710 = vunpack.c.l.b16 %v4572
        %v4711 = vunpack.c.l.b16 %v4573
        %v4712 = vunpack.c.l.b16 %v4574
        %v4713 = vunpack.c.l.b16 %v4575
        %v4714 = vunpack.c.l.b16 %v4576
        %v4715 = vunpack.c.l.b16 %v4577
        %v4716 = vunpack.c.l.b16 %v4578
        %v4717 = vunpack.c.l.b16 %v4579
        %v4718 = vpack.c.b16 %v4703, %v4702
        %v4719 = vpack.c.b16 %v4705, %v4704
        %v4720 = vpack.c.b16 %v4707, %v4706
        %v4721 = vpack.c.b16 %v4709, %v4708
        %v4722 = vpack.c.b16 %v4711, %v4710
        %v4723 = vpack.c.b16 %v4713, %v4712
        %v4724 = vpack.c.b16 %v4715, %v4714
        %v4725 = vpack.c.b16 %v4717, %v4716
        %4734 = vmatprep.subr.bf16.mxu0 0
        %4735 = vmatpush1.bf16.msra.mxu0 %v4718
        %4736 = vmatprep.subr.bf16.mxu0 0
        %4737 = vmatpush1.bf16.msra.mxu0 %v4719
        %4738 = vmatprep.subr.bf16.mxu0 0
        %4739 = vmatpush1.bf16.msra.mxu0 %v4720
        %4740 = vmatprep.subr.bf16.mxu0 0
        %4741 = vmatpush1.bf16.msra.mxu0 %v4721
        %4742 = vmatprep.subr.bf16.mxu0 0
        %4743 = vmatpush1.bf16.msra.mxu0 %v4722
        %4744 = vmatprep.subr.bf16.mxu0 0
        %4745 = vmatpush1.bf16.msra.mxu0 %v4723
        %4746 = vmatprep.subr.bf16.mxu0 0
        %4747 = vmatpush1.bf16.msra.mxu0 %v4724
        %4748 = vmatprep.subr.bf16.mxu0 0
        %4749 = vmatpush1.bf16.msra.mxu0 %v4725
        %4750 = vmatprep.subr.bf16.mxu0 0
        %4751 = vmatpush1.bf16.msra.mxu0 0
        %4752 = vmatprep.subr.bf16.mxu0 0
        %4753 = vmatpush1.bf16.msra.mxu0 0
        %4754 = vmatprep.subr.bf16.mxu0 0
        %4755 = vmatpush1.bf16.msra.mxu0 0
        %4756 = vmatprep.subr.bf16.mxu0 0
        %4757 = vmatpush1.bf16.msra.mxu0 0
        %4758 = vmatprep.subr.bf16.mxu0 0
        %4759 = vmatpush1.bf16.msra.mxu0 0
        %4760 = vmatprep.subr.bf16.mxu0 0
        %4761 = vmatpush1.bf16.msra.mxu0 0
        %4762 = vmatprep.subr.bf16.mxu0 0
        %4763 = vmatpush1.bf16.msra.mxu0 0
        %4764 = vmatprep.subr.bf16.mxu0 0
        %4765 = vmatpush1.bf16.msra.mxu0 0
        %4766 = vmatprep.mubr.bf16.mxu0 0
        %4767 = vmatmul.mubr.bf16.gmra.mrb[0].mxu0 %v4563
        %v4768 = vpop.f32.mrb[0].mxu0
        %v4769 = vadd.f32 %v4681, %v4768
        %v4770 = vpop.f32.mrb[0].mxu0
        %v4771 = vpop.f32.mrb[0].mxu0
        %v4772 = vpop.f32.mrb[0].mxu0
        %4773 = vdwg.mxu0
        %v4774 = vld [vmem:[#allocation3 + $0x8] sm:$0xf]
        %s4775 = scalar_lea.vmem %s7, 128
        %v4776 = vld [vmem:[%s4775] sm:$0xf]
        %v4777 = vld [vmem:[%s4775 + $0x4] sm:$0xf]
        %v4778 = vld [vmem:[%s4775 + $0x8] sm:$0xf]
        %v4779 = vld [vmem:[%s4775 + $0xc] sm:$0xf]
        %v4780 = vld [vmem:[%s4775 + $0x10] sm:$0xf]
        %v4781 = vld [vmem:[%s4775 + $0x14] sm:$0xf]
        %v4782 = vld [vmem:[%s4775 + $0x18] sm:$0xf]
        %v4783 = vld [vmem:[%s4775 + $0x1c] sm:$0xf]
        %v4784 = vld [vmem:[%s4775 + $0x20] sm:$0xf]
        %v4785 = vld [vmem:[%s4775 + $0x24] sm:$0xf]
        %v4786 = vld [vmem:[%s4775 + $0x28] sm:$0xf]
        %v4787 = vld [vmem:[%s4775 + $0x2c] sm:$0xf]
        %v4788 = vld [vmem:[%s4775 + $0x30] sm:$0xf]
        %v4789 = vld [vmem:[%s4775 + $0x34] sm:$0xf]
        %v4790 = vld [vmem:[%s4775 + $0x38] sm:$0xf]
        %v4791 = vld [vmem:[%s4775 + $0x3c] sm:$0xf]
        %v4808 = vunpack.c.l.b16 %v4776
        %v4809 = vunpack.c.l.b16 %v4777
        %v4810 = vunpack.c.l.b16 %v4778
        %v4811 = vunpack.c.l.b16 %v4779
        %v4812 = vunpack.c.l.b16 %v4780
        %v4813 = vunpack.c.l.b16 %v4781
        %v4814 = vunpack.c.l.b16 %v4782
        %v4815 = vunpack.c.l.b16 %v4783
        %v4816 = vunpack.c.l.b16 %v4784
        %v4817 = vunpack.c.l.b16 %v4785
        %v4818 = vunpack.c.l.b16 %v4786
        %v4819 = vunpack.c.l.b16 %v4787
        %v4820 = vunpack.c.l.b16 %v4788
        %v4821 = vunpack.c.l.b16 %v4789
        %v4822 = vunpack.c.l.b16 %v4790
        %v4823 = vunpack.c.l.b16 %v4791
        %v4824 = vpack.c.b16 %v4809, %v4808
        %v4825 = vpack.c.b16 %v4811, %v4810
        %v4826 = vpack.c.b16 %v4813, %v4812
        %v4827 = vpack.c.b16 %v4815, %v4814
        %v4828 = vpack.c.b16 %v4817, %v4816
        %v4829 = vpack.c.b16 %v4819, %v4818
        %v4830 = vpack.c.b16 %v4821, %v4820
        %v4831 = vpack.c.b16 %v4823, %v4822
        %4840 = vmatprep.subr.bf16.mxu0 0
        %4841 = vmatpush1.bf16.msra.mxu0 %v4824
        %4842 = vmatprep.subr.bf16.mxu0 0
        %4843 = vmatpush1.bf16.msra.mxu0 %v4825
        %4844 = vmatprep.subr.bf16.mxu0 0
        %4845 = vmatpush1.bf16.msra.mxu0 %v4826
        %4846 = vmatprep.subr.bf16.mxu0 0
        %4847 = vmatpush1.bf16.msra.mxu0 %v4827
        %4848 = vmatprep.subr.bf16.mxu0 0
        %4849 = vmatpush1.bf16.msra.mxu0 %v4828
        %4850 = vmatprep.subr.bf16.mxu0 0
        %4851 = vmatpush1.bf16.msra.mxu0 %v4829
        %4852 = vmatprep.subr.bf16.mxu0 0
        %4853 = vmatpush1.bf16.msra.mxu0 %v4830
        %4854 = vmatprep.subr.bf16.mxu0 0
        %4855 = vmatpush1.bf16.msra.mxu0 %v4831
        %4856 = vmatprep.subr.bf16.mxu0 0
        %4857 = vmatpush1.bf16.msra.mxu0 0
        %4858 = vmatprep.subr.bf16.mxu0 0
        %4859 = vmatpush1.bf16.msra.mxu0 0
        %4860 = vmatprep.subr.bf16.mxu0 0
        %4861 = vmatpush1.bf16.msra.mxu0 0
        %4862 = vmatprep.subr.bf16.mxu0 0
        %4863 = vmatpush1.bf16.msra.mxu0 0
        %4864 = vmatprep.subr.bf16.mxu0 0
        %4865 = vmatpush1.bf16.msra.mxu0 0
        %4866 = vmatprep.subr.bf16.mxu0 0
        %4867 = vmatpush1.bf16.msra.mxu0 0
        %4868 = vmatprep.subr.bf16.mxu0 0
        %4869 = vmatpush1.bf16.msra.mxu0 0
        %4870 = vmatprep.subr.bf16.mxu0 0
        %4871 = vmatpush1.bf16.msra.mxu0 0
        %4872 = vmatprep.mubr.bf16.mxu0 0
        %4873 = vmatmul.mubr.bf16.gmra.mrb[0].mxu0 %v4774
        %v4874 = vpop.f32.mrb[0].mxu0
        %v4875 = vadd.f32 0.0, %v4874
        %v4876 = vpop.f32.mrb[0].mxu0
        %v4877 = vpop.f32.mrb[0].mxu0
        %v4878 = vpop.f32.mrb[0].mxu0
        %4879 = vdwg.mxu0
        %v4880 = vadd.f32 %v4769, %v4875
        %v4881 = vld [vmem:[#allocation3 + $0xc] sm:$0xf]
        %s4882 = scalar_lea.vmem %s7, 192
        %v4883 = vld [vmem:[%s4882] sm:$0xf]
        %v4884 = vld [vmem:[%s4882 + $0x4] sm:$0xf]
        %v4885 = vld [vmem:[%s4882 + $0x8] sm:$0xf]
        %v4886 = vld [vmem:[%s4882 + $0xc] sm:$0xf]
        %v4887 = vld [vmem:[%s4882 + $0x10] sm:$0xf]
        %v4888 = vld [vmem:[%s4882 + $0x14] sm:$0xf]
        %v4889 = vld [vmem:[%s4882 + $0x18] sm:$0xf]
        %v4890 = vld [vmem:[%s4882 + $0x1c] sm:$0xf]
        %v4891 = vld [vmem:[%s4882 + $0x20] sm:$0xf]
        %v4892 = vld [vmem:[%s4882 + $0x24] sm:$0xf]
        %v4893 = vld [vmem:[%s4882 + $0x28] sm:$0xf]
        %v4894 = vld [vmem:[%s4882 + $0x2c] sm:$0xf]
        %v4895 = vld [vmem:[%s4882 + $0x30] sm:$0xf]
        %v4896 = vld [vmem:[%s4882 + $0x34] sm:$0xf]
        %v4897 = vld [vmem:[%s4882 + $0x38] sm:$0xf]
        %v4898 = vld [vmem:[%s4882 + $0x3c] sm:$0xf]
        %v4915 = vunpack.c.l.b16 %v4883
        %v4916 = vunpack.c.l.b16 %v4884
        %v4917 = vunpack.c.l.b16 %v4885
        %v4918 = vunpack.c.l.b16 %v4886
        %v4919 = vunpack.c.l.b16 %v4887
        %v4920 = vunpack.c.l.b16 %v4888
        %v4921 = vunpack.c.l.b16 %v4889
        %v4922 = vunpack.c.l.b16 %v4890
        %v4923 = vunpack.c.l.b16 %v4891
        %v4924 = vunpack.c.l.b16 %v4892
        %v4925 = vunpack.c.l.b16 %v4893
        %v4926 = vunpack.c.l.b16 %v4894
        %v4927 = vunpack.c.l.b16 %v4895
        %v4928 = vunpack.c.l.b16 %v4896
        %v4929 = vunpack.c.l.b16 %v4897
        %v4930 = vunpack.c.l.b16 %v4898
        %v4931 = vpack.c.b16 %v4916, %v4915
        %v4932 = vpack.c.b16 %v4918, %v4917
        %v4933 = vpack.c.b16 %v4920, %v4919
        %v4934 = vpack.c.b16 %v4922, %v4921
        %v4935 = vpack.c.b16 %v4924, %v4923
        %v4936 = vpack.c.b16 %v4926, %v4925
        %v4937 = vpack.c.b16 %v4928, %v4927
        %v4938 = vpack.c.b16 %v4930, %v4929
        %4947 = vmatprep.subr.bf16.mxu0 0
        %4948 = vmatpush1.bf16.msra.mxu0 %v4931
        %4949 = vmatprep.subr.bf16.mxu0 0
        %4950 = vmatpush1.bf16.msra.mxu0 %v4932
        %4951 = vmatprep.subr.bf16.mxu0 0
        %4952 = vmatpush1.bf16.msra.mxu0 %v4933
        %4953 = vmatprep.subr.bf16.mxu0 0
        %4954 = vmatpush1.bf16.msra.mxu0 %v4934
        %4955 = vmatprep.subr.bf16.mxu0 0
        %4956 = vmatpush1.bf16.msra.mxu0 %v4935
        %4957 = vmatprep.subr.bf16.mxu0 0
        %4958 = vmatpush1.bf16.msra.mxu0 %v4936
        %4959 = vmatprep.subr.bf16.mxu0 0
        %4960 = vmatpush1.bf16.msra.mxu0 %v4937
        %4961 = vmatprep.subr.bf16.mxu0 0
        %4962 = vmatpush1.bf16.msra.mxu0 %v4938
        %4963 = vmatprep.subr.bf16.mxu0 0
        %4964 = vmatpush1.bf16.msra.mxu0 0
        %4965 = vmatprep.subr.bf16.mxu0 0
        %4966 = vmatpush1.bf16.msra.mxu0 0
        %4967 = vmatprep.subr.bf16.mxu0 0
        %4968 = vmatpush1.bf16.msra.mxu0 0
        %4969 = vmatprep.subr.bf16.mxu0 0
        %4970 = vmatpush1.bf16.msra.mxu0 0
        %4971 = vmatprep.subr.bf16.mxu0 0
        %4972 = vmatpush1.bf16.msra.mxu0 0
        %4973 = vmatprep.subr.bf16.mxu0 0
        %4974 = vmatpush1.bf16.msra.mxu0 0
        %4975 = vmatprep.subr.bf16.mxu0 0
        %4976 = vmatpush1.bf16.msra.mxu0 0
        %4977 = vmatprep.subr.bf16.mxu0 0
        %4978 = vmatpush1.bf16.msra.mxu0 0
        %4979 = vmatprep.mubr.bf16.mxu0 0
        %4980 = vmatmul.mubr.bf16.gmra.mrb[0].mxu0 %v4881
        %v4981 = vpop.f32.mrb[0].mxu0
        %v4982 = vadd.f32 0.0, %v4981
        %v4983 = vpop.f32.mrb[0].mxu0
        %v4984 = vpop.f32.mrb[0].mxu0
        %v4985 = vpop.f32.mrb[0].mxu0
        %4986 = vdwg.mxu0
        %v4987 = vadd.f32 %v4880, %v4982
        %v4988 = vld [vmem:[#allocation3 + $0x10] sm:$0xf]
        %s4989 = scalar_lea.vmem %s7, 256
        %v4990 = vld [vmem:[%s4989] sm:$0xf]
        %v4991 = vld [vmem:[%s4989 + $0x4] sm:$0xf]
        %v4992 = vld [vmem:[%s4989 + $0x8] sm:$0xf]
        %v4993 = vld [vmem:[%s4989 + $0xc] sm:$0xf]
        %v4994 = vld [vmem:[%s4989 + $0x10] sm:$0xf]
        %v4995 = vld [vmem:[%s4989 + $0x14] sm:$0xf]
        %v4996 = vld [vmem:[%s4989 + $0x18] sm:$0xf]
        %v4997 = vld [vmem:[%s4989 + $0x1c] sm:$0xf]
        %v4998 = vld [vmem:[%s4989 + $0x20] sm:$0xf]
        %v4999 = vld [vmem:[%s4989 + $0x24] sm:$0xf]
        %v5000 = vld [vmem:[%s4989 + $0x28] sm:$0xf]
        %v5001 = vld [vmem:[%s4989 + $0x2c] sm:$0xf]
        %v5002 = vld [vmem:[%s4989 + $0x30] sm:$0xf]
        %v5003 = vld [vmem:[%s4989 + $0x34] sm:$0xf]
        %v5004 = vld [vmem:[%s4989 + $0x38] sm:$0xf]
        %v5005 = vld [vmem:[%s4989 + $0x3c] sm:$0xf]
        %v5022 = vunpack.c.l.b16 %v4990
        %v5023 = vunpack.c.l.b16 %v4991
        %v5024 = vunpack.c.l.b16 %v4992
        %v5025 = vunpack.c.l.b16 %v4993
        %v5026 = vunpack.c.l.b16 %v4994
        %v5027 = vunpack.c.l.b16 %v4995
        %v5028 = vunpack.c.l.b16 %v4996
        %v5029 = vunpack.c.l.b16 %v4997
        %v5030 = vunpack.c.l.b16 %v4998
        %v5031 = vunpack.c.l.b16 %v4999
        %v5032 = vunpack.c.l.b16 %v5000
        %v5033 = vunpack.c.l.b16 %v5001
        %v5034 = vunpack.c.l.b16 %v5002
        %v5035 = vunpack.c.l.b16 %v5003
        %v5036 = vunpack.c.l.b16 %v5004
        %v5037 = vunpack.c.l.b16 %v5005
        %v5038 = vpack.c.b16 %v5023, %v5022
        %v5039 = vpack.c.b16 %v5025, %v5024
        %v5040 = vpack.c.b16 %v5027, %v5026
        %v5041 = vpack.c.b16 %v5029, %v5028
        %v5042 = vpack.c.b16 %v5031, %v5030
        %v5043 = vpack.c.b16 %v5033, %v5032
        %v5044 = vpack.c.b16 %v5035, %v5034
        %v5045 = vpack.c.b16 %v5037, %v5036
        %5054 = vmatprep.subr.bf16.mxu0 0
        %5055 = vmatpush1.bf16.msra.mxu0 %v5038
        %5056 = vmatprep.subr.bf16.mxu0 0
        %5057 = vmatpush1.bf16.msra.mxu0 %v5039
        %5058 = vmatprep.subr.bf16.mxu0 0
        %5059 = vmatpush1.bf16.msra.mxu0 %v5040
        %5060 = vmatprep.subr.bf16.mxu0 0
        %5061 = vmatpush1.bf16.msra.mxu0 %v5041
        %5062 = vmatprep.subr.bf16.mxu0 0
        %5063 = vmatpush1.bf16.msra.mxu0 %v5042
        %5064 = vmatprep.subr.bf16.mxu0 0
        %5065 = vmatpush1.bf16.msra.mxu0 %v5043
        %5066 = vmatprep.subr.bf16.mxu0 0
        %5067 = vmatpush1.bf16.msra.mxu0 %v5044
        %5068 = vmatprep.subr.bf16.mxu0 0
        %5069 = vmatpush1.bf16.msra.mxu0 %v5045
        %5070 = vmatprep.subr.bf16.mxu0 0
        %5071 = vmatpush1.bf16.msra.mxu0 0
        %5072 = vmatprep.subr.bf16.mxu0 0
        %5073 = vmatpush1.bf16.msra.mxu0 0
        %5074 = vmatprep.subr.bf16.mxu0 0
        %5075 = vmatpush1.bf16.msra.mxu0 0
        %5076 = vmatprep.subr.bf16.mxu0 0
        %5077 = vmatpush1.bf16.msra.mxu0 0
        %5078 = vmatprep.subr.bf16.mxu0 0
        %5079 = vmatpush1.bf16.msra.mxu0 0
        %5080 = vmatprep.subr.bf16.mxu0 0
        %5081 = vmatpush1.bf16.msra.mxu0 0
        %5082 = vmatprep.subr.bf16.mxu0 0
        %5083 = vmatpush1.bf16.msra.mxu0 0
        %5084 = vmatprep.subr.bf16.mxu0 0
        %5085 = vmatpush1.bf16.msra.mxu0 0
        %5086 = vmatprep.mubr.bf16.mxu0 0
        %5087 = vmatmul.mubr.bf16.gmra.mrb[0].mxu0 %v4988
        %v5088 = vpop.f32.mrb[0].mxu0
        %v5089 = vadd.f32 0.0, %v5088
        %v5090 = vpop.f32.mrb[0].mxu0
        %v5091 = vpop.f32.mrb[0].mxu0
        %v5092 = vpop.f32.mrb[0].mxu0
        %5093 = vdwg.mxu0
        %v5094 = vadd.f32 %v4987, %v5089
        %v5095 = vld [vmem:[%s8] sm:$0x1]
        %v5097 = vlaneseq
        %v5098 = vshrl.u32 %v5097, 7
        %v5099 = vsub.s32 0, %v5098
        %v5100 = vrot.slane %v5095, %v5099
        %v5102 = vadd.f32 %v5094, %v5100
        %v5103 = vmax.f32 %v5102, 0.0
        %v5104 = vpack.c.bf16 %v5103, %v5103
        %v5105 = vld [vmem:[%s9] sm:$0xf]
        %v5106 = vld [vmem:[%s9 + $0x4] sm:$0xf]
        %v5107 = vld [vmem:[%s9 + $0x8] sm:$0xf]
        %v5108 = vld [vmem:[%s9 + $0xc] sm:$0xf]
        %v5109 = vld [vmem:[%s9 + $0x10] sm:$0xf]
        %v5110 = vld [vmem:[%s9 + $0x14] sm:$0xf]
        %v5111 = vld [vmem:[%s9 + $0x18] sm:$0xf]
        %v5112 = vld [vmem:[%s9 + $0x1c] sm:$0xf]
        %v5113 = vld [vmem:[%s9 + $0x20] sm:$0xf]
        %v5114 = vld [vmem:[%s9 + $0x24] sm:$0xf]
        %v5115 = vld [vmem:[%s9 + $0x28] sm:$0xf]
        %v5116 = vld [vmem:[%s9 + $0x2c] sm:$0xf]
        %v5117 = vld [vmem:[%s9 + $0x30] sm:$0xf]
        %v5118 = vld [vmem:[%s9 + $0x34] sm:$0xf]
        %v5119 = vld [vmem:[%s9 + $0x38] sm:$0xf]
        %v5120 = vld [vmem:[%s9 + $0x3c] sm:$0xf]
        %v5121 = vld [vmem:[%s10] sm:$0x1]
        %v5123 = vlaneseq
        %v5124 = vshrl.u32 %v5123, 7
        %v5125 = vsub.s32 0, %v5124
        %v5126 = vrot.slane %v5121, %v5125
        %v5144 = vunpack.c.l.b16 %v5105
        %v5145 = vunpack.c.l.b16 %v5106
        %v5146 = vunpack.c.l.b16 %v5107
        %v5147 = vunpack.c.l.b16 %v5108
        %v5148 = vunpack.c.l.b16 %v5109
        %v5149 = vunpack.c.l.b16 %v5110
        %v5150 = vunpack.c.l.b16 %v5111
        %v5151 = vunpack.c.l.b16 %v5112
        %v5152 = vunpack.c.l.b16 %v5113
        %v5153 = vunpack.c.l.b16 %v5114
        %v5154 = vunpack.c.l.b16 %v5115
        %v5155 = vunpack.c.l.b16 %v5116
        %v5156 = vunpack.c.l.b16 %v5117
        %v5157 = vunpack.c.l.b16 %v5118
        %v5158 = vunpack.c.l.b16 %v5119
        %v5159 = vunpack.c.l.b16 %v5120
        %v5160 = vpack.c.b16 %v5145, %v5144
        %v5161 = vpack.c.b16 %v5147, %v5146
        %v5162 = vpack.c.b16 %v5149, %v5148
        %v5163 = vpack.c.b16 %v5151, %v5150
        %v5164 = vpack.c.b16 %v5153, %v5152
        %v5165 = vpack.c.b16 %v5155, %v5154
        %v5166 = vpack.c.b16 %v5157, %v5156
        %v5167 = vpack.c.b16 %v5159, %v5158
        %5176 = vmatprep.subr.bf16.mxu0 0
        %5177 = vmatpush1.bf16.msra.mxu0 %v5160
        %5178 = vmatprep.subr.bf16.mxu0 0
        %5179 = vmatpush1.bf16.msra.mxu0 %v5161
        %5180 = vmatprep.subr.bf16.mxu0 0
        %5181 = vmatpush1.bf16.msra.mxu0 %v5162
        %5182 = vmatprep.subr.bf16.mxu0 0
        %5183 = vmatpush1.bf16.msra.mxu0 %v5163
        %5184 = vmatprep.subr.bf16.mxu0 0
        %5185 = vmatpush1.bf16.msra.mxu0 %v5164
        %5186 = vmatprep.subr.bf16.mxu0 0
        %5187 = vmatpush1.bf16.msra.mxu0 %v5165
        %5188 = vmatprep.subr.bf16.mxu0 0
        %5189 = vmatpush1.bf16.msra.mxu0 %v5166
        %5190 = vmatprep.subr.bf16.mxu0 0
        %5191 = vmatpush1.bf16.msra.mxu0 %v5167
        %5192 = vmatprep.subr.bf16.mxu0 0
        %5193 = vmatpush1.bf16.msra.mxu0 0
        %5194 = vmatprep.subr.bf16.mxu0 0
        %5195 = vmatpush1.bf16.msra.mxu0 0
        %5196 = vmatprep.subr.bf16.mxu0 0
        %5197 = vmatpush1.bf16.msra.mxu0 0
        %5198 = vmatprep.subr.bf16.mxu0 0
        %5199 = vmatpush1.bf16.msra.mxu0 0
        %5200 = vmatprep.subr.bf16.mxu0 0
        %5201 = vmatpush1.bf16.msra.mxu0 0
        %5202 = vmatprep.subr.bf16.mxu0 0
        %5203 = vmatpush1.bf16.msra.mxu0 0
        %5204 = vmatprep.subr.bf16.mxu0 0
        %5205 = vmatpush1.bf16.msra.mxu0 0
        %5206 = vmatprep.subr.bf16.mxu0 0
        %5207 = vmatpush1.bf16.msra.mxu0 0
        %5208 = vmatprep.mubr.bf16.mxu0 0
        %5209 = vmatmul.mubr.bf16.gmra.mrb[0].mxu0 %v5104
        %v5210 = vpop.f32.mrb[0].mxu0
        %v5211 = vadd.f32 %v5126, %v5210
        %v5212 = vpop.f32.mrb[0].mxu0
        %v5213 = vpop.f32.mrb[0].mxu0
        %v5214 = vpop.f32.mrb[0].mxu0
        %5215 = vdwg.mxu0
        %v5216 = vmax.f32 %v5211, 0.0
        %v5217 = vpack.c.bf16 %v5216, %v5216
        %v5218 = vld [vmem:[%s11] sm:$0xf]
        %v5219 = vld [vmem:[%s11 + $0x4] sm:$0xf]
        %v5220 = vld [vmem:[%s11 + $0x8] sm:$0xf]
        %v5221 = vld [vmem:[%s11 + $0xc] sm:$0xf]
        %v5222 = vld [vmem:[%s11 + $0x10] sm:$0xf]
        %v5223 = vld [vmem:[%s11 + $0x14] sm:$0xf]
        %v5224 = vld [vmem:[%s11 + $0x18] sm:$0xf]
        %v5225 = vld [vmem:[%s11 + $0x1c] sm:$0xf]
        %v5226 = vld [vmem:[%s11 + $0x20] sm:$0xf]
        %v5227 = vld [vmem:[%s11 + $0x24] sm:$0xf]
        %v5228 = vld [vmem:[%s11 + $0x28] sm:$0xf]
        %v5229 = vld [vmem:[%s11 + $0x2c] sm:$0xf]
        %v5230 = vld [vmem:[%s11 + $0x30] sm:$0xf]
        %v5231 = vld [vmem:[%s11 + $0x34] sm:$0xf]
        %v5232 = vld [vmem:[%s11 + $0x38] sm:$0xf]
        %v5233 = vld [vmem:[%s11 + $0x3c] sm:$0xf]
        %v5234 = vld [vmem:[%s12] sm:$0x1]
        %v5236 = vlaneseq
        %v5237 = vshrl.u32 %v5236, 7
        %v5238 = vsub.s32 0, %v5237
        %v5239 = vrot.slane %v5234, %v5238
        %v5257 = vunpack.c.l.b16 %v5218
        %v5258 = vunpack.c.l.b16 %v5219
        %v5259 = vunpack.c.l.b16 %v5220
        %v5260 = vunpack.c.l.b16 %v5221
        %v5261 = vunpack.c.l.b16 %v5222
        %v5262 = vunpack.c.l.b16 %v5223
        %v5263 = vunpack.c.l.b16 %v5224
        %v5264 = vunpack.c.l.b16 %v5225
        %v5265 = vunpack.c.l.b16 %v5226
        %v5266 = vunpack.c.l.b16 %v5227
        %v5267 = vunpack.c.l.b16 %v5228
        %v5268 = vunpack.c.l.b16 %v5229
        %v5269 = vunpack.c.l.b16 %v5230
        %v5270 = vunpack.c.l.b16 %v5231
        %v5271 = vunpack.c.l.b16 %v5232
        %v5272 = vunpack.c.l.b16 %v5233
        %v5273 = vpack.c.b16 %v5258, %v5257
        %v5274 = vpack.c.b16 %v5260, %v5259
        %v5275 = vpack.c.b16 %v5262, %v5261
        %v5276 = vpack.c.b16 %v5264, %v5263
        %v5277 = vpack.c.b16 %v5266, %v5265
        %v5278 = vpack.c.b16 %v5268, %v5267
        %v5279 = vpack.c.b16 %v5270, %v5269
        %v5280 = vpack.c.b16 %v5272, %v5271
        %5289 = vmatprep.subr.bf16.mxu0 0
        %5290 = vmatpush1.bf16.msra.mxu0 %v5273
        %5291 = vmatprep.subr.bf16.mxu0 0
        %5292 = vmatpush1.bf16.msra.mxu0 %v5274
        %5293 = vmatprep.subr.bf16.mxu0 0
        %5294 = vmatpush1.bf16.msra.mxu0 %v5275
        %5295 = vmatprep.subr.bf16.mxu0 0
        %5296 = vmatpush1.bf16.msra.mxu0 %v5276
        %5297 = vmatprep.subr.bf16.mxu0 0
        %5298 = vmatpush1.bf16.msra.mxu0 %v5277
        %5299 = vmatprep.subr.bf16.mxu0 0
        %5300 = vmatpush1.bf16.msra.mxu0 %v5278
        %5301 = vmatprep.subr.bf16.mxu0 0
        %5302 = vmatpush1.bf16.msra.mxu0 %v5279
        %5303 = vmatprep.subr.bf16.mxu0 0
        %5304 = vmatpush1.bf16.msra.mxu0 %v5280
        %5305 = vmatprep.subr.bf16.mxu0 0
        %5306 = vmatpush1.bf16.msra.mxu0 0
        %5307 = vmatprep.subr.bf16.mxu0 0
        %5308 = vmatpush1.bf16.msra.mxu0 0
        %5309 = vmatprep.subr.bf16.mxu0 0
        %5310 = vmatpush1.bf16.msra.mxu0 0
        %5311 = vmatprep.subr.bf16.mxu0 0
        %5312 = vmatpush1.bf16.msra.mxu0 0
        %5313 = vmatprep.subr.bf16.mxu0 0
        %5314 = vmatpush1.bf16.msra.mxu0 0
        %5315 = vmatprep.subr.bf16.mxu0 0
        %5316 = vmatpush1.bf16.msra.mxu0 0
        %5317 = vmatprep.subr.bf16.mxu0 0
        %5318 = vmatpush1.bf16.msra.mxu0 0
        %5319 = vmatprep.subr.bf16.mxu0 0
        %5320 = vmatpush1.bf16.msra.mxu0 0
        %5321 = vmatprep.mubr.bf16.mxu0 0
        %5322 = vmatmul.mubr.bf16.gmra.mrb[0].mxu0 %v5217
        %v5323 = vpop.f32.mrb[0].mxu0
        %v5324 = vadd.f32 %v5239, %v5323
        %v5325 = vpop.f32.mrb[0].mxu0
        %v5326 = vpop.f32.mrb[0].mxu0
        %v5327 = vpop.f32.mrb[0].mxu0
        %5328 = vdwg.mxu0
        %5329 = vst [vmem:[%s434] sm:$0xff] %v5324
        %s5330 = sand.u32 %s313, 1
        %s5331 = scalar_lea.sflag [#allocation5], %s5330
        %s5332 = sand.u32 %s313, 1
        %s5333 = smul.addr %s5332, 8
        %s5334 = scalar_lea.vmem [#allocation4], %s5333
        // Predicated region
        $region73: #{cnn_forward.1} parent=71 // pred_check
          %p5335 = pneg %p323
        $region74: #{cnn_forward.1} parent=71 // pred_check_branch
          %5337 = sbr.rel (%p5335) target = $region76
        $region75: #{cnn_forward.1} parent=71 // pred_region
          %s5339 = ssub.s32 128, 128
          %5340 = vsyncadd %s5331, %s5339
          %s5341 = smul.addr %s27, 128
          %s5342 = scalar_lea.hbm %s13, %s5341
          %s5344 = sshll.u32 %s5334, 4
          %s5345 = int_to_ptr.vmem [resolvable:$true] %s5344
          %5347 = dma.vmem_to_hbm [thread:$0]  %s5345, 128, %s5342, %s5331
        $region76: #{cnn_forward.1} parent=71 // pred_fallthru
          _
      $region72: #{cnn_forward.1} parent=5 // pred_fallthru
        _
      %p5348 = scmp.le.s32.totalorder 2, %s22
      // Predicated region
      $region77: #{cnn_forward.1} parent=5 // pred_check
        %p5349 = pneg %p5348
      $region78: #{cnn_forward.1} parent=5 // pred_check_branch
        %5351 = sbr.rel (%p5349) target = $region80
      $region79: #{cnn_forward.1} parent=5 // pred_region
        %s5352 = ssub.s32 %s22, 2
        // Predicated region
        $region81: #{cnn_forward.1} parent=79 // pred_check
          %p5353 = pneg %p329
        $region82: #{cnn_forward.1} parent=79 // pred_check_branch
          %5355 = sbr.rel (%p5353) target = $region84
        $region83: #{cnn_forward.1} parent=79 // pred_region
          %s5356 = sand.u32 %s314, 1
          %s5357 = scalar_lea.sflag [#allocation5], %s5356
          %s5358 = sand.u32 %s314, 1
          %s5359 = smul.addr %s5358, 8
          %s5360 = scalar_lea.vmem [#allocation4], %s5359
          %5361 = dma.done %s5357, 128
        $region84: #{cnn_forward.1} parent=79 // pred_fallthru
          _
      $region80: #{cnn_forward.1} parent=5 // pred_fallthru
        _
    $region6: #{cnn_forward.1} parent=1 // loop_footer
      %s26 = sadd.s32 1, %s22
    $region7: #{cnn_forward.1} parent=1 // loop_footer_branch
      %21 = sbr.rel target = $region3
    $region8: #{cnn_forward.1} parent=1 // loop_exit
      _
    %5362 = vsyncpa [#allocation5], 1
    %s5363 = scalar_lea.sflag [#allocation5], 1
    %5364 = vsyncpa %s5363, 1

</llo_original>
